<compile_context>
chip_gen: v6e
topology: v6e:2x2x1
jax: 0.10.0
libtpu: 0.0.40
codegen_flags: <defaults>
</compile_context>

<pallas_src>
import functools

import jax
import jax.numpy as jnp
from jax.experimental import pallas as pl
from jax.experimental.pallas import tpu as pltpu

LN_EPS = 1e-5


def _transformer_bs_kernel(
    x_ref, gamma_ref, beta_ref, wqkv_ref, wo_ref, wff_ref, bff_ref,
    out_ref, *, heads, dim_head, tau,
):
    """One grid step == one (Attention, Linear) layer applied to the ORIGINAL x_in.

    Since TransformerBS never feeds x back into x_in, every layer reads the same
    resident input block; only the last layer's result survives in out_ref.
    """
    x_in = x_ref[...]                      # (B, N, D) f32
    gamma = gamma_ref[0]                   # (1, D)
    beta = beta_ref[0]                     # (1, D)
    wqkv = wqkv_ref[0]                     # (D, 3*inner)
    wo = wo_ref[0]                         # (inner, D)
    wff = wff_ref[0]                       # (D, D)
    bff = bff_ref[0]                       # (1, D)

    B, N, D = x_in.shape
    inner = heads * dim_head
    scale = dim_head ** -0.5

    def attention(x):                      # (B, N, D) -> (B, N, D)
        # LayerNorm (biased variance, eps=1e-5) + affine.
        mu = jnp.mean(x, axis=-1, keepdims=True)
        var = jnp.mean((x - mu) ** 2, axis=-1, keepdims=True)
        xn = (x - mu) * jax.lax.rsqrt(var + LN_EPS) * gamma + beta

        # Fused QKV projection on the folded (B*N, D) slab -> one MXU call.
        xf = xn.reshape(B * N, D)
        qkv = jnp.dot(xf, wqkv, preferred_element_type=jnp.float32)  # (B*N, 3I)
        q = (qkv[:, :inner] * scale).reshape(B, N, inner)            # pre-scaled
        k = qkv[:, inner:2 * inner].reshape(B, N, inner)
        v = qkv[:, 2 * inner:].reshape(B, N, inner)

        # Per-head attention, batched over B with single-batch-dim einsums.
        head_outs = []
        for h in range(heads):
            lo = h * dim_head
            hi = lo + dim_head
            qh = q[:, :, lo:hi]                                       # (B, N, dh)
            kh = k[:, :, lo:hi]
            vh = v[:, :, lo:hi]
            dots = jnp.einsum("bnd,bmd->bnm", qh, kh,
                              preferred_element_type=jnp.float32)     # (B, N, N)
            m = jnp.max(dots, axis=-1, keepdims=True)
            e = jnp.exp(dots - m)
            # Exact normalization (numerical safety at f32 tolerances).
            # TODO(synk): pl.reciprocal(..., approx=True) uses the EUP approx
            # path and is slightly faster at large N; exact here for accuracy.
            p = e / jnp.sum(e, axis=-1, keepdims=True)
            # dropout(p=0.0) and the d=1 multiplier are identities.
            head_outs.append(jnp.einsum("bnm,bmd->bnd", p, vh,
                                        preferred_element_type=jnp.float32))

        # Concatenate heads along lanes, single output-projection matmul.
        o = jnp.concatenate(head_outs, axis=-1)                       # (B, N, I)
        of = o.reshape(B * N, inner)
        return jnp.dot(of, wo,
                       preferred_element_type=jnp.float32).reshape(B, N, D)

    b_out = attention(x_in)                # B = attn(x_in)
    s_out = attention(b_out + x_in)        # S = attn(B + x_in)
    x = tau * (b_out - s_out) + x_in

    # Feed-forward linear (weight-normed Linear == effective weight + bias).
    ff = jnp.dot(x.reshape(B * N, D), wff,
                 preferred_element_type=jnp.float32) + bff
    x = tau * ff.reshape(B, N, D) + x

    out_ref[...] = x.astype(out_ref.dtype)


def transformer_bs(x, layer_params, *, heads, dim_head, tau):
    """Full TransformerBS forward in one fused pallas_call over the depth axis."""
    B, N, D = x.shape
    inner = heads * dim_head
    L = len(layer_params)

    # Stack per-layer weights along a leading L axis; fuse Wq/Wk/Wv.
    gammas = jnp.stack([p[0] for p in layer_params]).reshape(L, 1, D)
    betas = jnp.stack([p[1] for p in layer_params]).reshape(L, 1, D)
    wqkvs = jnp.stack([jnp.concatenate([p[2], p[3], p[4]], axis=-1)
                       for p in layer_params])                  # (L, D, 3*inner)
    wos = jnp.stack([p[5] for p in layer_params])               # (L, inner, D)
    wffs = jnp.stack([p[6] for p in layer_params])              # (L, D, D)
    bffs = jnp.stack([p[7] for p in layer_params]).reshape(L, 1, D)

    kernel = functools.partial(_transformer_bs_kernel,
                               heads=heads, dim_head=dim_head, tau=tau)

    # x_in / out stay at the same block for every layer -> VMEM resident
    # (Pallas skips the DMA when the block index does not change).
    resident = pl.BlockSpec((B, N, D), lambda l: (0, 0, 0))
    # Per-layer weights streamed by the layer grid coordinate.
    per_layer = lambda a, b: pl.BlockSpec((1, a, b), lambda l: (l, 0, 0))

    return pl.pallas_call(
        kernel,
        grid=(L,),
        in_specs=[
            resident,                 # x_in
            per_layer(1, D),          # LN gamma
            per_layer(1, D),          # LN beta
            per_layer(D, 3 * inner),  # fused Wqkv
            per_layer(inner, D),      # Wo
            per_layer(D, D),          # FF weight
            per_layer(1, D),          # FF bias
        ],
        out_specs=resident,
        out_shape=jax.ShapeDtypeStruct((B, N, D), x.dtype),
        compiler_params=pltpu.CompilerParams(
            dimension_semantics=("arbitrary",),
        ),
    )(x, gammas, betas, wqkvs, wos, wffs, bffs)


# ---------------- pure-JAX reference (mirrors the PyTorch forward) -------------
def _attention_ref(x, gamma, beta, wq, wk, wv, wo, *, heads, dim_head):
    mu = jnp.mean(x, axis=-1, keepdims=True)
    var = jnp.mean((x - mu) ** 2, axis=-1, keepdims=True)
    xn = (x - mu) / jnp.sqrt(var + LN_EPS) * gamma + beta
    B, N, D = x.shape
    q = (xn @ wq).reshape(B, N, heads, dim_head).transpose(0, 2, 1, 3)
    k = (xn @ wk).reshape(B, N, heads, dim_head).transpose(0, 2, 1, 3)
    v = (xn @ wv).reshape(B, N, heads, dim_head).transpose(0, 2, 1, 3)
    dots = jnp.einsum("bhnd,bhmd->bhnm", q, k) * dim_head ** -0.5
    attn = jax.nn.softmax(dots, axis=-1)
    out = jnp.einsum("bhnm,bhmd->bhnd", attn, v)
    out = out.transpose(0, 2, 1, 3).reshape(B, N, heads * dim_head)
    return out @ wo


def transformer_bs_ref(x_in, layer_params, *, heads, dim_head, tau):
    x = x_in
    for gamma, beta, wq, wk, wv, wo, wff, bff in layer_params:
        b = _attention_ref(x_in, gamma, beta, wq, wk, wv, wo,
                           heads=heads, dim_head=dim_head)
        s = _attention_ref(b + x_in, gamma, beta, wq, wk, wv, wo,
                           heads=heads, dim_head=dim_head)
        x = tau * (b - s) + x_in
        x = tau * (x @ wff + bff) + x
    return x


def make_params(key, depth, dim, heads, dim_head):
    inner = heads * dim_head
    layer_params = []
    for _ in range(depth):
        key, *ks = jax.random.split(key, 9)
        gamma = 1.0 + 0.1 * jax.random.normal(ks[0], (dim,), jnp.float32)
        beta = 0.1 * jax.random.normal(ks[1], (dim,), jnp.float32)
        wq = 0.05 * jax.random.normal(ks[2], (dim, inner), jnp.float32)
        wk = 0.05 * jax.random.normal(ks[3], (dim, inner), jnp.float32)
        wv = 0.05 * jax.random.normal(ks[4], (dim, inner), jnp.float32)
        wo = 0.05 * jax.random.normal(ks[5], (inner, dim), jnp.float32)
        wff = 0.05 * jax.random.normal(ks[6], (dim, dim), jnp.float32)
        bff = 0.05 * jax.random.normal(ks[7], (dim,), jnp.float32)
        layer_params.append((gamma, beta, wq, wk, wv, wo, wff, bff))
    return layer_params


if __name__ == "__main__":
    # Small shapes consistent with the module: dim=32, depth=2, heads=4, dim_head=8.
    B, N, DIM = 2, 8, 32
    DEPTH, HEADS, DIM_HEAD, TAU = 2, 4, 8, 0.5   # tau default of TransformerBS

    key = jax.random.PRNGKey(0)
    kx, kp = jax.random.split(key)
    x = jax.random.normal(kx, (B, N, DIM), jnp.float32)
    params = make_params(kp, DEPTH, DIM, HEADS, DIM_HEAD)

    out = transformer_bs(x, params, heads=HEADS, dim_head=DIM_HEAD, tau=TAU)
    out = jax.block_until_ready(out)

    ref = transformer_bs_ref(x, params, heads=HEADS, dim_head=DIM_HEAD, tau=TAU)
    assert out.shape == (B, N, DIM)
    assert jnp.allclose(out, ref, rtol=1e-3, atol=1e-3), "mismatch vs reference"

    print("KERNEL_OK")
</pallas_src>

<mosaic_0001>
module attributes {stable_mosaic.version = 11 : i64} {
  func.func @_transformer_bs_kernel(%arg0: i32, %arg1: memref<2x8x32xf32, #tpu.memory_space<vmem>>, %arg2: memref<1x1x32xf32, #tpu.memory_space<vmem>>, %arg3: memref<1x1x32xf32, #tpu.memory_space<vmem>>, %arg4: memref<1x32x96xf32, #tpu.memory_space<vmem>>, %arg5: memref<1x32x32xf32, #tpu.memory_space<vmem>>, %arg6: memref<1x32x32xf32, #tpu.memory_space<vmem>>, %arg7: memref<1x1x32xf32, #tpu.memory_space<vmem>>, %arg8: memref<2x8x32xf32, #tpu.memory_space<vmem>>) attributes {dimension_semantics = [#tpu.dimension_semantics<arbitrary>], iteration_bounds = array<i64: 2>, scalar_prefetch = 0 : i64, scratch_operands = 0 : i64, tpu.core_type = #tpu.core_type<tc>, window_params = [{pipeline_mode = #tpu.pipeline_mode<synchronous>, transform_indices = @transform_0, window_bounds = array<i64: 2, 8, 32>}, {transform_indices = @transform_1, window_bounds = array<i64: 1, 1, 32>}, {transform_indices = @transform_2, window_bounds = array<i64: 1, 1, 32>}, {transform_indices = @transform_3, window_bounds = array<i64: 1, 32, 96>}, {transform_indices = @transform_4, window_bounds = array<i64: 1, 32, 32>}, {transform_indices = @transform_5, window_bounds = array<i64: 1, 32, 32>}, {transform_indices = @transform_6, window_bounds = array<i64: 1, 1, 32>}, {pipeline_mode = #tpu.pipeline_mode<synchronous>, transform_indices = @transform_7, window_bounds = array<i64: 2, 8, 32>}]} {
    %c0 = arith.constant 0 : index
    %c0_0 = arith.constant 0 : index
    %c0_1 = arith.constant 0 : index
    %0 = vector.load %arg1[%c0, %c0_0, %c0_1] : memref<2x8x32xf32, #tpu.memory_space<vmem>>, vector<2x8x32xf32>
    %c0_2 = arith.constant 0 : index
    %c0_3 = arith.constant 0 : index
    %c0_4 = arith.constant 0 : index
    %1 = vector.load %arg2[%c0_2, %c0_3, %c0_4] : memref<1x1x32xf32, #tpu.memory_space<vmem>>, vector<1x1x32xf32>
    %2 = vector.shape_cast %1 : vector<1x1x32xf32> to vector<1x32xf32>
    %c0_5 = arith.constant 0 : index
    %c0_6 = arith.constant 0 : index
    %c0_7 = arith.constant 0 : index
    %3 = vector.load %arg3[%c0_5, %c0_6, %c0_7] : memref<1x1x32xf32, #tpu.memory_space<vmem>>, vector<1x1x32xf32>
    %4 = vector.shape_cast %3 : vector<1x1x32xf32> to vector<1x32xf32>
    %c0_8 = arith.constant 0 : index
    %c0_9 = arith.constant 0 : index
    %c0_10 = arith.constant 0 : index
    %5 = vector.load %arg4[%c0_8, %c0_9, %c0_10] : memref<1x32x96xf32, #tpu.memory_space<vmem>>, vector<1x32x96xf32>
    %6 = vector.shape_cast %5 : vector<1x32x96xf32> to vector<32x96xf32>
    %c0_11 = arith.constant 0 : index
    %c0_12 = arith.constant 0 : index
    %c0_13 = arith.constant 0 : index
    %7 = vector.load %arg5[%c0_11, %c0_12, %c0_13] : memref<1x32x32xf32, #tpu.memory_space<vmem>>, vector<1x32x32xf32>
    %8 = vector.shape_cast %7 : vector<1x32x32xf32> to vector<32x32xf32>
    %c0_14 = arith.constant 0 : index
    %c0_15 = arith.constant 0 : index
    %c0_16 = arith.constant 0 : index
    %9 = vector.load %arg6[%c0_14, %c0_15, %c0_16] : memref<1x32x32xf32, #tpu.memory_space<vmem>>, vector<1x32x32xf32>
    %10 = vector.shape_cast %9 : vector<1x32x32xf32> to vector<32x32xf32>
    %c0_17 = arith.constant 0 : index
    %c0_18 = arith.constant 0 : index
    %c0_19 = arith.constant 0 : index
    %11 = vector.load %arg7[%c0_17, %c0_18, %c0_19] : memref<1x1x32xf32, #tpu.memory_space<vmem>>, vector<1x1x32xf32>
    %12 = vector.shape_cast %11 : vector<1x1x32xf32> to vector<1x32xf32>
    %cst = arith.constant dense<0.000000e+00> : vector<2x8xf32>
    %13 = vector.multi_reduction <add>, %0, %cst [2] : vector<2x8x32xf32> to vector<2x8xf32>
    %14 = vector.shape_cast %13 : vector<2x8xf32> to vector<2x8x1xf32>
    %cst_20 = arith.constant 3.200000e+01 : f32
    %15 = vector.broadcast %cst_20 : f32 to vector<2x8x1xf32>
    %16 = arith.divf %14, %15 : vector<2x8x1xf32>
    %17 = vector.broadcast %16 : vector<2x8x1xf32> to vector<2x8x32xf32>
    %18 = arith.subf %0, %17 : vector<2x8x32xf32>
    %19 = arith.mulf %18, %18 : vector<2x8x32xf32>
    %cst_21 = arith.constant dense<0.000000e+00> : vector<2x8xf32>
    %20 = vector.multi_reduction <add>, %19, %cst_21 [2] : vector<2x8x32xf32> to vector<2x8xf32>
    %21 = vector.shape_cast %20 : vector<2x8xf32> to vector<2x8x1xf32>
    %cst_22 = arith.constant 3.200000e+01 : f32
    %22 = vector.broadcast %cst_22 : f32 to vector<2x8x1xf32>
    %23 = arith.divf %21, %22 : vector<2x8x1xf32>
    %24 = vector.broadcast %16 : vector<2x8x1xf32> to vector<2x8x32xf32>
    %25 = arith.subf %0, %24 : vector<2x8x32xf32>
    %cst_23 = arith.constant 9.99999974E-6 : f32
    %26 = vector.broadcast %cst_23 : f32 to vector<2x8x1xf32>
    %27 = arith.addf %23, %26 : vector<2x8x1xf32>
    %28 = math.rsqrt %27 : vector<2x8x1xf32>
    %29 = vector.broadcast %28 : vector<2x8x1xf32> to vector<2x8x32xf32>
    %30 = arith.mulf %25, %29 : vector<2x8x32xf32>
    %31 = vector.shape_cast %2 : vector<1x32xf32> to vector<1x1x32xf32>
    %32 = vector.broadcast %31 : vector<1x1x32xf32> to vector<2x8x32xf32>
    %33 = arith.mulf %30, %32 : vector<2x8x32xf32>
    %34 = vector.shape_cast %4 : vector<1x32xf32> to vector<1x1x32xf32>
    %35 = vector.broadcast %34 : vector<1x1x32xf32> to vector<2x8x32xf32>
    %36 = arith.addf %33, %35 : vector<2x8x32xf32>
    %37 = vector.shape_cast %36 : vector<2x8x32xf32> to vector<16x32xf32>
    %cst_24 = arith.constant dense<0.000000e+00> : vector<16x96xf32>
    %38 = tpu.matmul %37, %6, %cst_24 {dimension_numbers = #tpu.dot_dimension_numbers<[1], [0], [0], [1], [0, 0, 1, 1], [], []>} : vector<16x32xf32>, vector<32x96xf32>, vector<16x96xf32> -> vector<16x96xf32>
    %39 = vector.extract_strided_slice %38 {offsets = [0, 0], sizes = [16, 32], strides = [1, 1]} : vector<16x96xf32> to vector<16x32xf32>
    %cst_25 = arith.constant 0.353553385 : f32
    %40 = vector.broadcast %cst_25 : f32 to vector<16x32xf32>
    %41 = arith.mulf %39, %40 : vector<16x32xf32>
    %42 = vector.shape_cast %41 : vector<16x32xf32> to vector<2x8x32xf32>
    %43 = vector.extract_strided_slice %38 {offsets = [0, 32], sizes = [16, 32], strides = [1, 1]} : vector<16x96xf32> to vector<16x32xf32>
    %44 = vector.shape_cast %43 : vector<16x32xf32> to vector<2x8x32xf32>
    %45 = vector.extract_strided_slice %38 {offsets = [0, 64], sizes = [16, 32], strides = [1, 1]} : vector<16x96xf32> to vector<16x32xf32>
    %46 = vector.shape_cast %45 : vector<16x32xf32> to vector<2x8x32xf32>
    %47 = vector.extract_strided_slice %42 {offsets = [0, 0, 0], sizes = [2, 8, 8], strides = [1, 1, 1]} : vector<2x8x32xf32> to vector<2x8x8xf32>
    %48 = vector.extract_strided_slice %44 {offsets = [0, 0, 0], sizes = [2, 8, 8], strides = [1, 1, 1]} : vector<2x8x32xf32> to vector<2x8x8xf32>
    %49 = vector.extract_strided_slice %46 {offsets = [0, 0, 0], sizes = [2, 8, 8], strides = [1, 1, 1]} : vector<2x8x32xf32> to vector<2x8x8xf32>
    "tpu.trace_start"() <{level = 10 : i32, message = "bnd,bmd->bnm"}> : () -> ()
    %cst_26 = arith.constant dense<0.000000e+00> : vector<2x8x8xf32>
    %50 = tpu.matmul %47, %48, %cst_26 {dimension_numbers = #tpu.dot_dimension_numbers<[2], [2], [1], [1], [0, 0, 0, 1, 1, 1], [0], [0]>} : vector<2x8x8xf32>, vector<2x8x8xf32>, vector<2x8x8xf32> -> vector<2x8x8xf32>
    "tpu.trace_stop"() : () -> ()
    %cst_27 = arith.constant dense<0xFF800000> : vector<2x8xf32>
    %51 = vector.multi_reduction <maximumf>, %50, %cst_27 [2] : vector<2x8x8xf32> to vector<2x8xf32>
    %52 = vector.shape_cast %51 : vector<2x8xf32> to vector<2x8x1xf32>
    %53 = vector.broadcast %52 : vector<2x8x1xf32> to vector<2x8x8xf32>
    %54 = arith.subf %50, %53 : vector<2x8x8xf32>
    %55 = math.exp %54 : vector<2x8x8xf32>
    %cst_28 = arith.constant dense<0.000000e+00> : vector<2x8xf32>
    %56 = vector.multi_reduction <add>, %55, %cst_28 [2] : vector<2x8x8xf32> to vector<2x8xf32>
    %57 = vector.shape_cast %56 : vector<2x8xf32> to vector<2x8x1xf32>
    %58 = vector.broadcast %57 : vector<2x8x1xf32> to vector<2x8x8xf32>
    %59 = arith.divf %55, %58 : vector<2x8x8xf32>
    "tpu.trace_start"() <{level = 10 : i32, message = "bnm,bmd->bnd"}> : () -> ()
    %cst_29 = arith.constant dense<0.000000e+00> : vector<2x8x8xf32>
    %60 = tpu.matmul %59, %49, %cst_29 {dimension_numbers = #tpu.dot_dimension_numbers<[2], [1], [1], [2], [0, 0, 0, 1, 1, 2], [0], [0]>} : vector<2x8x8xf32>, vector<2x8x8xf32>, vector<2x8x8xf32> -> vector<2x8x8xf32>
    "tpu.trace_stop"() : () -> ()
    %61 = vector.extract_strided_slice %42 {offsets = [0, 0, 8], sizes = [2, 8, 8], strides = [1, 1, 1]} : vector<2x8x32xf32> to vector<2x8x8xf32>
    %62 = vector.extract_strided_slice %44 {offsets = [0, 0, 8], sizes = [2, 8, 8], strides = [1, 1, 1]} : vector<2x8x32xf32> to vector<2x8x8xf32>
    %63 = vector.extract_strided_slice %46 {offsets = [0, 0, 8], sizes = [2, 8, 8], strides = [1, 1, 1]} : vector<2x8x32xf32> to vector<2x8x8xf32>
    "tpu.trace_start"() <{level = 10 : i32, message = "bnd,bmd->bnm"}> : () -> ()
    %cst_30 = arith.constant dense<0.000000e+00> : vector<2x8x8xf32>
    %64 = tpu.matmul %61, %62, %cst_30 {dimension_numbers = #tpu.dot_dimension_numbers<[2], [2], [1], [1], [0, 0, 0, 1, 1, 1], [0], [0]>} : vector<2x8x8xf32>, vector<2x8x8xf32>, vector<2x8x8xf32> -> vector<2x8x8xf32>
    "tpu.trace_stop"() : () -> ()
    %cst_31 = arith.constant dense<0xFF800000> : vector<2x8xf32>
    %65 = vector.multi_reduction <maximumf>, %64, %cst_31 [2] : vector<2x8x8xf32> to vector<2x8xf32>
    %66 = vector.shape_cast %65 : vector<2x8xf32> to vector<2x8x1xf32>
    %67 = vector.broadcast %66 : vector<2x8x1xf32> to vector<2x8x8xf32>
    %68 = arith.subf %64, %67 : vector<2x8x8xf32>
    %69 = math.exp %68 : vector<2x8x8xf32>
    %cst_32 = arith.constant dense<0.000000e+00> : vector<2x8xf32>
    %70 = vector.multi_reduction <add>, %69, %cst_32 [2] : vector<2x8x8xf32> to vector<2x8xf32>
    %71 = vector.shape_cast %70 : vector<2x8xf32> to vector<2x8x1xf32>
    %72 = vector.broadcast %71 : vector<2x8x1xf32> to vector<2x8x8xf32>
    %73 = arith.divf %69, %72 : vector<2x8x8xf32>
    "tpu.trace_start"() <{level = 10 : i32, message = "bnm,bmd->bnd"}> : () -> ()
    %cst_33 = arith.constant dense<0.000000e+00> : vector<2x8x8xf32>
    %74 = tpu.matmul %73, %63, %cst_33 {dimension_numbers = #tpu.dot_dimension_numbers<[2], [1], [1], [2], [0, 0, 0, 1, 1, 2], [0], [0]>} : vector<2x8x8xf32>, vector<2x8x8xf32>, vector<2x8x8xf32> -> vector<2x8x8xf32>
    "tpu.trace_stop"() : () -> ()
    %75 = vector.extract_strided_slice %42 {offsets = [0, 0, 16], sizes = [2, 8, 8], strides = [1, 1, 1]} : vector<2x8x32xf32> to vector<2x8x8xf32>
    %76 = vector.extract_strided_slice %44 {offsets = [0, 0, 16], sizes = [2, 8, 8], strides = [1, 1, 1]} : vector<2x8x32xf32> to vector<2x8x8xf32>
    %77 = vector.extract_strided_slice %46 {offsets = [0, 0, 16], sizes = [2, 8, 8], strides = [1, 1, 1]} : vector<2x8x32xf32> to vector<2x8x8xf32>
    "tpu.trace_start"() <{level = 10 : i32, message = "bnd,bmd->bnm"}> : () -> ()
    %cst_34 = arith.constant dense<0.000000e+00> : vector<2x8x8xf32>
    %78 = tpu.matmul %75, %76, %cst_34 {dimension_numbers = #tpu.dot_dimension_numbers<[2], [2], [1], [1], [0, 0, 0, 1, 1, 1], [0], [0]>} : vector<2x8x8xf32>, vector<2x8x8xf32>, vector<2x8x8xf32> -> vector<2x8x8xf32>
    "tpu.trace_stop"() : () -> ()
    %cst_35 = arith.constant dense<0xFF800000> : vector<2x8xf32>
    %79 = vector.multi_reduction <maximumf>, %78, %cst_35 [2] : vector<2x8x8xf32> to vector<2x8xf32>
    %80 = vector.shape_cast %79 : vector<2x8xf32> to vector<2x8x1xf32>
    %81 = vector.broadcast %80 : vector<2x8x1xf32> to vector<2x8x8xf32>
    %82 = arith.subf %78, %81 : vector<2x8x8xf32>
    %83 = math.exp %82 : vector<2x8x8xf32>
    %cst_36 = arith.constant dense<0.000000e+00> : vector<2x8xf32>
    %84 = vector.multi_reduction <add>, %83, %cst_36 [2] : vector<2x8x8xf32> to vector<2x8xf32>
    %85 = vector.shape_cast %84 : vector<2x8xf32> to vector<2x8x1xf32>
    %86 = vector.broadcast %85 : vector<2x8x1xf32> to vector<2x8x8xf32>
    %87 = arith.divf %83, %86 : vector<2x8x8xf32>
    "tpu.trace_start"() <{level = 10 : i32, message = "bnm,bmd->bnd"}> : () -> ()
    %cst_37 = arith.constant dense<0.000000e+00> : vector<2x8x8xf32>
    %88 = tpu.matmul %87, %77, %cst_37 {dimension_numbers = #tpu.dot_dimension_numbers<[2], [1], [1], [2], [0, 0, 0, 1, 1, 2], [0], [0]>} : vector<2x8x8xf32>, vector<2x8x8xf32>, vector<2x8x8xf32> -> vector<2x8x8xf32>
    "tpu.trace_stop"() : () -> ()
    %89 = vector.extract_strided_slice %42 {offsets = [0, 0, 24], sizes = [2, 8, 8], strides = [1, 1, 1]} : vector<2x8x32xf32> to vector<2x8x8xf32>
    %90 = vector.extract_strided_slice %44 {offsets = [0, 0, 24], sizes = [2, 8, 8], strides = [1, 1, 1]} : vector<2x8x32xf32> to vector<2x8x8xf32>
    %91 = vector.extract_strided_slice %46 {offsets = [0, 0, 24], sizes = [2, 8, 8], strides = [1, 1, 1]} : vector<2x8x32xf32> to vector<2x8x8xf32>
    "tpu.trace_start"() <{level = 10 : i32, message = "bnd,bmd->bnm"}> : () -> ()
    %cst_38 = arith.constant dense<0.000000e+00> : vector<2x8x8xf32>
    %92 = tpu.matmul %89, %90, %cst_38 {dimension_numbers = #tpu.dot_dimension_numbers<[2], [2], [1], [1], [0, 0, 0, 1, 1, 1], [0], [0]>} : vector<2x8x8xf32>, vector<2x8x8xf32>, vector<2x8x8xf32> -> vector<2x8x8xf32>
    "tpu.trace_stop"() : () -> ()
    %cst_39 = arith.constant dense<0xFF800000> : vector<2x8xf32>
    %93 = vector.multi_reduction <maximumf>, %92, %cst_39 [2] : vector<2x8x8xf32> to vector<2x8xf32>
    %94 = vector.shape_cast %93 : vector<2x8xf32> to vector<2x8x1xf32>
    %95 = vector.broadcast %94 : vector<2x8x1xf32> to vector<2x8x8xf32>
    %96 = arith.subf %92, %95 : vector<2x8x8xf32>
    %97 = math.exp %96 : vector<2x8x8xf32>
    %cst_40 = arith.constant dense<0.000000e+00> : vector<2x8xf32>
    %98 = vector.multi_reduction <add>, %97, %cst_40 [2] : vector<2x8x8xf32> to vector<2x8xf32>
    %99 = vector.shape_cast %98 : vector<2x8xf32> to vector<2x8x1xf32>
    %100 = vector.broadcast %99 : vector<2x8x1xf32> to vector<2x8x8xf32>
    %101 = arith.divf %97, %100 : vector<2x8x8xf32>
    "tpu.trace_start"() <{level = 10 : i32, message = "bnm,bmd->bnd"}> : () -> ()
    %cst_41 = arith.constant dense<0.000000e+00> : vector<2x8x8xf32>
    %102 = tpu.matmul %101, %91, %cst_41 {dimension_numbers = #tpu.dot_dimension_numbers<[2], [1], [1], [2], [0, 0, 0, 1, 1, 2], [0], [0]>} : vector<2x8x8xf32>, vector<2x8x8xf32>, vector<2x8x8xf32> -> vector<2x8x8xf32>
    "tpu.trace_stop"() : () -> ()
    %103 = tpu.concatenate %60, %74, %88, %102 in 2 : vector<2x8x8xf32>, vector<2x8x8xf32>, vector<2x8x8xf32>, vector<2x8x8xf32> -> vector<2x8x32xf32>
    %104 = vector.shape_cast %103 : vector<2x8x32xf32> to vector<16x32xf32>
    %cst_42 = arith.constant dense<0.000000e+00> : vector<16x32xf32>
    %105 = tpu.matmul %104, %8, %cst_42 {dimension_numbers = #tpu.dot_dimension_numbers<[1], [0], [0], [1], [0, 0, 1, 1], [], []>} : vector<16x32xf32>, vector<32x32xf32>, vector<16x32xf32> -> vector<16x32xf32>
    %106 = vector.shape_cast %105 : vector<16x32xf32> to vector<2x8x32xf32>
    %107 = arith.addf %106, %0 : vector<2x8x32xf32>
    %cst_43 = arith.constant dense<0.000000e+00> : vector<2x8xf32>
    %108 = vector.multi_reduction <add>, %107, %cst_43 [2] : vector<2x8x32xf32> to vector<2x8xf32>
    %109 = vector.shape_cast %108 : vector<2x8xf32> to vector<2x8x1xf32>
    %cst_44 = arith.constant 3.200000e+01 : f32
    %110 = vector.broadcast %cst_44 : f32 to vector<2x8x1xf32>
    %111 = arith.divf %109, %110 : vector<2x8x1xf32>
    %112 = vector.broadcast %111 : vector<2x8x1xf32> to vector<2x8x32xf32>
    %113 = arith.subf %107, %112 : vector<2x8x32xf32>
    %114 = arith.mulf %113, %113 : vector<2x8x32xf32>
    %cst_45 = arith.constant dense<0.000000e+00> : vector<2x8xf32>
    %115 = vector.multi_reduction <add>, %114, %cst_45 [2] : vector<2x8x32xf32> to vector<2x8xf32>
    %116 = vector.shape_cast %115 : vector<2x8xf32> to vector<2x8x1xf32>
    %cst_46 = arith.constant 3.200000e+01 : f32
    %117 = vector.broadcast %cst_46 : f32 to vector<2x8x1xf32>
    %118 = arith.divf %116, %117 : vector<2x8x1xf32>
    %119 = vector.broadcast %111 : vector<2x8x1xf32> to vector<2x8x32xf32>
    %120 = arith.subf %107, %119 : vector<2x8x32xf32>
    %cst_47 = arith.constant 9.99999974E-6 : f32
    %121 = vector.broadcast %cst_47 : f32 to vector<2x8x1xf32>
    %122 = arith.addf %118, %121 : vector<2x8x1xf32>
    %123 = math.rsqrt %122 : vector<2x8x1xf32>
    %124 = vector.broadcast %123 : vector<2x8x1xf32> to vector<2x8x32xf32>
    %125 = arith.mulf %120, %124 : vector<2x8x32xf32>
    %126 = vector.shape_cast %2 : vector<1x32xf32> to vector<1x1x32xf32>
    %127 = vector.broadcast %126 : vector<1x1x32xf32> to vector<2x8x32xf32>
    %128 = arith.mulf %125, %127 : vector<2x8x32xf32>
    %129 = vector.shape_cast %4 : vector<1x32xf32> to vector<1x1x32xf32>
    %130 = vector.broadcast %129 : vector<1x1x32xf32> to vector<2x8x32xf32>
    %131 = arith.addf %128, %130 : vector<2x8x32xf32>
    %132 = vector.shape_cast %131 : vector<2x8x32xf32> to vector<16x32xf32>
    %cst_48 = arith.constant dense<0.000000e+00> : vector<16x96xf32>
    %133 = tpu.matmul %132, %6, %cst_48 {dimension_numbers = #tpu.dot_dimension_numbers<[1], [0], [0], [1], [0, 0, 1, 1], [], []>} : vector<16x32xf32>, vector<32x96xf32>, vector<16x96xf32> -> vector<16x96xf32>
    %134 = vector.extract_strided_slice %133 {offsets = [0, 0], sizes = [16, 32], strides = [1, 1]} : vector<16x96xf32> to vector<16x32xf32>
    %cst_49 = arith.constant 0.353553385 : f32
    %135 = vector.broadcast %cst_49 : f32 to vector<16x32xf32>
    %136 = arith.mulf %134, %135 : vector<16x32xf32>
    %137 = vector.shape_cast %136 : vector<16x32xf32> to vector<2x8x32xf32>
    %138 = vector.extract_strided_slice %133 {offsets = [0, 32], sizes = [16, 32], strides = [1, 1]} : vector<16x96xf32> to vector<16x32xf32>
    %139 = vector.shape_cast %138 : vector<16x32xf32> to vector<2x8x32xf32>
    %140 = vector.extract_strided_slice %133 {offsets = [0, 64], sizes = [16, 32], strides = [1, 1]} : vector<16x96xf32> to vector<16x32xf32>
    %141 = vector.shape_cast %140 : vector<16x32xf32> to vector<2x8x32xf32>
    %142 = vector.extract_strided_slice %137 {offsets = [0, 0, 0], sizes = [2, 8, 8], strides = [1, 1, 1]} : vector<2x8x32xf32> to vector<2x8x8xf32>
    %143 = vector.extract_strided_slice %139 {offsets = [0, 0, 0], sizes = [2, 8, 8], strides = [1, 1, 1]} : vector<2x8x32xf32> to vector<2x8x8xf32>
    %144 = vector.extract_strided_slice %141 {offsets = [0, 0, 0], sizes = [2, 8, 8], strides = [1, 1, 1]} : vector<2x8x32xf32> to vector<2x8x8xf32>
    "tpu.trace_start"() <{level = 10 : i32, message = "bnd,bmd->bnm"}> : () -> ()
    %cst_50 = arith.constant dense<0.000000e+00> : vector<2x8x8xf32>
    %145 = tpu.matmul %142, %143, %cst_50 {dimension_numbers = #tpu.dot_dimension_numbers<[2], [2], [1], [1], [0, 0, 0, 1, 1, 1], [0], [0]>} : vector<2x8x8xf32>, vector<2x8x8xf32>, vector<2x8x8xf32> -> vector<2x8x8xf32>
    "tpu.trace_stop"() : () -> ()
    %cst_51 = arith.constant dense<0xFF800000> : vector<2x8xf32>
    %146 = vector.multi_reduction <maximumf>, %145, %cst_51 [2] : vector<2x8x8xf32> to vector<2x8xf32>
    %147 = vector.shape_cast %146 : vector<2x8xf32> to vector<2x8x1xf32>
    %148 = vector.broadcast %147 : vector<2x8x1xf32> to vector<2x8x8xf32>
    %149 = arith.subf %145, %148 : vector<2x8x8xf32>
    %150 = math.exp %149 : vector<2x8x8xf32>
    %cst_52 = arith.constant dense<0.000000e+00> : vector<2x8xf32>
    %151 = vector.multi_reduction <add>, %150, %cst_52 [2] : vector<2x8x8xf32> to vector<2x8xf32>
    %152 = vector.shape_cast %151 : vector<2x8xf32> to vector<2x8x1xf32>
    %153 = vector.broadcast %152 : vector<2x8x1xf32> to vector<2x8x8xf32>
    %154 = arith.divf %150, %153 : vector<2x8x8xf32>
    "tpu.trace_start"() <{level = 10 : i32, message = "bnm,bmd->bnd"}> : () -> ()
    %cst_53 = arith.constant dense<0.000000e+00> : vector<2x8x8xf32>
    %155 = tpu.matmul %154, %144, %cst_53 {dimension_numbers = #tpu.dot_dimension_numbers<[2], [1], [1], [2], [0, 0, 0, 1, 1, 2], [0], [0]>} : vector<2x8x8xf32>, vector<2x8x8xf32>, vector<2x8x8xf32> -> vector<2x8x8xf32>
    "tpu.trace_stop"() : () -> ()
    %156 = vector.extract_strided_slice %137 {offsets = [0, 0, 8], sizes = [2, 8, 8], strides = [1, 1, 1]} : vector<2x8x32xf32> to vector<2x8x8xf32>
    %157 = vector.extract_strided_slice %139 {offsets = [0, 0, 8], sizes = [2, 8, 8], strides = [1, 1, 1]} : vector<2x8x32xf32> to vector<2x8x8xf32>
    %158 = vector.extract_strided_slice %141 {offsets = [0, 0, 8], sizes = [2, 8, 8], strides = [1, 1, 1]} : vector<2x8x32xf32> to vector<2x8x8xf32>
    "tpu.trace_start"() <{level = 10 : i32, message = "bnd,bmd->bnm"}> : () -> ()
    %cst_54 = arith.constant dense<0.000000e+00> : vector<2x8x8xf32>
    %159 = tpu.matmul %156, %157, %cst_54 {dimension_numbers = #tpu.dot_dimension_numbers<[2], [2], [1], [1], [0, 0, 0, 1, 1, 1], [0], [0]>} : vector<2x8x8xf32>, vector<2x8x8xf32>, vector<2x8x8xf32> -> vector<2x8x8xf32>
    "tpu.trace_stop"() : () -> ()
    %cst_55 = arith.constant dense<0xFF800000> : vector<2x8xf32>
    %160 = vector.multi_reduction <maximumf>, %159, %cst_55 [2] : vector<2x8x8xf32> to vector<2x8xf32>
    %161 = vector.shape_cast %160 : vector<2x8xf32> to vector<2x8x1xf32>
    %162 = vector.broadcast %161 : vector<2x8x1xf32> to vector<2x8x8xf32>
    %163 = arith.subf %159, %162 : vector<2x8x8xf32>
    %164 = math.exp %163 : vector<2x8x8xf32>
    %cst_56 = arith.constant dense<0.000000e+00> : vector<2x8xf32>
    %165 = vector.multi_reduction <add>, %164, %cst_56 [2] : vector<2x8x8xf32> to vector<2x8xf32>
    %166 = vector.shape_cast %165 : vector<2x8xf32> to vector<2x8x1xf32>
    %167 = vector.broadcast %166 : vector<2x8x1xf32> to vector<2x8x8xf32>
    %168 = arith.divf %164, %167 : vector<2x8x8xf32>
    "tpu.trace_start"() <{level = 10 : i32, message = "bnm,bmd->bnd"}> : () -> ()
    %cst_57 = arith.constant dense<0.000000e+00> : vector<2x8x8xf32>
    %169 = tpu.matmul %168, %158, %cst_57 {dimension_numbers = #tpu.dot_dimension_numbers<[2], [1], [1], [2], [0, 0, 0, 1, 1, 2], [0], [0]>} : vector<2x8x8xf32>, vector<2x8x8xf32>, vector<2x8x8xf32> -> vector<2x8x8xf32>
    "tpu.trace_stop"() : () -> ()
    %170 = vector.extract_strided_slice %137 {offsets = [0, 0, 16], sizes = [2, 8, 8], strides = [1, 1, 1]} : vector<2x8x32xf32> to vector<2x8x8xf32>
    %171 = vector.extract_strided_slice %139 {offsets = [0, 0, 16], sizes = [2, 8, 8], strides = [1, 1, 1]} : vector<2x8x32xf32> to vector<2x8x8xf32>
    %172 = vector.extract_strided_slice %141 {offsets = [0, 0, 16], sizes = [2, 8, 8], strides = [1, 1, 1]} : vector<2x8x32xf32> to vector<2x8x8xf32>
    "tpu.trace_start"() <{level = 10 : i32, message = "bnd,bmd->bnm"}> : () -> ()
    %cst_58 = arith.constant dense<0.000000e+00> : vector<2x8x8xf32>
    %173 = tpu.matmul %170, %171, %cst_58 {dimension_numbers = #tpu.dot_dimension_numbers<[2], [2], [1], [1], [0, 0, 0, 1, 1, 1], [0], [0]>} : vector<2x8x8xf32>, vector<2x8x8xf32>, vector<2x8x8xf32> -> vector<2x8x8xf32>
    "tpu.trace_stop"() : () -> ()
    %cst_59 = arith.constant dense<0xFF800000> : vector<2x8xf32>
    %174 = vector.multi_reduction <maximumf>, %173, %cst_59 [2] : vector<2x8x8xf32> to vector<2x8xf32>
    %175 = vector.shape_cast %174 : vector<2x8xf32> to vector<2x8x1xf32>
    %176 = vector.broadcast %175 : vector<2x8x1xf32> to vector<2x8x8xf32>
    %177 = arith.subf %173, %176 : vector<2x8x8xf32>
    %178 = math.exp %177 : vector<2x8x8xf32>
    %cst_60 = arith.constant dense<0.000000e+00> : vector<2x8xf32>
    %179 = vector.multi_reduction <add>, %178, %cst_60 [2] : vector<2x8x8xf32> to vector<2x8xf32>
    %180 = vector.shape_cast %179 : vector<2x8xf32> to vector<2x8x1xf32>
    %181 = vector.broadcast %180 : vector<2x8x1xf32> to vector<2x8x8xf32>
    %182 = arith.divf %178, %181 : vector<2x8x8xf32>
    "tpu.trace_start"() <{level = 10 : i32, message = "bnm,bmd->bnd"}> : () -> ()
    %cst_61 = arith.constant dense<0.000000e+00> : vector<2x8x8xf32>
    %183 = tpu.matmul %182, %172, %cst_61 {dimension_numbers = #tpu.dot_dimension_numbers<[2], [1], [1], [2], [0, 0, 0, 1, 1, 2], [0], [0]>} : vector<2x8x8xf32>, vector<2x8x8xf32>, vector<2x8x8xf32> -> vector<2x8x8xf32>
    "tpu.trace_stop"() : () -> ()
    %184 = vector.extract_strided_slice %137 {offsets = [0, 0, 24], sizes = [2, 8, 8], strides = [1, 1, 1]} : vector<2x8x32xf32> to vector<2x8x8xf32>
    %185 = vector.extract_strided_slice %139 {offsets = [0, 0, 24], sizes = [2, 8, 8], strides = [1, 1, 1]} : vector<2x8x32xf32> to vector<2x8x8xf32>
    %186 = vector.extract_strided_slice %141 {offsets = [0, 0, 24], sizes = [2, 8, 8], strides = [1, 1, 1]} : vector<2x8x32xf32> to vector<2x8x8xf32>
    "tpu.trace_start"() <{level = 10 : i32, message = "bnd,bmd->bnm"}> : () -> ()
    %cst_62 = arith.constant dense<0.000000e+00> : vector<2x8x8xf32>
    %187 = tpu.matmul %184, %185, %cst_62 {dimension_numbers = #tpu.dot_dimension_numbers<[2], [2], [1], [1], [0, 0, 0, 1, 1, 1], [0], [0]>} : vector<2x8x8xf32>, vector<2x8x8xf32>, vector<2x8x8xf32> -> vector<2x8x8xf32>
    "tpu.trace_stop"() : () -> ()
    %cst_63 = arith.constant dense<0xFF800000> : vector<2x8xf32>
    %188 = vector.multi_reduction <maximumf>, %187, %cst_63 [2] : vector<2x8x8xf32> to vector<2x8xf32>
    %189 = vector.shape_cast %188 : vector<2x8xf32> to vector<2x8x1xf32>
    %190 = vector.broadcast %189 : vector<2x8x1xf32> to vector<2x8x8xf32>
    %191 = arith.subf %187, %190 : vector<2x8x8xf32>
    %192 = math.exp %191 : vector<2x8x8xf32>
    %cst_64 = arith.constant dense<0.000000e+00> : vector<2x8xf32>
    %193 = vector.multi_reduction <add>, %192, %cst_64 [2] : vector<2x8x8xf32> to vector<2x8xf32>
    %194 = vector.shape_cast %193 : vector<2x8xf32> to vector<2x8x1xf32>
    %195 = vector.broadcast %194 : vector<2x8x1xf32> to vector<2x8x8xf32>
    %196 = arith.divf %192, %195 : vector<2x8x8xf32>
    "tpu.trace_start"() <{level = 10 : i32, message = "bnm,bmd->bnd"}> : () -> ()
    %cst_65 = arith.constant dense<0.000000e+00> : vector<2x8x8xf32>
    %197 = tpu.matmul %196, %186, %cst_65 {dimension_numbers = #tpu.dot_dimension_numbers<[2], [1], [1], [2], [0, 0, 0, 1, 1, 2], [0], [0]>} : vector<2x8x8xf32>, vector<2x8x8xf32>, vector<2x8x8xf32> -> vector<2x8x8xf32>
    "tpu.trace_stop"() : () -> ()
    %198 = tpu.concatenate %155, %169, %183, %197 in 2 : vector<2x8x8xf32>, vector<2x8x8xf32>, vector<2x8x8xf32>, vector<2x8x8xf32> -> vector<2x8x32xf32>
    %199 = vector.shape_cast %198 : vector<2x8x32xf32> to vector<16x32xf32>
    %cst_66 = arith.constant dense<0.000000e+00> : vector<16x32xf32>
    %200 = tpu.matmul %199, %8, %cst_66 {dimension_numbers = #tpu.dot_dimension_numbers<[1], [0], [0], [1], [0, 0, 1, 1], [], []>} : vector<16x32xf32>, vector<32x32xf32>, vector<16x32xf32> -> vector<16x32xf32>
    %201 = vector.shape_cast %200 : vector<16x32xf32> to vector<2x8x32xf32>
    %202 = arith.subf %106, %201 : vector<2x8x32xf32>
    %cst_67 = arith.constant 5.000000e-01 : f32
    %203 = vector.broadcast %cst_67 : f32 to vector<2x8x32xf32>
    %204 = arith.mulf %203, %202 : vector<2x8x32xf32>
    %205 = arith.addf %204, %0 : vector<2x8x32xf32>
    %206 = vector.shape_cast %205 : vector<2x8x32xf32> to vector<16x32xf32>
    %cst_68 = arith.constant dense<0.000000e+00> : vector<16x32xf32>
    %207 = tpu.matmul %206, %10, %cst_68 {dimension_numbers = #tpu.dot_dimension_numbers<[1], [0], [0], [1], [0, 0, 1, 1], [], []>} : vector<16x32xf32>, vector<32x32xf32>, vector<16x32xf32> -> vector<16x32xf32>
    %208 = vector.broadcast %12 : vector<1x32xf32> to vector<16x32xf32>
    %209 = arith.addf %207, %208 : vector<16x32xf32>
    %210 = vector.shape_cast %209 : vector<16x32xf32> to vector<2x8x32xf32>
    %cst_69 = arith.constant 5.000000e-01 : f32
    %211 = vector.broadcast %cst_69 : f32 to vector<2x8x32xf32>
    %212 = arith.mulf %211, %210 : vector<2x8x32xf32>
    %213 = arith.addf %212, %205 : vector<2x8x32xf32>
    %c0_70 = arith.constant 0 : index
    %c0_71 = arith.constant 0 : index
    %c0_72 = arith.constant 0 : index
    %214 = vector.load %arg8[%c0_70, %c0_71, %c0_72] : memref<2x8x32xf32, #tpu.memory_space<vmem>>, vector<2x8x32xf32>
    tpu.vector_store %arg8[%c0_70, %c0_71, %c0_72], %213 {strides = array<i32>} : memref<2x8x32xf32, #tpu.memory_space<vmem>>, vector<2x8x32xf32>,
    return
  }
  func.func @transform_0(%arg0: i32) -> (i32, i32, i32) {
    %c0_i32 = arith.constant 0 : i32
    %c0_i32_0 = arith.constant 0 : i32
    %c0_i32_1 = arith.constant 0 : i32
    %c0_i32_2 = arith.constant 0 : i32
    return %c0_i32, %c0_i32_0, %c0_i32_1 : i32, i32, i32
  }
  func.func @transform_1(%arg0: i32) -> (i32, i32, i32) {
    %c0_i32 = arith.constant 0 : i32
    %c0_i32_0 = arith.constant 0 : i32
    %c0_i32_1 = arith.constant 0 : i32
    return %arg0, %c0_i32, %c0_i32_0 : i32, i32, i32
  }
  func.func @transform_2(%arg0: i32) -> (i32, i32, i32) {
    %c0_i32 = arith.constant 0 : i32
    %c0_i32_0 = arith.constant 0 : i32
    %c0_i32_1 = arith.constant 0 : i32
    return %arg0, %c0_i32, %c0_i32_0 : i32, i32, i32
  }
  func.func @transform_3(%arg0: i32) -> (i32, i32, i32) {
    %c0_i32 = arith.constant 0 : i32
    %c0_i32_0 = arith.constant 0 : i32
    %c0_i32_1 = arith.constant 0 : i32
    return %arg0, %c0_i32, %c0_i32_0 : i32, i32, i32
  }
  func.func @transform_4(%arg0: i32) -> (i32, i32, i32) {
    %c0_i32 = arith.constant 0 : i32
    %c0_i32_0 = arith.constant 0 : i32
    %c0_i32_1 = arith.constant 0 : i32
    return %arg0, %c0_i32, %c0_i32_0 : i32, i32, i32
  }
  func.func @transform_5(%arg0: i32) -> (i32, i32, i32) {
    %c0_i32 = arith.constant 0 : i32
    %c0_i32_0 = arith.constant 0 : i32
    %c0_i32_1 = arith.constant 0 : i32
    return %arg0, %c0_i32, %c0_i32_0 : i32, i32, i32
  }
  func.func @transform_6(%arg0: i32) -> (i32, i32, i32) {
    %c0_i32 = arith.constant 0 : i32
    %c0_i32_0 = arith.constant 0 : i32
    %c0_i32_1 = arith.constant 0 : i32
    return %arg0, %c0_i32, %c0_i32_0 : i32, i32, i32
  }
  func.func @transform_7(%arg0: i32) -> (i32, i32, i32) {
    %c0_i32 = arith.constant 0 : i32
    %c0_i32_0 = arith.constant 0 : i32
    %c0_i32_1 = arith.constant 0 : i32
    %c0_i32_2 = arith.constant 0 : i32
    return %c0_i32, %c0_i32_0, %c0_i32_1 : i32, i32, i32
  }
}

</mosaic_0001>

<llo_original>
// kernel: tpu_custom_call.1
$region0: #{tpu_custom_call.1}
  #allocation0 [shape = 'u32[]', space=smem, size = 0x4, offset = 0x4, fixed_abs, tag = 'smem constant byte address 0x4 - core index']
  #allocation1 [shape = 'u32[144,128]{1,0:T(1,128)}', space=vmem, size = 0x12000, scoped, tag = 'internal scratch']
  %s0 = inlined_call_operand.hbm [shape: f32[2,8,32], index: 0, kind: input, shape index: {}]
  %s1 = inlined_call_operand.hbm [shape: f32[2,1,32], index: 1, kind: input, shape index: {}]
  %s2 = inlined_call_operand.vmem [shape: f32[2,1,32], index: 2, kind: input, shape index: {}]
  %s3 = inlined_call_operand.hbm [shape: f32[2,32,96], index: 3, kind: input, shape index: {}]
  %s4 = inlined_call_operand.hbm [shape: f32[2,32,32], index: 4, kind: input, shape index: {}]
  %s5 = inlined_call_operand.hbm [shape: f32[2,32,32], index: 5, kind: input, shape index: {}]
  %s6 = inlined_call_operand.vmem [shape: f32[2,1,32], index: 6, kind: input, shape index: {}]
  %s7 = inlined_call_operand.hbm [shape: f32[2,8,32], index: 7, kind: output, shape index: {}]
  %s8 = sld [smem:[#allocation0]]
  $region81: #{tpu_custom_call.1} parent=0
    _
  %s10 = ssub.s32 1, %s8
  %s11 = scalar_select 0, %s10, %s8
  $region1: #{tpu_custom_call.1} parent=0
    #allocation2 [shape = 'u8[8192]{0}', space=vmem, size = 0x2000, scoped, tag = 'input window, operand 0, single buffered']
    #allocation3 [shape = 's32[2]{0}', space=sflag, size = 0x8, scoped, tag = 'scoped memory for tpu_custom_call.1']
    #allocation4 [shape = 's32[2]{0}', space=sflag, size = 0x8, scoped, tag = 'scoped memory for tpu_custom_call.1']
    #allocation5 [shape = 'u8[1024]{0}', space=vmem, size = 0x400, scoped, tag = 'input window, operand 1']
    #allocation6 [shape = 's32[2]{0}', space=sflag, size = 0x8, scoped, tag = 'scoped memory for tpu_custom_call.1']
    #allocation7 [shape = 'u8[32768]{0}', space=vmem, size = 0x8000, scoped, tag = 'input window, operand 3']
    #allocation8 [shape = 'u8[32768]{0}', space=vmem, size = 0x8000, scoped, tag = 'input window, operand 4']
    #allocation9 [shape = 's32[2]{0}', space=sflag, size = 0x8, scoped, tag = 'scoped memory for tpu_custom_call.1']
    #allocation10 [shape = 'u8[32768]{0}', space=vmem, size = 0x8000, scoped, tag = 'input window, operand 5']
    #allocation11 [shape = 'u8[8192]{0}', space=vmem, size = 0x2000, scoped, tag = 'output window, operand 0, single buffered']
    %12 = vsyncpa [#allocation3], 0
    %13 = vsyncpa [#allocation6], 0
    %s14 = scalar_lea.sflag [#allocation6], 1
    %15 = vsyncpa %s14, 0
    %16 = vsyncpa [#allocation9], 0
    %s17 = scalar_lea.sflag [#allocation9], 1
    %18 = vsyncpa %s17, 0
    %19 = vsyncpa [#allocation4], 0
    loop: start=0, step=1, limit=4
    $region2: #{tpu_custom_call.1} parent=1 // loop_pre_header
      _
    $region3: #{tpu_custom_call.1} parent=1 // loop_header
      %s21 = sphi 0, %s25
      %p22 = scmp.ge.s32.totalorder %s21, 4
      %s29 = sphi 0, %s29
      %s31 = sphi 0, %s29
      %s32 = sphi 0, %s31
      %s46 = sphi 0, %s32
      %s52 = sphi 0, %s54
      %s55 = sphi 0, %s52
      %s56 = sphi 0, %s55
      %s72 = sphi 0, %s56
      %s78 = sphi 0, %s80
      %s81 = sphi 0, %s78
      %s82 = sphi 0, %s81
      %s98 = sphi 0, %s82
      %s104 = sphi 0, %s106
      %s107 = sphi 0, %s104
      %s108 = sphi 0, %s107
      %s124 = sphi 0, %s108
      %s130 = sphi 0, %s132
      %s133 = sphi 0, %s130
      %s134 = sphi 0, %s133
      %s150 = sphi 0, %s134
      %s156 = sphi 0, %s158
      %s159 = sphi 0, %s156
      %s160 = sphi 0, %s159
      %s176 = sphi 0, %s160
      %s182 = sphi 0, %s184
      %s185 = sphi 0, %s182
      %s186 = sphi 0, %s185
      %s202 = sphi 0, %s186
      %s206 = sphi 0, %s206
      %s208 = sphi 0, %s206
      %s209 = sphi 0, %s208
      %s223 = sphi 0, %s209
    $region4: #{tpu_custom_call.1} parent=1 // loop_header_branch
      %24 = sbr.rel (%p22) target = $region8
    $region5: #{tpu_custom_call.1} parent=1 // loop_body
      %s26 = ssub.s32 %s21, 1
      %s27 = ssub.s32 %s21, 2
      %s28 = sadd.s32 %s21, 1
      %s30 = sadd.s32 %s29, 1
      %p33 = scmp.eq.s32.totalorder %s21, 1
      %p34 = scmp.ne.s32.totalorder %s29, %s31
      %p35 = scmp.eq.s32.totalorder %s21, 0
      %p36 = por %p34, %p35
      %p37 = scmp.ne.s32.totalorder %s29, %s31
      %p38 = scmp.eq.s32.totalorder %s26, 1
      %p39 = por %p37, %p38
      %p40 = scmp.ne.s32.totalorder %s31, %s32
      %p41 = scmp.eq.s32.totalorder %s26, 0
      %p42 = por %p40, %p41
      %p43 = scmp.ne.s32.totalorder %s31, %s32
      %p44 = scmp.eq.s32.totalorder %s27, 1
      %p45 = por %p43, %p44
      %p47 = scmp.ne.s32.totalorder %s32, %s46
      %p48 = scmp.eq.s32.totalorder %s27, 0
      %p49 = por %p47, %p48
      %s50 = ssub.s32 %s21, %s28
      %p51 = scmp.eq.s32.totalorder %s50, 0
      %s53 = sadd.s32 %s52, 1
      %s54 = scalar_select %p51, %s52, %s53
      %p57 = pneg %p51
      %p58 = scmp.eq.s32.totalorder %s21, 1
      %p59 = por %p57, %p58
      %p60 = scmp.ne.s32.totalorder %s52, %s55
      %p61 = scmp.eq.s32.totalorder %s21, 0
      %p62 = por %p60, %p61
      %p63 = scmp.ne.s32.totalorder %s52, %s55
      %p64 = scmp.eq.s32.totalorder %s26, 1
      %p65 = por %p63, %p64
      %p66 = scmp.ne.s32.totalorder %s55, %s56
      %p67 = scmp.eq.s32.totalorder %s26, 0
      %p68 = por %p66, %p67
      %p69 = scmp.ne.s32.totalorder %s55, %s56
      %p70 = scmp.eq.s32.totalorder %s27, 1
      %p71 = por %p69, %p70
      %p73 = scmp.ne.s32.totalorder %s56, %s72
      %p74 = scmp.eq.s32.totalorder %s27, 0
      %p75 = por %p73, %p74
      %s76 = ssub.s32 %s21, %s28
      %p77 = scmp.eq.s32.totalorder %s76, 0
      %s79 = sadd.s32 %s78, 1
      %s80 = scalar_select %p77, %s78, %s79
      %p83 = pneg %p77
      %p84 = scmp.eq.s32.totalorder %s21, 1
      %p85 = por %p83, %p84
      %p86 = scmp.ne.s32.totalorder %s78, %s81
      %p87 = scmp.eq.s32.totalorder %s21, 0
      %p88 = por %p86, %p87
      %p89 = scmp.ne.s32.totalorder %s78, %s81
      %p90 = scmp.eq.s32.totalorder %s26, 1
      %p91 = por %p89, %p90
      %p92 = scmp.ne.s32.totalorder %s81, %s82
      %p93 = scmp.eq.s32.totalorder %s26, 0
      %p94 = por %p92, %p93
      %p95 = scmp.ne.s32.totalorder %s81, %s82
      %p96 = scmp.eq.s32.totalorder %s27, 1
      %p97 = por %p95, %p96
      %p99 = scmp.ne.s32.totalorder %s82, %s98
      %p100 = scmp.eq.s32.totalorder %s27, 0
      %p101 = por %p99, %p100
      %s102 = ssub.s32 %s21, %s28
      %p103 = scmp.eq.s32.totalorder %s102, 0
      %s105 = sadd.s32 %s104, 1
      %s106 = scalar_select %p103, %s104, %s105
      %p109 = pneg %p103
      %p110 = scmp.eq.s32.totalorder %s21, 1
      %p111 = por %p109, %p110
      %p112 = scmp.ne.s32.totalorder %s104, %s107
      %p113 = scmp.eq.s32.totalorder %s21, 0
      %p114 = por %p112, %p113
      %p115 = scmp.ne.s32.totalorder %s104, %s107
      %p116 = scmp.eq.s32.totalorder %s26, 1
      %p117 = por %p115, %p116
      %p118 = scmp.ne.s32.totalorder %s107, %s108
      %p119 = scmp.eq.s32.totalorder %s26, 0
      %p120 = por %p118, %p119
      %p121 = scmp.ne.s32.totalorder %s107, %s108
      %p122 = scmp.eq.s32.totalorder %s27, 1
      %p123 = por %p121, %p122
      %p125 = scmp.ne.s32.totalorder %s108, %s124
      %p126 = scmp.eq.s32.totalorder %s27, 0
      %p127 = por %p125, %p126
      %s128 = ssub.s32 %s21, %s28
      %p129 = scmp.eq.s32.totalorder %s128, 0
      %s131 = sadd.s32 %s130, 1
      %s132 = scalar_select %p129, %s130, %s131
      %p135 = pneg %p129
      %p136 = scmp.eq.s32.totalorder %s21, 1
      %p137 = por %p135, %p136
      %p138 = scmp.ne.s32.totalorder %s130, %s133
      %p139 = scmp.eq.s32.totalorder %s21, 0
      %p140 = por %p138, %p139
      %p141 = scmp.ne.s32.totalorder %s130, %s133
      %p142 = scmp.eq.s32.totalorder %s26, 1
      %p143 = por %p141, %p142
      %p144 = scmp.ne.s32.totalorder %s133, %s134
      %p145 = scmp.eq.s32.totalorder %s26, 0
      %p146 = por %p144, %p145
      %p147 = scmp.ne.s32.totalorder %s133, %s134
      %p148 = scmp.eq.s32.totalorder %s27, 1
      %p149 = por %p147, %p148
      %p151 = scmp.ne.s32.totalorder %s134, %s150
      %p152 = scmp.eq.s32.totalorder %s27, 0
      %p153 = por %p151, %p152
      %s154 = ssub.s32 %s21, %s28
      %p155 = scmp.eq.s32.totalorder %s154, 0
      %s157 = sadd.s32 %s156, 1
      %s158 = scalar_select %p155, %s156, %s157
      %p161 = pneg %p155
      %p162 = scmp.eq.s32.totalorder %s21, 1
      %p163 = por %p161, %p162
      %p164 = scmp.ne.s32.totalorder %s156, %s159
      %p165 = scmp.eq.s32.totalorder %s21, 0
      %p166 = por %p164, %p165
      %p167 = scmp.ne.s32.totalorder %s156, %s159
      %p168 = scmp.eq.s32.totalorder %s26, 1
      %p169 = por %p167, %p168
      %p170 = scmp.ne.s32.totalorder %s159, %s160
      %p171 = scmp.eq.s32.totalorder %s26, 0
      %p172 = por %p170, %p171
      %p173 = scmp.ne.s32.totalorder %s159, %s160
      %p174 = scmp.eq.s32.totalorder %s27, 1
      %p175 = por %p173, %p174
      %p177 = scmp.ne.s32.totalorder %s160, %s176
      %p178 = scmp.eq.s32.totalorder %s27, 0
      %p179 = por %p177, %p178
      %s180 = ssub.s32 %s21, %s28
      %p181 = scmp.eq.s32.totalorder %s180, 0
      %s183 = sadd.s32 %s182, 1
      %s184 = scalar_select %p181, %s182, %s183
      %p187 = pneg %p181
      %p188 = scmp.eq.s32.totalorder %s21, 1
      %p189 = por %p187, %p188
      %p190 = scmp.ne.s32.totalorder %s182, %s185
      %p191 = scmp.eq.s32.totalorder %s21, 0
      %p192 = por %p190, %p191
      %p193 = scmp.ne.s32.totalorder %s182, %s185
      %p194 = scmp.eq.s32.totalorder %s26, 1
      %p195 = por %p193, %p194
      %p196 = scmp.ne.s32.totalorder %s185, %s186
      %p197 = scmp.eq.s32.totalorder %s26, 0
      %p198 = por %p196, %p197
      %p199 = scmp.ne.s32.totalorder %s185, %s186
      %p200 = scmp.eq.s32.totalorder %s27, 1
      %p201 = por %p199, %p200
      %p203 = scmp.ne.s32.totalorder %s186, %s202
      %p204 = scmp.eq.s32.totalorder %s27, 0
      %p205 = por %p203, %p204
      %s207 = sadd.s32 %s206, 1
      %p210 = scmp.eq.s32.totalorder %s21, 1
      %p211 = scmp.ne.s32.totalorder %s206, %s208
      %p212 = scmp.eq.s32.totalorder %s21, 0
      %p213 = por %p211, %p212
      %p214 = scmp.ne.s32.totalorder %s206, %s208
      %p215 = scmp.eq.s32.totalorder %s26, 1
      %p216 = por %p214, %p215
      %p217 = scmp.ne.s32.totalorder %s208, %s209
      %p218 = scmp.eq.s32.totalorder %s26, 0
      %p219 = por %p217, %p218
      %p220 = scmp.ne.s32.totalorder %s208, %s209
      %p221 = scmp.eq.s32.totalorder %s27, 1
      %p222 = por %p220, %p221
      %p224 = scmp.ne.s32.totalorder %s209, %s223
      %p225 = scmp.eq.s32.totalorder %s27, 0
      %p226 = por %p224, %p225
      %p227 = scmp.le.s32.totalorder 1, %s21
      %p228 = scmp.lt.s32.totalorder %s21, 3
      %p229 = pnand %p227, %p228
      %p230 = pneg %p229
      // Predicated region
      $region9: #{tpu_custom_call.1} parent=5 // pred_check
        _
      $region10: #{tpu_custom_call.1} parent=5 // pred_check_branch
        %232 = sbr.rel (%p229) target = $region12
      $region11: #{tpu_custom_call.1} parent=5 // pred_region
        %s233 = ssub.s32 %s21, 1
        // Predicated region
        $region13: #{tpu_custom_call.1} parent=11 // pred_check
          %p234 = pneg %p42
        $region14: #{tpu_custom_call.1} parent=11 // pred_check_branch
          %236 = sbr.rel (%p234) target = $region16
        $region15: #{tpu_custom_call.1} parent=11 // pred_region
          %s238 = ssub.s32 256, 256
          %239 = vsyncadd [#allocation3], %s238
          %s240 = sshll.u32 [#allocation2], 4
          %s241 = int_to_ptr.vmem [resolvable:$true] %s240
          %246 = dma.hbm_to_vmem [thread:$0]  %s0, 256, %s241, [#allocation3], 128, 128, 8
        $region16: #{tpu_custom_call.1} parent=11 // pred_fallthru
          _
      $region12: #{tpu_custom_call.1} parent=5 // pred_fallthru
        _
      %p247 = scmp.lt.s32.totalorder %s21, 2
      // Predicated region
      $region17: #{tpu_custom_call.1} parent=5 // pred_check
        %p248 = pneg %p247
      $region18: #{tpu_custom_call.1} parent=5 // pred_check_branch
        %250 = sbr.rel (%p248) target = $region20
      $region19: #{tpu_custom_call.1} parent=5 // pred_region
        // Predicated region
        $region21: #{tpu_custom_call.1} parent=19 // pred_check
          %p251 = pneg %p62
        $region22: #{tpu_custom_call.1} parent=19 // pred_check_branch
          %253 = sbr.rel (%p251) target = $region24
        $region23: #{tpu_custom_call.1} parent=19 // pred_region
          %s254 = sand.u32 %s21, 1
          %s255 = scalar_lea.sflag [#allocation6], %s254
          %s256 = sand.u32 %s52, 1
          %s257 = scalar_lea.vmem [#allocation5], %s256
          %s259 = ssub.s32 16, 16
          %260 = vsyncadd %s255, %s259
          %s261 = smul.addr %s21, 16
          %s262 = scalar_lea.hbm %s1, %s261
          %s264 = sshll.u32 %s257, 4
          %s265 = int_to_ptr.vmem [resolvable:$true] %s264
          %267 = dma.hbm_to_vmem [thread:$0]  %s262, 16, %s265, %s255
        $region24: #{tpu_custom_call.1} parent=19 // pred_fallthru
          _
        // Predicated region
        $region25: #{tpu_custom_call.1} parent=19 // pred_check
          %p268 = pneg %p88
        $region26: #{tpu_custom_call.1} parent=19 // pred_check_branch
          %270 = sbr.rel (%p268) target = $region28
        $region27: #{tpu_custom_call.1} parent=19 // pred_region
          %p271 = scmp.lt.s32.totalorder %s21, 1
          %s272 = scalar_select %p271, %s21, 1
          %s273 = scalar_lea.vmem %s2, %s272
        $region28: #{tpu_custom_call.1} parent=19 // pred_fallthru
          _
        // Predicated region
        $region29: #{tpu_custom_call.1} parent=19 // pred_check
          %p274 = pneg %p114
        $region30: #{tpu_custom_call.1} parent=19 // pred_check_branch
          %276 = sbr.rel (%p274) target = $region32
        $region31: #{tpu_custom_call.1} parent=19 // pred_region
          %s277 = sand.u32 %s21, 1
          %s278 = scalar_lea.sflag [#allocation6], %s277
          %s279 = sand.u32 %s104, 1
          %s280 = smul.addr %s279, 32
          %s281 = scalar_lea.vmem [#allocation7], %s280
          %s283 = ssub.s32 512, 512
          %284 = vsyncadd %s278, %s283
          %s285 = smul.addr %s21, 4
          %s286 = smul.addr %s285, 128
          %s287 = scalar_lea.hbm %s3, %s286
          %s288 = sshll.u32 %s281, 4
          %s289 = int_to_ptr.vmem [resolvable:$true] %s288
          %294 = dma.hbm_to_vmem [thread:$0]  %s287, 512, %s289, %s278, 128, 128, 8
        $region32: #{tpu_custom_call.1} parent=19 // pred_fallthru
          _
        // Predicated region
        $region33: #{tpu_custom_call.1} parent=19 // pred_check
          %p295 = pneg %p140
        $region34: #{tpu_custom_call.1} parent=19 // pred_check_branch
          %297 = sbr.rel (%p295) target = $region36
        $region35: #{tpu_custom_call.1} parent=19 // pred_region
          %s298 = sand.u32 %s21, 1
          %s299 = scalar_lea.sflag [#allocation9], %s298
          %s300 = sand.u32 %s130, 1
          %s301 = smul.addr %s300, 32
          %s302 = scalar_lea.vmem [#allocation8], %s301
          %s304 = ssub.s32 512, 512
          %305 = vsyncadd %s299, %s304
          %s306 = smul.addr %s21, 4
          %s307 = smul.addr %s306, 128
          %s308 = scalar_lea.hbm %s4, %s307
          %s309 = sshll.u32 %s302, 4
          %s310 = int_to_ptr.vmem [resolvable:$true] %s309
          %315 = dma.hbm_to_vmem [thread:$0]  %s308, 512, %s310, %s299, 128, 128, 8
        $region36: #{tpu_custom_call.1} parent=19 // pred_fallthru
          _
        // Predicated region
        $region37: #{tpu_custom_call.1} parent=19 // pred_check
          %p316 = pneg %p166
        $region38: #{tpu_custom_call.1} parent=19 // pred_check_branch
          %318 = sbr.rel (%p316) target = $region40
        $region39: #{tpu_custom_call.1} parent=19 // pred_region
          %s319 = sand.u32 %s21, 1
          %s320 = scalar_lea.sflag [#allocation9], %s319
          %s321 = sand.u32 %s156, 1
          %s322 = smul.addr %s321, 32
          %s323 = scalar_lea.vmem [#allocation10], %s322
          %s325 = ssub.s32 512, 512
          %326 = vsyncadd %s320, %s325
          %s327 = smul.addr %s21, 4
          %s328 = smul.addr %s327, 128
          %s329 = scalar_lea.hbm %s5, %s328
          %s330 = sshll.u32 %s323, 4
          %s331 = int_to_ptr.vmem [resolvable:$true] %s330
          %336 = dma.hbm_to_vmem [thread:$0]  %s329, 512, %s331, %s320, 128, 128, 8
        $region40: #{tpu_custom_call.1} parent=19 // pred_fallthru
          _
        // Predicated region
        $region41: #{tpu_custom_call.1} parent=19 // pred_check
          %p337 = pneg %p192
        $region42: #{tpu_custom_call.1} parent=19 // pred_check_branch
          %339 = sbr.rel (%p337) target = $region44
        $region43: #{tpu_custom_call.1} parent=19 // pred_region
          %p340 = scmp.lt.s32.totalorder %s21, 1
          %s341 = scalar_select %p340, %s21, 1
          %s342 = scalar_lea.vmem %s6, %s341
        $region44: #{tpu_custom_call.1} parent=19 // pred_fallthru
          _
      $region20: #{tpu_custom_call.1} parent=5 // pred_fallthru
        _
      %p343 = scmp.le.s32.totalorder 1, %s21
      %p344 = scmp.lt.s32.totalorder %s21, 3
      %p345 = pnand %p343, %p344
      %p346 = pneg %p345
      // Predicated region
      $region45: #{tpu_custom_call.1} parent=5 // pred_check
        _
      $region46: #{tpu_custom_call.1} parent=5 // pred_check_branch
        %348 = sbr.rel (%p345) target = $region48
      $region47: #{tpu_custom_call.1} parent=5 // pred_region
        %s349 = ssub.s32 %s21, 1
        // Predicated region
        $region49: #{tpu_custom_call.1} parent=47 // pred_check
          %p350 = pneg %p42
        $region50: #{tpu_custom_call.1} parent=47 // pred_check_branch
          %352 = sbr.rel (%p350) target = $region52
        $region51: #{tpu_custom_call.1} parent=47 // pred_region
          %353 = dma.done [#allocation3], 256
        $region52: #{tpu_custom_call.1} parent=47 // pred_fallthru
          _
        %s354 = sand.u32 %s26, 1
        %s355 = scalar_lea.sflag [#allocation6], %s354
        %s356 = sand.u32 %s55, 1
        %s357 = scalar_lea.vmem [#allocation5], %s356
        // Predicated region
        $region53: #{tpu_custom_call.1} parent=47 // pred_check
          %p358 = pneg %p68
        $region54: #{tpu_custom_call.1} parent=47 // pred_check_branch
          %360 = sbr.rel (%p358) target = $region56
        $region55: #{tpu_custom_call.1} parent=47 // pred_region
          %361 = dma.done %s355, 16
        $region56: #{tpu_custom_call.1} parent=47 // pred_fallthru
          _
        %s362 = sand.u32 %s26, 1
        %s363 = scalar_lea.sflag [#allocation6], %s362
        %s364 = sand.u32 %s107, 1
        %s365 = smul.addr %s364, 32
        %s366 = scalar_lea.vmem [#allocation7], %s365
        // Predicated region
        $region57: #{tpu_custom_call.1} parent=47 // pred_check
          %p367 = pneg %p120
        $region58: #{tpu_custom_call.1} parent=47 // pred_check_branch
          %369 = sbr.rel (%p367) target = $region60
        $region59: #{tpu_custom_call.1} parent=47 // pred_region
          %370 = dma.done %s363, 512
        $region60: #{tpu_custom_call.1} parent=47 // pred_fallthru
          _
        %s371 = sand.u32 %s26, 1
        %s372 = scalar_lea.sflag [#allocation9], %s371
        %s373 = sand.u32 %s133, 1
        %s374 = smul.addr %s373, 32
        %s375 = scalar_lea.vmem [#allocation8], %s374
        // Predicated region
        $region61: #{tpu_custom_call.1} parent=47 // pred_check
          %p376 = pneg %p146
        $region62: #{tpu_custom_call.1} parent=47 // pred_check_branch
          %378 = sbr.rel (%p376) target = $region64
        $region63: #{tpu_custom_call.1} parent=47 // pred_region
          %379 = dma.done %s372, 512
        $region64: #{tpu_custom_call.1} parent=47 // pred_fallthru
          _
        %s380 = sand.u32 %s26, 1
        %s381 = scalar_lea.sflag [#allocation9], %s380
        %s382 = sand.u32 %s159, 1
        %s383 = smul.addr %s382, 32
        %s384 = scalar_lea.vmem [#allocation10], %s383
        // Predicated region
        $region65: #{tpu_custom_call.1} parent=47 // pred_check
          %p385 = pneg %p172
        $region66: #{tpu_custom_call.1} parent=47 // pred_check_branch
          %387 = sbr.rel (%p385) target = $region68
        $region67: #{tpu_custom_call.1} parent=47 // pred_region
          %388 = dma.done %s381, 512
        $region68: #{tpu_custom_call.1} parent=47 // pred_fallthru
          _
        %p389 = pneg %p42
        %p390 = pneg %p39
        %s391 = sand.u32 %s26, 1
        %s392 = scalar_lea.sflag [#allocation6], %s391
        %s393 = sand.u32 %s55, 1
        %s394 = scalar_lea.vmem [#allocation5], %s393
        %p395 = pneg %p68
        %p396 = pneg %p65
        %p397 = scmp.lt.s32.totalorder %s26, 1
        %s398 = scalar_select %p397, %s26, 1
        %s399 = scalar_lea.vmem %s2, %s398
        %p400 = pneg %p94
        %p401 = pneg %p91
        %s402 = sand.u32 %s26, 1
        %s403 = scalar_lea.sflag [#allocation6], %s402
        %s404 = sand.u32 %s107, 1
        %s405 = smul.addr %s404, 32
        %s406 = scalar_lea.vmem [#allocation7], %s405
        %p407 = pneg %p120
        %p408 = pneg %p117
        %s409 = sand.u32 %s26, 1
        %s410 = scalar_lea.sflag [#allocation9], %s409
        %s411 = sand.u32 %s133, 1
        %s412 = smul.addr %s411, 32
        %s413 = scalar_lea.vmem [#allocation8], %s412
        %p414 = pneg %p146
        %p415 = pneg %p143
        %s416 = sand.u32 %s26, 1
        %s417 = scalar_lea.sflag [#allocation9], %s416
        %s418 = sand.u32 %s159, 1
        %s419 = smul.addr %s418, 32
        %s420 = scalar_lea.vmem [#allocation10], %s419
        %p421 = pneg %p172
        %p422 = pneg %p169
        %p423 = scmp.lt.s32.totalorder %s26, 1
        %s424 = scalar_select %p423, %s26, 1
        %s425 = scalar_lea.vmem %s6, %s424
        %p426 = pneg %p198
        %p427 = pneg %p195
        %p428 = pneg %p219
        %p429 = pneg %p216
        %p430 = scmp.lt.s32.totalorder %s26, 1
        %s431 = scalar_select %p430, %s26, 1
        %s432 = scalar_lea.vmem %s2, %s431
        %p433 = scmp.lt.s32.totalorder %s26, 1
        %s434 = scalar_select %p433, %s26, 1
        %s435 = scalar_lea.vmem %s6, %s434
        %v436 = vld [vmem:[#allocation2] sm:$0xff]
        %v437 = vld [vmem:[#allocation2 + $0x8] sm:$0xff]
        %v438 = vld [vmem:[%s357] sm:$0x1]
        %v439 = vld [vmem:[%s432] sm:$0x1]
        %v440 = vld [vmem:[%s366] sm:$0xff]
        %v441 = vld [vmem:[%s366 + $0x8] sm:$0xff]
        %v442 = vld [vmem:[%s366 + $0x10] sm:$0xff]
        %v443 = vld [vmem:[%s366 + $0x18] sm:$0xff]
        %v444 = vld [vmem:[%s375] sm:$0xff]
        %v445 = vld [vmem:[%s375 + $0x8] sm:$0xff]
        %v446 = vld [vmem:[%s375 + $0x10] sm:$0xff]
        %v447 = vld [vmem:[%s375 + $0x18] sm:$0xff]
        %v448 = vld [vmem:[%s384] sm:$0xff]
        %v449 = vld [vmem:[%s384 + $0x8] sm:$0xff]
        %v450 = vld [vmem:[%s384 + $0x10] sm:$0xff]
        %v451 = vld [vmem:[%s384 + $0x18] sm:$0xff]
        %v452 = vld [vmem:[%s435] sm:$0x1]
        %vm453 = vcmask 261120
        %v454 = vsel %vm453, %v436, 0.0
        %455 = vadd.xlane.f32.xlu0 %v454
        %v456 = vpop.xlane.xlu0 %455
        %v457 = vsel %vm453, %v437, 0.0
        %458 = vadd.xlane.f32.xlu0 %v457
        %v459 = vpop.xlane.xlu0 %458
        %v460 = vrcp.pop 32.0
        %v461 = vmul.f32 %v456, %v460
        %v462 = vmul.f32 %v459, %v460
        %v463 = vsub.f32 %v436, %v461
        %v464 = vsub.f32 %v437, %v462
        %v465 = vmul.f32 %v463, %v463
        %v466 = vmul.f32 %v464, %v464
        %v467 = vsel %vm453, %v465, 0.0
        %468 = vadd.xlane.f32.xlu0 %v467
        %v469 = vpop.xlane.xlu0 %468
        %v470 = vsel %vm453, %v466, 0.0
        %471 = vadd.xlane.f32.xlu0 %v470
        %v472 = vpop.xlane.xlu0 %471
        %v473 = vmul.f32 %v469, %v460
        %v474 = vmul.f32 %v472, %v460
        %v475 = vadd.f32 %v473, 1e-05
        %v476 = vadd.f32 %v474, 1e-05
        %v477 = vrsqrt.pop %v475
        %v478 = vrsqrt.pop %v476
        %v479 = vmul.f32 %v463, %v477
        %v480 = vmul.f32 %v464, %v478
        %v482 = vlaneseq
        %v483 = vshrl.u32 %v482, 7
        %v484 = vsub.s32 0, %v483
        %v485 = vrot.slane %v438, %v484
        %v487 = vmul.f32 %v479, %v485
        %v488 = vmul.f32 %v480, %v485
        %v490 = vlaneseq
        %v491 = vshrl.u32 %v490, 7
        %v492 = vsub.s32 0, %v491
        %v493 = vrot.slane %v439, %v492
        %v495 = vadd.f32 %v487, %v493
        %v496 = vadd.f32 %v488, %v493
        %v498 = vsel %vm453, %v495, 0
        %v501 = vsel %vm453, %v496, 0
        %503 = vmatprep.subr.mxu0 0.0
        %504 = vmatpush1.msra.mxu0 0.0
        %505 = vmatprep.subr.mxu0 0.0
        %506 = vmatpush1.msra.mxu0 0.0
        %507 = vmatprep.subr.mxu0 0.0
        %508 = vmatpush1.msra.mxu0 0.0
        %509 = vmatprep.subr.mxu0 0.0
        %510 = vmatpush1.msra.mxu0 0.0
        %511 = vmatprep.subr.mxu0 0.0
        %512 = vmatpush1.msra.mxu0 0.0
        %513 = vmatprep.subr.mxu0 0.0
        %514 = vmatpush1.msra.mxu0 0.0
        %515 = vmatprep.subr.mxu0 0.0
        %516 = vmatpush1.msra.mxu0 0.0
        %517 = vmatprep.subr.mxu0 0.0
        %518 = vmatpush1.msra.mxu0 0.0
        %519 = vmatprep.subr.mxu0 0.0
        %520 = vmatpush1.msra.mxu0 0.0
        %521 = vmatprep.subr.mxu0 0.0
        %522 = vmatpush1.msra.mxu0 0.0
        %523 = vmatprep.subr.mxu0 0.0
        %524 = vmatpush1.msra.mxu0 0.0
        %525 = vmatprep.subr.mxu0 0.0
        %526 = vmatpush1.msra.mxu0 0.0
        %527 = vmatprep.subr.mxu0 0.0
        %528 = vmatpush1.msra.mxu0 %v443
        %529 = vmatprep.subr.mxu0 0.0
        %530 = vmatpush1.msra.mxu0 %v442
        %531 = vmatprep.subr.mxu0 0.0
        %532 = vmatpush1.msra.mxu0 %v441
        %533 = vmatprep.subr.mxu0 0.0
        %534 = vmatpush1.msra.mxu0 %v440
        %535 = vmatprep.subr.mxu0 0.0
        %536 = vmatpush2.msra.mxu0 0.0
        %537 = vmatprep.subr.mxu0 0.0
        %538 = vmatpush2.msra.mxu0 0.0
        %539 = vmatprep.subr.mxu0 0.0
        %540 = vmatpush2.msra.mxu0 0.0
        %541 = vmatprep.subr.mxu0 0.0
        %542 = vmatpush2.msra.mxu0 0.0
        %543 = vmatprep.subr.mxu0 0.0
        %544 = vmatpush2.msra.mxu0 0.0
        %545 = vmatprep.subr.mxu0 0.0
        %546 = vmatpush2.msra.mxu0 0.0
        %547 = vmatprep.subr.mxu0 0.0
        %548 = vmatpush2.msra.mxu0 0.0
        %549 = vmatprep.subr.mxu0 0.0
        %550 = vmatpush2.msra.mxu0 0.0
        %551 = vmatprep.subr.mxu0 0.0
        %552 = vmatpush2.msra.mxu0 0.0
        %553 = vmatprep.subr.mxu0 0.0
        %554 = vmatpush2.msra.mxu0 0.0
        %555 = vmatprep.subr.mxu0 0.0
        %556 = vmatpush2.msra.mxu0 0.0
        %557 = vmatprep.subr.mxu0 0.0
        %558 = vmatpush2.msra.mxu0 0.0
        %559 = vmatprep.subr.mxu0 0.0
        %560 = vmatpush2.msra.mxu0 0.0
        %561 = vmatprep.subr.mxu0 0.0
        %562 = vmatpush2.msra.mxu0 0.0
        %563 = vmatprep.subr.mxu0 0.0
        %564 = vmatpush2.msra.mxu0 0.0
        %565 = vmatprep.subr.mxu0 0.0
        %566 = vmatpush2.msra.mxu0 0.0
        %567 = vmatprep.mubr.f32.mxu0 0.0
        %568 = vmatmul.mubr.f32.gmra.mxu0 %v498
        %v569 = vpop.f32.mrf.mxu0
        %v570 = vadd.f32 0.0, %v569
        %v571 = vpop.f32.mrf.mxu0
        %572 = vmatprep.mubr.f32.mxu0 0.0
        %573 = vmatmul.mubr.f32.gmra.mxu0 %v501
        %v574 = vpop.f32.mrf.mxu0
        %v575 = vadd.f32 0.0, %v574
        %v576 = vpop.f32.mrf.mxu0
        %577 = vdwg.mxu0
        %v578 = vmul.f32 %v570, 0.35355338
        %v579 = vmul.f32 %v575, 0.35355338
        %581 = vrot.lane.b32.xlu0 %v570, 96
        %v582 = vpop.permute.xlu0 %581
        %vm583 = vcmask 64512
        %v585 = vsel %vm583, %v578, 0
        %v587 = vsel %vm583, %v582, 0
        %589 = vmatprep.subr.mxu0 0.0
        %590 = vmatpush1.xpose.msra.mxu0 0.0
        %591 = vmatprep.subr.mxu0 0.0
        %592 = vmatpush1.xpose.msra.mxu0 0.0
        %593 = vmatprep.subr.mxu0 0.0
        %594 = vmatpush1.xpose.msra.mxu0 0.0
        %595 = vmatprep.subr.mxu0 0.0
        %596 = vmatpush1.xpose.msra.mxu0 0.0
        %597 = vmatprep.subr.mxu0 0.0
        %598 = vmatpush1.xpose.msra.mxu0 0.0
        %599 = vmatprep.subr.mxu0 0.0
        %600 = vmatpush1.xpose.msra.mxu0 0.0
        %601 = vmatprep.subr.mxu0 0.0
        %602 = vmatpush1.xpose.msra.mxu0 0.0
        %603 = vmatprep.subr.mxu0 0.0
        %604 = vmatpush1.xpose.msra.mxu0 0.0
        %605 = vmatprep.subr.mxu0 0.0
        %606 = vmatpush1.xpose.msra.mxu0 0.0
        %607 = vmatprep.subr.mxu0 0.0
        %608 = vmatpush1.xpose.msra.mxu0 0.0
        %609 = vmatprep.subr.mxu0 0.0
        %610 = vmatpush1.xpose.msra.mxu0 0.0
        %611 = vmatprep.subr.mxu0 0.0
        %612 = vmatpush1.xpose.msra.mxu0 0.0
        %613 = vmatprep.subr.mxu0 0.0
        %614 = vmatpush1.xpose.msra.mxu0 0.0
        %615 = vmatprep.subr.mxu0 0.0
        %616 = vmatpush1.xpose.msra.mxu0 0.0
        %617 = vmatprep.subr.mxu0 0.0
        %618 = vmatpush1.xpose.msra.mxu0 0.0
        %619 = vmatprep.subr.mxu0 0.0
        %620 = vmatpush1.xpose.msra.mxu0 %v587
        %621 = vmatprep.subr.mxu0 0.0
        %622 = vmatpush2.xpose.msra.mxu0 0.0
        %623 = vmatprep.subr.mxu0 0.0
        %624 = vmatpush2.xpose.msra.mxu0 0.0
        %625 = vmatprep.subr.mxu0 0.0
        %626 = vmatpush2.xpose.msra.mxu0 0.0
        %627 = vmatprep.subr.mxu0 0.0
        %628 = vmatpush2.xpose.msra.mxu0 0.0
        %629 = vmatprep.subr.mxu0 0.0
        %630 = vmatpush2.xpose.msra.mxu0 0.0
        %631 = vmatprep.subr.mxu0 0.0
        %632 = vmatpush2.xpose.msra.mxu0 0.0
        %633 = vmatprep.subr.mxu0 0.0
        %634 = vmatpush2.xpose.msra.mxu0 0.0
        %635 = vmatprep.subr.mxu0 0.0
        %636 = vmatpush2.xpose.msra.mxu0 0.0
        %637 = vmatprep.subr.mxu0 0.0
        %638 = vmatpush2.xpose.msra.mxu0 0.0
        %639 = vmatprep.subr.mxu0 0.0
        %640 = vmatpush2.xpose.msra.mxu0 0.0
        %641 = vmatprep.subr.mxu0 0.0
        %642 = vmatpush2.xpose.msra.mxu0 0.0
        %643 = vmatprep.subr.mxu0 0.0
        %644 = vmatpush2.xpose.msra.mxu0 0.0
        %645 = vmatprep.subr.mxu0 0.0
        %646 = vmatpush2.xpose.msra.mxu0 0.0
        %647 = vmatprep.subr.mxu0 0.0
        %648 = vmatpush2.xpose.msra.mxu0 0.0
        %649 = vmatprep.subr.mxu0 0.0
        %650 = vmatpush2.xpose.msra.mxu0 0.0
        %651 = vmatprep.subr.mxu0 0.0
        %652 = vmatpush2.xpose.msra.mxu0 0.0
        %653 = vmatprep.mubr.f32.mxu0 0.0
        %654 = vmatmul.mubr.f32.gmra.mxu0 %v585
        %v655 = vpop.f32.mrf.mxu0
        %v656 = vadd.f32 0.0, %v655
        %v657 = vpop.f32.mrf.mxu0
        %658 = vdwg.mxu0
        %660 = vrot.lane.b32.xlu0 %v575, 96
        %v661 = vpop.permute.xlu0 %660
        %v663 = vsel %vm583, %v579, 0
        %v665 = vsel %vm583, %v661, 0
        %667 = vmatprep.subr.mxu0 0.0
        %668 = vmatpush1.xpose.msra.mxu0 0.0
        %669 = vmatprep.subr.mxu0 0.0
        %670 = vmatpush1.xpose.msra.mxu0 0.0
        %671 = vmatprep.subr.mxu0 0.0
        %672 = vmatpush1.xpose.msra.mxu0 0.0
        %673 = vmatprep.subr.mxu0 0.0
        %674 = vmatpush1.xpose.msra.mxu0 0.0
        %675 = vmatprep.subr.mxu0 0.0
        %676 = vmatpush1.xpose.msra.mxu0 0.0
        %677 = vmatprep.subr.mxu0 0.0
        %678 = vmatpush1.xpose.msra.mxu0 0.0
        %679 = vmatprep.subr.mxu0 0.0
        %680 = vmatpush1.xpose.msra.mxu0 0.0
        %681 = vmatprep.subr.mxu0 0.0
        %682 = vmatpush1.xpose.msra.mxu0 0.0
        %683 = vmatprep.subr.mxu0 0.0
        %684 = vmatpush1.xpose.msra.mxu0 0.0
        %685 = vmatprep.subr.mxu0 0.0
        %686 = vmatpush1.xpose.msra.mxu0 0.0
        %687 = vmatprep.subr.mxu0 0.0
        %688 = vmatpush1.xpose.msra.mxu0 0.0
        %689 = vmatprep.subr.mxu0 0.0
        %690 = vmatpush1.xpose.msra.mxu0 0.0
        %691 = vmatprep.subr.mxu0 0.0
        %692 = vmatpush1.xpose.msra.mxu0 0.0
        %693 = vmatprep.subr.mxu0 0.0
        %694 = vmatpush1.xpose.msra.mxu0 0.0
        %695 = vmatprep.subr.mxu0 0.0
        %696 = vmatpush1.xpose.msra.mxu0 0.0
        %697 = vmatprep.subr.mxu0 0.0
        %698 = vmatpush1.xpose.msra.mxu0 %v665
        %699 = vmatprep.subr.mxu0 0.0
        %700 = vmatpush2.xpose.msra.mxu0 0.0
        %701 = vmatprep.subr.mxu0 0.0
        %702 = vmatpush2.xpose.msra.mxu0 0.0
        %703 = vmatprep.subr.mxu0 0.0
        %704 = vmatpush2.xpose.msra.mxu0 0.0
        %705 = vmatprep.subr.mxu0 0.0
        %706 = vmatpush2.xpose.msra.mxu0 0.0
        %707 = vmatprep.subr.mxu0 0.0
        %708 = vmatpush2.xpose.msra.mxu0 0.0
        %709 = vmatprep.subr.mxu0 0.0
        %710 = vmatpush2.xpose.msra.mxu0 0.0
        %711 = vmatprep.subr.mxu0 0.0
        %712 = vmatpush2.xpose.msra.mxu0 0.0
        %713 = vmatprep.subr.mxu0 0.0
        %714 = vmatpush2.xpose.msra.mxu0 0.0
        %715 = vmatprep.subr.mxu0 0.0
        %716 = vmatpush2.xpose.msra.mxu0 0.0
        %717 = vmatprep.subr.mxu0 0.0
        %718 = vmatpush2.xpose.msra.mxu0 0.0
        %719 = vmatprep.subr.mxu0 0.0
        %720 = vmatpush2.xpose.msra.mxu0 0.0
        %721 = vmatprep.subr.mxu0 0.0
        %722 = vmatpush2.xpose.msra.mxu0 0.0
        %723 = vmatprep.subr.mxu0 0.0
        %724 = vmatpush2.xpose.msra.mxu0 0.0
        %725 = vmatprep.subr.mxu0 0.0
        %726 = vmatpush2.xpose.msra.mxu0 0.0
        %727 = vmatprep.subr.mxu0 0.0
        %728 = vmatpush2.xpose.msra.mxu0 0.0
        %729 = vmatprep.subr.mxu0 0.0
        %730 = vmatpush2.xpose.msra.mxu0 0.0
        %731 = vmatprep.mubr.f32.mxu0 0.0
        %732 = vmatmul.mubr.f32.gmra.mxu0 %v663
        %v733 = vpop.f32.mrf.mxu0
        %v734 = vadd.f32 0.0, %v733
        %v735 = vpop.f32.mrf.mxu0
        %736 = vdwg.mxu0
        %v737 = vsel %vm583, %v656, -inf
        %738 = vmax.xlane.f32.xlu0 %v737
        %v739 = vpop.xlane.xlu0 %738
        %v740 = vsel %vm583, %v734, -inf
        %741 = vmax.xlane.f32.xlu0 %v740
        %v742 = vpop.xlane.xlu0 %741
        %v743 = vsub.f32 %v656, %v739
        %v744 = vsub.f32 %v734, %v742
        %v745 = vmul.f32 %v743, 1.442695
        %v746 = vpow.pop %v745
        %v747 = vmul.f32 %v744, 1.442695
        %v748 = vpow.pop %v747
        %v749 = vsel %vm583, %v746, 0.0
        %750 = vadd.xlane.f32.xlu0 %v749
        %v751 = vpop.xlane.xlu0 %750
        %v752 = vsel %vm583, %v748, 0.0
        %753 = vadd.xlane.f32.xlu0 %v752
        %v754 = vpop.xlane.xlu0 %753
        %v755 = vrcp.pop %v751
        %v756 = vmul.f32 %v746, %v755
        %v757 = vrcp.pop %v754
        %v758 = vmul.f32 %v748, %v757
        %759 = vrot.lane.b32.xlu0 %v570, 64
        %v760 = vpop.permute.xlu0 %759
        %v763 = vsel %vm583, %v756, 0
        %765 = vmatprep.subr.mxu0 0.0
        %766 = vmatpush1.msra.mxu0 0.0
        %767 = vmatprep.subr.mxu0 0.0
        %768 = vmatpush1.msra.mxu0 0.0
        %769 = vmatprep.subr.mxu0 0.0
        %770 = vmatpush1.msra.mxu0 0.0
        %771 = vmatprep.subr.mxu0 0.0
        %772 = vmatpush1.msra.mxu0 0.0
        %773 = vmatprep.subr.mxu0 0.0
        %774 = vmatpush1.msra.mxu0 0.0
        %775 = vmatprep.subr.mxu0 0.0
        %776 = vmatpush1.msra.mxu0 0.0
        %777 = vmatprep.subr.mxu0 0.0
        %778 = vmatpush1.msra.mxu0 0.0
        %779 = vmatprep.subr.mxu0 0.0
        %780 = vmatpush1.msra.mxu0 0.0
        %781 = vmatprep.subr.mxu0 0.0
        %782 = vmatpush1.msra.mxu0 0.0
        %783 = vmatprep.subr.mxu0 0.0
        %784 = vmatpush1.msra.mxu0 0.0
        %785 = vmatprep.subr.mxu0 0.0
        %786 = vmatpush1.msra.mxu0 0.0
        %787 = vmatprep.subr.mxu0 0.0
        %788 = vmatpush1.msra.mxu0 0.0
        %789 = vmatprep.subr.mxu0 0.0
        %790 = vmatpush1.msra.mxu0 0.0
        %791 = vmatprep.subr.mxu0 0.0
        %792 = vmatpush1.msra.mxu0 0.0
        %793 = vmatprep.subr.mxu0 0.0
        %794 = vmatpush1.msra.mxu0 0.0
        %795 = vmatprep.subr.mxu0 0.0
        %796 = vmatpush1.msra.mxu0 %v760
        %797 = vmatprep.subr.mxu0 0.0
        %798 = vmatpush2.msra.mxu0 0.0
        %799 = vmatprep.subr.mxu0 0.0
        %800 = vmatpush2.msra.mxu0 0.0
        %801 = vmatprep.subr.mxu0 0.0
        %802 = vmatpush2.msra.mxu0 0.0
        %803 = vmatprep.subr.mxu0 0.0
        %804 = vmatpush2.msra.mxu0 0.0
        %805 = vmatprep.subr.mxu0 0.0
        %806 = vmatpush2.msra.mxu0 0.0
        %807 = vmatprep.subr.mxu0 0.0
        %808 = vmatpush2.msra.mxu0 0.0
        %809 = vmatprep.subr.mxu0 0.0
        %810 = vmatpush2.msra.mxu0 0.0
        %811 = vmatprep.subr.mxu0 0.0
        %812 = vmatpush2.msra.mxu0 0.0
        %813 = vmatprep.subr.mxu0 0.0
        %814 = vmatpush2.msra.mxu0 0.0
        %815 = vmatprep.subr.mxu0 0.0
        %816 = vmatpush2.msra.mxu0 0.0
        %817 = vmatprep.subr.mxu0 0.0
        %818 = vmatpush2.msra.mxu0 0.0
        %819 = vmatprep.subr.mxu0 0.0
        %820 = vmatpush2.msra.mxu0 0.0
        %821 = vmatprep.subr.mxu0 0.0
        %822 = vmatpush2.msra.mxu0 0.0
        %823 = vmatprep.subr.mxu0 0.0
        %824 = vmatpush2.msra.mxu0 0.0
        %825 = vmatprep.subr.mxu0 0.0
        %826 = vmatpush2.msra.mxu0 0.0
        %827 = vmatprep.subr.mxu0 0.0
        %828 = vmatpush2.msra.mxu0 0.0
        %829 = vmatprep.mubr.f32.mxu0 0.0
        %830 = vmatmul.mubr.f32.gmra.mxu0 %v763
        %v831 = vpop.f32.mrf.mxu0
        %v832 = vadd.f32 0.0, %v831
        %v833 = vpop.f32.mrf.mxu0
        %834 = vdwg.mxu0
        %835 = vrot.lane.b32.xlu0 %v575, 64
        %v836 = vpop.permute.xlu0 %835
        %v839 = vsel %vm583, %v758, 0
        %841 = vmatprep.subr.mxu0 0.0
        %842 = vmatpush1.msra.mxu0 0.0
        %843 = vmatprep.subr.mxu0 0.0
        %844 = vmatpush1.msra.mxu0 0.0
        %845 = vmatprep.subr.mxu0 0.0
        %846 = vmatpush1.msra.mxu0 0.0
        %847 = vmatprep.subr.mxu0 0.0
        %848 = vmatpush1.msra.mxu0 0.0
        %849 = vmatprep.subr.mxu0 0.0
        %850 = vmatpush1.msra.mxu0 0.0
        %851 = vmatprep.subr.mxu0 0.0
        %852 = vmatpush1.msra.mxu0 0.0
        %853 = vmatprep.subr.mxu0 0.0
        %854 = vmatpush1.msra.mxu0 0.0
        %855 = vmatprep.subr.mxu0 0.0
        %856 = vmatpush1.msra.mxu0 0.0
        %857 = vmatprep.subr.mxu0 0.0
        %858 = vmatpush1.msra.mxu0 0.0
        %859 = vmatprep.subr.mxu0 0.0
        %860 = vmatpush1.msra.mxu0 0.0
        %861 = vmatprep.subr.mxu0 0.0
        %862 = vmatpush1.msra.mxu0 0.0
        %863 = vmatprep.subr.mxu0 0.0
        %864 = vmatpush1.msra.mxu0 0.0
        %865 = vmatprep.subr.mxu0 0.0
        %866 = vmatpush1.msra.mxu0 0.0
        %867 = vmatprep.subr.mxu0 0.0
        %868 = vmatpush1.msra.mxu0 0.0
        %869 = vmatprep.subr.mxu0 0.0
        %870 = vmatpush1.msra.mxu0 0.0
        %871 = vmatprep.subr.mxu0 0.0
        %872 = vmatpush1.msra.mxu0 %v836
        %873 = vmatprep.subr.mxu0 0.0
        %874 = vmatpush2.msra.mxu0 0.0
        %875 = vmatprep.subr.mxu0 0.0
        %876 = vmatpush2.msra.mxu0 0.0
        %877 = vmatprep.subr.mxu0 0.0
        %878 = vmatpush2.msra.mxu0 0.0
        %879 = vmatprep.subr.mxu0 0.0
        %880 = vmatpush2.msra.mxu0 0.0
        %881 = vmatprep.subr.mxu0 0.0
        %882 = vmatpush2.msra.mxu0 0.0
        %883 = vmatprep.subr.mxu0 0.0
        %884 = vmatpush2.msra.mxu0 0.0
        %885 = vmatprep.subr.mxu0 0.0
        %886 = vmatpush2.msra.mxu0 0.0
        %887 = vmatprep.subr.mxu0 0.0
        %888 = vmatpush2.msra.mxu0 0.0
        %889 = vmatprep.subr.mxu0 0.0
        %890 = vmatpush2.msra.mxu0 0.0
        %891 = vmatprep.subr.mxu0 0.0
        %892 = vmatpush2.msra.mxu0 0.0
        %893 = vmatprep.subr.mxu0 0.0
        %894 = vmatpush2.msra.mxu0 0.0
        %895 = vmatprep.subr.mxu0 0.0
        %896 = vmatpush2.msra.mxu0 0.0
        %897 = vmatprep.subr.mxu0 0.0
        %898 = vmatpush2.msra.mxu0 0.0
        %899 = vmatprep.subr.mxu0 0.0
        %900 = vmatpush2.msra.mxu0 0.0
        %901 = vmatprep.subr.mxu0 0.0
        %902 = vmatpush2.msra.mxu0 0.0
        %903 = vmatprep.subr.mxu0 0.0
        %904 = vmatpush2.msra.mxu0 0.0
        %905 = vmatprep.mubr.f32.mxu0 0.0
        %906 = vmatmul.mubr.f32.gmra.mxu0 %v839
        %v907 = vpop.f32.mrf.mxu0
        %v908 = vadd.f32 0.0, %v907
        %v909 = vpop.f32.mrf.mxu0
        %910 = vdwg.mxu0
        %911 = vrot.lane.b32.xlu0 %v578, 120
        %v912 = vpop.permute.xlu0 %911
        %913 = vrot.lane.b32.xlu0 %v570, 88
        %v914 = vpop.permute.xlu0 %913
        %v915 = vsel %vm583, %v912, 0
        %v917 = vsel %vm583, %v914, 0
        %919 = vmatprep.subr.mxu0 0.0
        %920 = vmatpush1.xpose.msra.mxu0 0.0
        %921 = vmatprep.subr.mxu0 0.0
        %922 = vmatpush1.xpose.msra.mxu0 0.0
        %923 = vmatprep.subr.mxu0 0.0
        %924 = vmatpush1.xpose.msra.mxu0 0.0
        %925 = vmatprep.subr.mxu0 0.0
        %926 = vmatpush1.xpose.msra.mxu0 0.0
        %927 = vmatprep.subr.mxu0 0.0
        %928 = vmatpush1.xpose.msra.mxu0 0.0
        %929 = vmatprep.subr.mxu0 0.0
        %930 = vmatpush1.xpose.msra.mxu0 0.0
        %931 = vmatprep.subr.mxu0 0.0
        %932 = vmatpush1.xpose.msra.mxu0 0.0
        %933 = vmatprep.subr.mxu0 0.0
        %934 = vmatpush1.xpose.msra.mxu0 0.0
        %935 = vmatprep.subr.mxu0 0.0
        %936 = vmatpush1.xpose.msra.mxu0 0.0
        %937 = vmatprep.subr.mxu0 0.0
        %938 = vmatpush1.xpose.msra.mxu0 0.0
        %939 = vmatprep.subr.mxu0 0.0
        %940 = vmatpush1.xpose.msra.mxu0 0.0
        %941 = vmatprep.subr.mxu0 0.0
        %942 = vmatpush1.xpose.msra.mxu0 0.0
        %943 = vmatprep.subr.mxu0 0.0
        %944 = vmatpush1.xpose.msra.mxu0 0.0
        %945 = vmatprep.subr.mxu0 0.0
        %946 = vmatpush1.xpose.msra.mxu0 0.0
        %947 = vmatprep.subr.mxu0 0.0
        %948 = vmatpush1.xpose.msra.mxu0 0.0
        %949 = vmatprep.subr.mxu0 0.0
        %950 = vmatpush1.xpose.msra.mxu0 %v917
        %951 = vmatprep.subr.mxu0 0.0
        %952 = vmatpush2.xpose.msra.mxu0 0.0
        %953 = vmatprep.subr.mxu0 0.0
        %954 = vmatpush2.xpose.msra.mxu0 0.0
        %955 = vmatprep.subr.mxu0 0.0
        %956 = vmatpush2.xpose.msra.mxu0 0.0
        %957 = vmatprep.subr.mxu0 0.0
        %958 = vmatpush2.xpose.msra.mxu0 0.0
        %959 = vmatprep.subr.mxu0 0.0
        %960 = vmatpush2.xpose.msra.mxu0 0.0
        %961 = vmatprep.subr.mxu0 0.0
        %962 = vmatpush2.xpose.msra.mxu0 0.0
        %963 = vmatprep.subr.mxu0 0.0
        %964 = vmatpush2.xpose.msra.mxu0 0.0
        %965 = vmatprep.subr.mxu0 0.0
        %966 = vmatpush2.xpose.msra.mxu0 0.0
        %967 = vmatprep.subr.mxu0 0.0
        %968 = vmatpush2.xpose.msra.mxu0 0.0
        %969 = vmatprep.subr.mxu0 0.0
        %970 = vmatpush2.xpose.msra.mxu0 0.0
        %971 = vmatprep.subr.mxu0 0.0
        %972 = vmatpush2.xpose.msra.mxu0 0.0
        %973 = vmatprep.subr.mxu0 0.0
        %974 = vmatpush2.xpose.msra.mxu0 0.0
        %975 = vmatprep.subr.mxu0 0.0
        %976 = vmatpush2.xpose.msra.mxu0 0.0
        %977 = vmatprep.subr.mxu0 0.0
        %978 = vmatpush2.xpose.msra.mxu0 0.0
        %979 = vmatprep.subr.mxu0 0.0
        %980 = vmatpush2.xpose.msra.mxu0 0.0
        %981 = vmatprep.subr.mxu0 0.0
        %982 = vmatpush2.xpose.msra.mxu0 0.0
        %983 = vmatprep.mubr.f32.mxu0 0.0
        %984 = vmatmul.mubr.f32.gmra.mxu0 %v915
        %v985 = vpop.f32.mrf.mxu0
        %v986 = vadd.f32 0.0, %v985
        %v987 = vpop.f32.mrf.mxu0
        %988 = vdwg.mxu0
        %989 = vrot.lane.b32.xlu0 %v579, 120
        %v990 = vpop.permute.xlu0 %989
        %991 = vrot.lane.b32.xlu0 %v575, 88
        %v992 = vpop.permute.xlu0 %991
        %v993 = vsel %vm583, %v990, 0
        %v995 = vsel %vm583, %v992, 0
        %997 = vmatprep.subr.mxu0 0.0
        %998 = vmatpush1.xpose.msra.mxu0 0.0
        %999 = vmatprep.subr.mxu0 0.0
        %1000 = vmatpush1.xpose.msra.mxu0 0.0
        %1001 = vmatprep.subr.mxu0 0.0
        %1002 = vmatpush1.xpose.msra.mxu0 0.0
        %1003 = vmatprep.subr.mxu0 0.0
        %1004 = vmatpush1.xpose.msra.mxu0 0.0
        %1005 = vmatprep.subr.mxu0 0.0
        %1006 = vmatpush1.xpose.msra.mxu0 0.0
        %1007 = vmatprep.subr.mxu0 0.0
        %1008 = vmatpush1.xpose.msra.mxu0 0.0
        %1009 = vmatprep.subr.mxu0 0.0
        %1010 = vmatpush1.xpose.msra.mxu0 0.0
        %1011 = vmatprep.subr.mxu0 0.0
        %1012 = vmatpush1.xpose.msra.mxu0 0.0
        %1013 = vmatprep.subr.mxu0 0.0
        %1014 = vmatpush1.xpose.msra.mxu0 0.0
        %1015 = vmatprep.subr.mxu0 0.0
        %1016 = vmatpush1.xpose.msra.mxu0 0.0
        %1017 = vmatprep.subr.mxu0 0.0
        %1018 = vmatpush1.xpose.msra.mxu0 0.0
        %1019 = vmatprep.subr.mxu0 0.0
        %1020 = vmatpush1.xpose.msra.mxu0 0.0
        %1021 = vmatprep.subr.mxu0 0.0
        %1022 = vmatpush1.xpose.msra.mxu0 0.0
        %1023 = vmatprep.subr.mxu0 0.0
        %1024 = vmatpush1.xpose.msra.mxu0 0.0
        %1025 = vmatprep.subr.mxu0 0.0
        %1026 = vmatpush1.xpose.msra.mxu0 0.0
        %1027 = vmatprep.subr.mxu0 0.0
        %1028 = vmatpush1.xpose.msra.mxu0 %v995
        %1029 = vmatprep.subr.mxu0 0.0
        %1030 = vmatpush2.xpose.msra.mxu0 0.0
        %1031 = vmatprep.subr.mxu0 0.0
        %1032 = vmatpush2.xpose.msra.mxu0 0.0
        %1033 = vmatprep.subr.mxu0 0.0
        %1034 = vmatpush2.xpose.msra.mxu0 0.0
        %1035 = vmatprep.subr.mxu0 0.0
        %1036 = vmatpush2.xpose.msra.mxu0 0.0
        %1037 = vmatprep.subr.mxu0 0.0
        %1038 = vmatpush2.xpose.msra.mxu0 0.0
        %1039 = vmatprep.subr.mxu0 0.0
        %1040 = vmatpush2.xpose.msra.mxu0 0.0
        %1041 = vmatprep.subr.mxu0 0.0
        %1042 = vmatpush2.xpose.msra.mxu0 0.0
        %1043 = vmatprep.subr.mxu0 0.0
        %1044 = vmatpush2.xpose.msra.mxu0 0.0
        %1045 = vmatprep.subr.mxu0 0.0
        %1046 = vmatpush2.xpose.msra.mxu0 0.0
        %1047 = vmatprep.subr.mxu0 0.0
        %1048 = vmatpush2.xpose.msra.mxu0 0.0
        %1049 = vmatprep.subr.mxu0 0.0
        %1050 = vmatpush2.xpose.msra.mxu0 0.0
        %1051 = vmatprep.subr.mxu0 0.0
        %1052 = vmatpush2.xpose.msra.mxu0 0.0
        %1053 = vmatprep.subr.mxu0 0.0
        %1054 = vmatpush2.xpose.msra.mxu0 0.0
        %1055 = vmatprep.subr.mxu0 0.0
        %1056 = vmatpush2.xpose.msra.mxu0 0.0
        %1057 = vmatprep.subr.mxu0 0.0
        %1058 = vmatpush2.xpose.msra.mxu0 0.0
        %1059 = vmatprep.subr.mxu0 0.0
        %1060 = vmatpush2.xpose.msra.mxu0 0.0
        %1061 = vmatprep.mubr.f32.mxu0 0.0
        %1062 = vmatmul.mubr.f32.gmra.mxu0 %v993
        %v1063 = vpop.f32.mrf.mxu0
        %v1064 = vadd.f32 0.0, %v1063
        %v1065 = vpop.f32.mrf.mxu0
        %1066 = vdwg.mxu0
        %v1067 = vsel %vm583, %v986, -inf
        %1068 = vmax.xlane.f32.xlu0 %v1067
        %v1069 = vpop.xlane.xlu0 %1068
        %v1070 = vsel %vm583, %v1064, -inf
        %1071 = vmax.xlane.f32.xlu0 %v1070
        %v1072 = vpop.xlane.xlu0 %1071
        %v1073 = vsub.f32 %v986, %v1069
        %v1074 = vsub.f32 %v1064, %v1072
        %v1075 = vmul.f32 %v1073, 1.442695
        %v1076 = vpow.pop %v1075
        %v1077 = vmul.f32 %v1074, 1.442695
        %v1078 = vpow.pop %v1077
        %v1079 = vsel %vm583, %v1076, 0.0
        %1080 = vadd.xlane.f32.xlu0 %v1079
        %v1081 = vpop.xlane.xlu0 %1080
        %v1082 = vsel %vm583, %v1078, 0.0
        %1083 = vadd.xlane.f32.xlu0 %v1082
        %v1084 = vpop.xlane.xlu0 %1083
        %v1085 = vrcp.pop %v1081
        %v1086 = vmul.f32 %v1076, %v1085
        %v1087 = vrcp.pop %v1084
        %v1088 = vmul.f32 %v1078, %v1087
        %1089 = vrot.lane.b32.xlu0 %v570, 56
        %v1090 = vpop.permute.xlu0 %1089
        %v1093 = vsel %vm583, %v1086, 0
        %1095 = vmatprep.subr.mxu0 0.0
        %1096 = vmatpush1.msra.mxu0 0.0
        %1097 = vmatprep.subr.mxu0 0.0
        %1098 = vmatpush1.msra.mxu0 0.0
        %1099 = vmatprep.subr.mxu0 0.0
        %1100 = vmatpush1.msra.mxu0 0.0
        %1101 = vmatprep.subr.mxu0 0.0
        %1102 = vmatpush1.msra.mxu0 0.0
        %1103 = vmatprep.subr.mxu0 0.0
        %1104 = vmatpush1.msra.mxu0 0.0
        %1105 = vmatprep.subr.mxu0 0.0
        %1106 = vmatpush1.msra.mxu0 0.0
        %1107 = vmatprep.subr.mxu0 0.0
        %1108 = vmatpush1.msra.mxu0 0.0
        %1109 = vmatprep.subr.mxu0 0.0
        %1110 = vmatpush1.msra.mxu0 0.0
        %1111 = vmatprep.subr.mxu0 0.0
        %1112 = vmatpush1.msra.mxu0 0.0
        %1113 = vmatprep.subr.mxu0 0.0
        %1114 = vmatpush1.msra.mxu0 0.0
        %1115 = vmatprep.subr.mxu0 0.0
        %1116 = vmatpush1.msra.mxu0 0.0
        %1117 = vmatprep.subr.mxu0 0.0
        %1118 = vmatpush1.msra.mxu0 0.0
        %1119 = vmatprep.subr.mxu0 0.0
        %1120 = vmatpush1.msra.mxu0 0.0
        %1121 = vmatprep.subr.mxu0 0.0
        %1122 = vmatpush1.msra.mxu0 0.0
        %1123 = vmatprep.subr.mxu0 0.0
        %1124 = vmatpush1.msra.mxu0 0.0
        %1125 = vmatprep.subr.mxu0 0.0
        %1126 = vmatpush1.msra.mxu0 %v1090
        %1127 = vmatprep.subr.mxu0 0.0
        %1128 = vmatpush2.msra.mxu0 0.0
        %1129 = vmatprep.subr.mxu0 0.0
        %1130 = vmatpush2.msra.mxu0 0.0
        %1131 = vmatprep.subr.mxu0 0.0
        %1132 = vmatpush2.msra.mxu0 0.0
        %1133 = vmatprep.subr.mxu0 0.0
        %1134 = vmatpush2.msra.mxu0 0.0
        %1135 = vmatprep.subr.mxu0 0.0
        %1136 = vmatpush2.msra.mxu0 0.0
        %1137 = vmatprep.subr.mxu0 0.0
        %1138 = vmatpush2.msra.mxu0 0.0
        %1139 = vmatprep.subr.mxu0 0.0
        %1140 = vmatpush2.msra.mxu0 0.0
        %1141 = vmatprep.subr.mxu0 0.0
        %1142 = vmatpush2.msra.mxu0 0.0
        %1143 = vmatprep.subr.mxu0 0.0
        %1144 = vmatpush2.msra.mxu0 0.0
        %1145 = vmatprep.subr.mxu0 0.0
        %1146 = vmatpush2.msra.mxu0 0.0
        %1147 = vmatprep.subr.mxu0 0.0
        %1148 = vmatpush2.msra.mxu0 0.0
        %1149 = vmatprep.subr.mxu0 0.0
        %1150 = vmatpush2.msra.mxu0 0.0
        %1151 = vmatprep.subr.mxu0 0.0
        %1152 = vmatpush2.msra.mxu0 0.0
        %1153 = vmatprep.subr.mxu0 0.0
        %1154 = vmatpush2.msra.mxu0 0.0
        %1155 = vmatprep.subr.mxu0 0.0
        %1156 = vmatpush2.msra.mxu0 0.0
        %1157 = vmatprep.subr.mxu0 0.0
        %1158 = vmatpush2.msra.mxu0 0.0
        %1159 = vmatprep.mubr.f32.mxu0 0.0
        %1160 = vmatmul.mubr.f32.gmra.mxu0 %v1093
        %v1161 = vpop.f32.mrf.mxu0
        %v1162 = vadd.f32 0.0, %v1161
        %v1163 = vpop.f32.mrf.mxu0
        %1164 = vdwg.mxu0
        %1165 = vrot.lane.b32.xlu0 %v575, 56
        %v1166 = vpop.permute.xlu0 %1165
        %v1169 = vsel %vm583, %v1088, 0
        %1171 = vmatprep.subr.mxu0 0.0
        %1172 = vmatpush1.msra.mxu0 0.0
        %1173 = vmatprep.subr.mxu0 0.0
        %1174 = vmatpush1.msra.mxu0 0.0
        %1175 = vmatprep.subr.mxu0 0.0
        %1176 = vmatpush1.msra.mxu0 0.0
        %1177 = vmatprep.subr.mxu0 0.0
        %1178 = vmatpush1.msra.mxu0 0.0
        %1179 = vmatprep.subr.mxu0 0.0
        %1180 = vmatpush1.msra.mxu0 0.0
        %1181 = vmatprep.subr.mxu0 0.0
        %1182 = vmatpush1.msra.mxu0 0.0
        %1183 = vmatprep.subr.mxu0 0.0
        %1184 = vmatpush1.msra.mxu0 0.0
        %1185 = vmatprep.subr.mxu0 0.0
        %1186 = vmatpush1.msra.mxu0 0.0
        %1187 = vmatprep.subr.mxu0 0.0
        %1188 = vmatpush1.msra.mxu0 0.0
        %1189 = vmatprep.subr.mxu0 0.0
        %1190 = vmatpush1.msra.mxu0 0.0
        %1191 = vmatprep.subr.mxu0 0.0
        %1192 = vmatpush1.msra.mxu0 0.0
        %1193 = vmatprep.subr.mxu0 0.0
        %1194 = vmatpush1.msra.mxu0 0.0
        %1195 = vmatprep.subr.mxu0 0.0
        %1196 = vmatpush1.msra.mxu0 0.0
        %1197 = vmatprep.subr.mxu0 0.0
        %1198 = vmatpush1.msra.mxu0 0.0
        %1199 = vmatprep.subr.mxu0 0.0
        %1200 = vmatpush1.msra.mxu0 0.0
        %1201 = vmatprep.subr.mxu0 0.0
        %1202 = vmatpush1.msra.mxu0 %v1166
        %1203 = vmatprep.subr.mxu0 0.0
        %1204 = vmatpush2.msra.mxu0 0.0
        %1205 = vmatprep.subr.mxu0 0.0
        %1206 = vmatpush2.msra.mxu0 0.0
        %1207 = vmatprep.subr.mxu0 0.0
        %1208 = vmatpush2.msra.mxu0 0.0
        %1209 = vmatprep.subr.mxu0 0.0
        %1210 = vmatpush2.msra.mxu0 0.0
        %1211 = vmatprep.subr.mxu0 0.0
        %1212 = vmatpush2.msra.mxu0 0.0
        %1213 = vmatprep.subr.mxu0 0.0
        %1214 = vmatpush2.msra.mxu0 0.0
        %1215 = vmatprep.subr.mxu0 0.0
        %1216 = vmatpush2.msra.mxu0 0.0
        %1217 = vmatprep.subr.mxu0 0.0
        %1218 = vmatpush2.msra.mxu0 0.0
        %1219 = vmatprep.subr.mxu0 0.0
        %1220 = vmatpush2.msra.mxu0 0.0
        %1221 = vmatprep.subr.mxu0 0.0
        %1222 = vmatpush2.msra.mxu0 0.0
        %1223 = vmatprep.subr.mxu0 0.0
        %1224 = vmatpush2.msra.mxu0 0.0
        %1225 = vmatprep.subr.mxu0 0.0
        %1226 = vmatpush2.msra.mxu0 0.0
        %1227 = vmatprep.subr.mxu0 0.0
        %1228 = vmatpush2.msra.mxu0 0.0
        %1229 = vmatprep.subr.mxu0 0.0
        %1230 = vmatpush2.msra.mxu0 0.0
        %1231 = vmatprep.subr.mxu0 0.0
        %1232 = vmatpush2.msra.mxu0 0.0
        %1233 = vmatprep.subr.mxu0 0.0
        %1234 = vmatpush2.msra.mxu0 0.0
        %1235 = vmatprep.mubr.f32.mxu0 0.0
        %1236 = vmatmul.mubr.f32.gmra.mxu0 %v1169
        %v1237 = vpop.f32.mrf.mxu0
        %v1238 = vadd.f32 0.0, %v1237
        %v1239 = vpop.f32.mrf.mxu0
        %1240 = vdwg.mxu0
        %1241 = vrot.lane.b32.xlu0 %v578, 112
        %v1242 = vpop.permute.xlu0 %1241
        %1243 = vrot.lane.b32.xlu0 %v570, 80
        %v1244 = vpop.permute.xlu0 %1243
        %v1245 = vsel %vm583, %v1242, 0
        %v1247 = vsel %vm583, %v1244, 0
        %1249 = vmatprep.subr.mxu0 0.0
        %1250 = vmatpush1.xpose.msra.mxu0 0.0
        %1251 = vmatprep.subr.mxu0 0.0
        %1252 = vmatpush1.xpose.msra.mxu0 0.0
        %1253 = vmatprep.subr.mxu0 0.0
        %1254 = vmatpush1.xpose.msra.mxu0 0.0
        %1255 = vmatprep.subr.mxu0 0.0
        %1256 = vmatpush1.xpose.msra.mxu0 0.0
        %1257 = vmatprep.subr.mxu0 0.0
        %1258 = vmatpush1.xpose.msra.mxu0 0.0
        %1259 = vmatprep.subr.mxu0 0.0
        %1260 = vmatpush1.xpose.msra.mxu0 0.0
        %1261 = vmatprep.subr.mxu0 0.0
        %1262 = vmatpush1.xpose.msra.mxu0 0.0
        %1263 = vmatprep.subr.mxu0 0.0
        %1264 = vmatpush1.xpose.msra.mxu0 0.0
        %1265 = vmatprep.subr.mxu0 0.0
        %1266 = vmatpush1.xpose.msra.mxu0 0.0
        %1267 = vmatprep.subr.mxu0 0.0
        %1268 = vmatpush1.xpose.msra.mxu0 0.0
        %1269 = vmatprep.subr.mxu0 0.0
        %1270 = vmatpush1.xpose.msra.mxu0 0.0
        %1271 = vmatprep.subr.mxu0 0.0
        %1272 = vmatpush1.xpose.msra.mxu0 0.0
        %1273 = vmatprep.subr.mxu0 0.0
        %1274 = vmatpush1.xpose.msra.mxu0 0.0
        %1275 = vmatprep.subr.mxu0 0.0
        %1276 = vmatpush1.xpose.msra.mxu0 0.0
        %1277 = vmatprep.subr.mxu0 0.0
        %1278 = vmatpush1.xpose.msra.mxu0 0.0
        %1279 = vmatprep.subr.mxu0 0.0
        %1280 = vmatpush1.xpose.msra.mxu0 %v1247
        %1281 = vmatprep.subr.mxu0 0.0
        %1282 = vmatpush2.xpose.msra.mxu0 0.0
        %1283 = vmatprep.subr.mxu0 0.0
        %1284 = vmatpush2.xpose.msra.mxu0 0.0
        %1285 = vmatprep.subr.mxu0 0.0
        %1286 = vmatpush2.xpose.msra.mxu0 0.0
        %1287 = vmatprep.subr.mxu0 0.0
        %1288 = vmatpush2.xpose.msra.mxu0 0.0
        %1289 = vmatprep.subr.mxu0 0.0
        %1290 = vmatpush2.xpose.msra.mxu0 0.0
        %1291 = vmatprep.subr.mxu0 0.0
        %1292 = vmatpush2.xpose.msra.mxu0 0.0
        %1293 = vmatprep.subr.mxu0 0.0
        %1294 = vmatpush2.xpose.msra.mxu0 0.0
        %1295 = vmatprep.subr.mxu0 0.0
        %1296 = vmatpush2.xpose.msra.mxu0 0.0
        %1297 = vmatprep.subr.mxu0 0.0
        %1298 = vmatpush2.xpose.msra.mxu0 0.0
        %1299 = vmatprep.subr.mxu0 0.0
        %1300 = vmatpush2.xpose.msra.mxu0 0.0
        %1301 = vmatprep.subr.mxu0 0.0
        %1302 = vmatpush2.xpose.msra.mxu0 0.0
        %1303 = vmatprep.subr.mxu0 0.0
        %1304 = vmatpush2.xpose.msra.mxu0 0.0
        %1305 = vmatprep.subr.mxu0 0.0
        %1306 = vmatpush2.xpose.msra.mxu0 0.0
        %1307 = vmatprep.subr.mxu0 0.0
        %1308 = vmatpush2.xpose.msra.mxu0 0.0
        %1309 = vmatprep.subr.mxu0 0.0
        %1310 = vmatpush2.xpose.msra.mxu0 0.0
        %1311 = vmatprep.subr.mxu0 0.0
        %1312 = vmatpush2.xpose.msra.mxu0 0.0
        %1313 = vmatprep.mubr.f32.mxu0 0.0
        %1314 = vmatmul.mubr.f32.gmra.mxu0 %v1245
        %v1315 = vpop.f32.mrf.mxu0
        %v1316 = vadd.f32 0.0, %v1315
        %v1317 = vpop.f32.mrf.mxu0
        %1318 = vdwg.mxu0
        %1319 = vrot.lane.b32.xlu0 %v579, 112
        %v1320 = vpop.permute.xlu0 %1319
        %1321 = vrot.lane.b32.xlu0 %v575, 80
        %v1322 = vpop.permute.xlu0 %1321
        %v1323 = vsel %vm583, %v1320, 0
        %v1325 = vsel %vm583, %v1322, 0
        %1327 = vmatprep.subr.mxu0 0.0
        %1328 = vmatpush1.xpose.msra.mxu0 0.0
        %1329 = vmatprep.subr.mxu0 0.0
        %1330 = vmatpush1.xpose.msra.mxu0 0.0
        %1331 = vmatprep.subr.mxu0 0.0
        %1332 = vmatpush1.xpose.msra.mxu0 0.0
        %1333 = vmatprep.subr.mxu0 0.0
        %1334 = vmatpush1.xpose.msra.mxu0 0.0
        %1335 = vmatprep.subr.mxu0 0.0
        %1336 = vmatpush1.xpose.msra.mxu0 0.0
        %1337 = vmatprep.subr.mxu0 0.0
        %1338 = vmatpush1.xpose.msra.mxu0 0.0
        %1339 = vmatprep.subr.mxu0 0.0
        %1340 = vmatpush1.xpose.msra.mxu0 0.0
        %1341 = vmatprep.subr.mxu0 0.0
        %1342 = vmatpush1.xpose.msra.mxu0 0.0
        %1343 = vmatprep.subr.mxu0 0.0
        %1344 = vmatpush1.xpose.msra.mxu0 0.0
        %1345 = vmatprep.subr.mxu0 0.0
        %1346 = vmatpush1.xpose.msra.mxu0 0.0
        %1347 = vmatprep.subr.mxu0 0.0
        %1348 = vmatpush1.xpose.msra.mxu0 0.0
        %1349 = vmatprep.subr.mxu0 0.0
        %1350 = vmatpush1.xpose.msra.mxu0 0.0
        %1351 = vmatprep.subr.mxu0 0.0
        %1352 = vmatpush1.xpose.msra.mxu0 0.0
        %1353 = vmatprep.subr.mxu0 0.0
        %1354 = vmatpush1.xpose.msra.mxu0 0.0
        %1355 = vmatprep.subr.mxu0 0.0
        %1356 = vmatpush1.xpose.msra.mxu0 0.0
        %1357 = vmatprep.subr.mxu0 0.0
        %1358 = vmatpush1.xpose.msra.mxu0 %v1325
        %1359 = vmatprep.subr.mxu0 0.0
        %1360 = vmatpush2.xpose.msra.mxu0 0.0
        %1361 = vmatprep.subr.mxu0 0.0
        %1362 = vmatpush2.xpose.msra.mxu0 0.0
        %1363 = vmatprep.subr.mxu0 0.0
        %1364 = vmatpush2.xpose.msra.mxu0 0.0
        %1365 = vmatprep.subr.mxu0 0.0
        %1366 = vmatpush2.xpose.msra.mxu0 0.0
        %1367 = vmatprep.subr.mxu0 0.0
        %1368 = vmatpush2.xpose.msra.mxu0 0.0
        %1369 = vmatprep.subr.mxu0 0.0
        %1370 = vmatpush2.xpose.msra.mxu0 0.0
        %1371 = vmatprep.subr.mxu0 0.0
        %1372 = vmatpush2.xpose.msra.mxu0 0.0
        %1373 = vmatprep.subr.mxu0 0.0
        %1374 = vmatpush2.xpose.msra.mxu0 0.0
        %1375 = vmatprep.subr.mxu0 0.0
        %1376 = vmatpush2.xpose.msra.mxu0 0.0
        %1377 = vmatprep.subr.mxu0 0.0
        %1378 = vmatpush2.xpose.msra.mxu0 0.0
        %1379 = vmatprep.subr.mxu0 0.0
        %1380 = vmatpush2.xpose.msra.mxu0 0.0
        %1381 = vmatprep.subr.mxu0 0.0
        %1382 = vmatpush2.xpose.msra.mxu0 0.0
        %1383 = vmatprep.subr.mxu0 0.0
        %1384 = vmatpush2.xpose.msra.mxu0 0.0
        %1385 = vmatprep.subr.mxu0 0.0
        %1386 = vmatpush2.xpose.msra.mxu0 0.0
        %1387 = vmatprep.subr.mxu0 0.0
        %1388 = vmatpush2.xpose.msra.mxu0 0.0
        %1389 = vmatprep.subr.mxu0 0.0
        %1390 = vmatpush2.xpose.msra.mxu0 0.0
        %1391 = vmatprep.mubr.f32.mxu0 0.0
        %1392 = vmatmul.mubr.f32.gmra.mxu0 %v1323
        %v1393 = vpop.f32.mrf.mxu0
        %v1394 = vadd.f32 0.0, %v1393
        %v1395 = vpop.f32.mrf.mxu0
        %1396 = vdwg.mxu0
        %v1397 = vsel %vm583, %v1316, -inf
        %1398 = vmax.xlane.f32.xlu0 %v1397
        %v1399 = vpop.xlane.xlu0 %1398
        %v1400 = vsel %vm583, %v1394, -inf
        %1401 = vmax.xlane.f32.xlu0 %v1400
        %v1402 = vpop.xlane.xlu0 %1401
        %v1403 = vsub.f32 %v1316, %v1399
        %v1404 = vsub.f32 %v1394, %v1402
        %v1405 = vmul.f32 %v1403, 1.442695
        %v1406 = vpow.pop %v1405
        %v1407 = vmul.f32 %v1404, 1.442695
        %v1408 = vpow.pop %v1407
        %v1409 = vsel %vm583, %v1406, 0.0
        %1410 = vadd.xlane.f32.xlu0 %v1409
        %v1411 = vpop.xlane.xlu0 %1410
        %v1412 = vsel %vm583, %v1408, 0.0
        %1413 = vadd.xlane.f32.xlu0 %v1412
        %v1414 = vpop.xlane.xlu0 %1413
        %v1415 = vrcp.pop %v1411
        %v1416 = vmul.f32 %v1406, %v1415
        %v1417 = vrcp.pop %v1414
        %v1418 = vmul.f32 %v1408, %v1417
        %1419 = vrot.lane.b32.xlu0 %v570, 48
        %v1420 = vpop.permute.xlu0 %1419
        %v1423 = vsel %vm583, %v1416, 0
        %1425 = vmatprep.subr.mxu0 0.0
        %1426 = vmatpush1.msra.mxu0 0.0
        %1427 = vmatprep.subr.mxu0 0.0
        %1428 = vmatpush1.msra.mxu0 0.0
        %1429 = vmatprep.subr.mxu0 0.0
        %1430 = vmatpush1.msra.mxu0 0.0
        %1431 = vmatprep.subr.mxu0 0.0
        %1432 = vmatpush1.msra.mxu0 0.0
        %1433 = vmatprep.subr.mxu0 0.0
        %1434 = vmatpush1.msra.mxu0 0.0
        %1435 = vmatprep.subr.mxu0 0.0
        %1436 = vmatpush1.msra.mxu0 0.0
        %1437 = vmatprep.subr.mxu0 0.0
        %1438 = vmatpush1.msra.mxu0 0.0
        %1439 = vmatprep.subr.mxu0 0.0
        %1440 = vmatpush1.msra.mxu0 0.0
        %1441 = vmatprep.subr.mxu0 0.0
        %1442 = vmatpush1.msra.mxu0 0.0
        %1443 = vmatprep.subr.mxu0 0.0
        %1444 = vmatpush1.msra.mxu0 0.0
        %1445 = vmatprep.subr.mxu0 0.0
        %1446 = vmatpush1.msra.mxu0 0.0
        %1447 = vmatprep.subr.mxu0 0.0
        %1448 = vmatpush1.msra.mxu0 0.0
        %1449 = vmatprep.subr.mxu0 0.0
        %1450 = vmatpush1.msra.mxu0 0.0
        %1451 = vmatprep.subr.mxu0 0.0
        %1452 = vmatpush1.msra.mxu0 0.0
        %1453 = vmatprep.subr.mxu0 0.0
        %1454 = vmatpush1.msra.mxu0 0.0
        %1455 = vmatprep.subr.mxu0 0.0
        %1456 = vmatpush1.msra.mxu0 %v1420
        %1457 = vmatprep.subr.mxu0 0.0
        %1458 = vmatpush2.msra.mxu0 0.0
        %1459 = vmatprep.subr.mxu0 0.0
        %1460 = vmatpush2.msra.mxu0 0.0
        %1461 = vmatprep.subr.mxu0 0.0
        %1462 = vmatpush2.msra.mxu0 0.0
        %1463 = vmatprep.subr.mxu0 0.0
        %1464 = vmatpush2.msra.mxu0 0.0
        %1465 = vmatprep.subr.mxu0 0.0
        %1466 = vmatpush2.msra.mxu0 0.0
        %1467 = vmatprep.subr.mxu0 0.0
        %1468 = vmatpush2.msra.mxu0 0.0
        %1469 = vmatprep.subr.mxu0 0.0
        %1470 = vmatpush2.msra.mxu0 0.0
        %1471 = vmatprep.subr.mxu0 0.0
        %1472 = vmatpush2.msra.mxu0 0.0
        %1473 = vmatprep.subr.mxu0 0.0
        %1474 = vmatpush2.msra.mxu0 0.0
        %1475 = vmatprep.subr.mxu0 0.0
        %1476 = vmatpush2.msra.mxu0 0.0
        %1477 = vmatprep.subr.mxu0 0.0
        %1478 = vmatpush2.msra.mxu0 0.0
        %1479 = vmatprep.subr.mxu0 0.0
        %1480 = vmatpush2.msra.mxu0 0.0
        %1481 = vmatprep.subr.mxu0 0.0
        %1482 = vmatpush2.msra.mxu0 0.0
        %1483 = vmatprep.subr.mxu0 0.0
        %1484 = vmatpush2.msra.mxu0 0.0
        %1485 = vmatprep.subr.mxu0 0.0
        %1486 = vmatpush2.msra.mxu0 0.0
        %1487 = vmatprep.subr.mxu0 0.0
        %1488 = vmatpush2.msra.mxu0 0.0
        %1489 = vmatprep.mubr.f32.mxu0 0.0
        %1490 = vmatmul.mubr.f32.gmra.mxu0 %v1423
        %v1491 = vpop.f32.mrf.mxu0
        %v1492 = vadd.f32 0.0, %v1491
        %v1493 = vpop.f32.mrf.mxu0
        %1494 = vdwg.mxu0
        %1495 = vrot.lane.b32.xlu0 %v575, 48
        %v1496 = vpop.permute.xlu0 %1495
        %v1499 = vsel %vm583, %v1418, 0
        %1501 = vmatprep.subr.mxu0 0.0
        %1502 = vmatpush1.msra.mxu0 0.0
        %1503 = vmatprep.subr.mxu0 0.0
        %1504 = vmatpush1.msra.mxu0 0.0
        %1505 = vmatprep.subr.mxu0 0.0
        %1506 = vmatpush1.msra.mxu0 0.0
        %1507 = vmatprep.subr.mxu0 0.0
        %1508 = vmatpush1.msra.mxu0 0.0
        %1509 = vmatprep.subr.mxu0 0.0
        %1510 = vmatpush1.msra.mxu0 0.0
        %1511 = vmatprep.subr.mxu0 0.0
        %1512 = vmatpush1.msra.mxu0 0.0
        %1513 = vmatprep.subr.mxu0 0.0
        %1514 = vmatpush1.msra.mxu0 0.0
        %1515 = vmatprep.subr.mxu0 0.0
        %1516 = vmatpush1.msra.mxu0 0.0
        %1517 = vmatprep.subr.mxu0 0.0
        %1518 = vmatpush1.msra.mxu0 0.0
        %1519 = vmatprep.subr.mxu0 0.0
        %1520 = vmatpush1.msra.mxu0 0.0
        %1521 = vmatprep.subr.mxu0 0.0
        %1522 = vmatpush1.msra.mxu0 0.0
        %1523 = vmatprep.subr.mxu0 0.0
        %1524 = vmatpush1.msra.mxu0 0.0
        %1525 = vmatprep.subr.mxu0 0.0
        %1526 = vmatpush1.msra.mxu0 0.0
        %1527 = vmatprep.subr.mxu0 0.0
        %1528 = vmatpush1.msra.mxu0 0.0
        %1529 = vmatprep.subr.mxu0 0.0
        %1530 = vmatpush1.msra.mxu0 0.0
        %1531 = vmatprep.subr.mxu0 0.0
        %1532 = vmatpush1.msra.mxu0 %v1496
        %1533 = vmatprep.subr.mxu0 0.0
        %1534 = vmatpush2.msra.mxu0 0.0
        %1535 = vmatprep.subr.mxu0 0.0
        %1536 = vmatpush2.msra.mxu0 0.0
        %1537 = vmatprep.subr.mxu0 0.0
        %1538 = vmatpush2.msra.mxu0 0.0
        %1539 = vmatprep.subr.mxu0 0.0
        %1540 = vmatpush2.msra.mxu0 0.0
        %1541 = vmatprep.subr.mxu0 0.0
        %1542 = vmatpush2.msra.mxu0 0.0
        %1543 = vmatprep.subr.mxu0 0.0
        %1544 = vmatpush2.msra.mxu0 0.0
        %1545 = vmatprep.subr.mxu0 0.0
        %1546 = vmatpush2.msra.mxu0 0.0
        %1547 = vmatprep.subr.mxu0 0.0
        %1548 = vmatpush2.msra.mxu0 0.0
        %1549 = vmatprep.subr.mxu0 0.0
        %1550 = vmatpush2.msra.mxu0 0.0
        %1551 = vmatprep.subr.mxu0 0.0
        %1552 = vmatpush2.msra.mxu0 0.0
        %1553 = vmatprep.subr.mxu0 0.0
        %1554 = vmatpush2.msra.mxu0 0.0
        %1555 = vmatprep.subr.mxu0 0.0
        %1556 = vmatpush2.msra.mxu0 0.0
        %1557 = vmatprep.subr.mxu0 0.0
        %1558 = vmatpush2.msra.mxu0 0.0
        %1559 = vmatprep.subr.mxu0 0.0
        %1560 = vmatpush2.msra.mxu0 0.0
        %1561 = vmatprep.subr.mxu0 0.0
        %1562 = vmatpush2.msra.mxu0 0.0
        %1563 = vmatprep.subr.mxu0 0.0
        %1564 = vmatpush2.msra.mxu0 0.0
        %1565 = vmatprep.mubr.f32.mxu0 0.0
        %1566 = vmatmul.mubr.f32.gmra.mxu0 %v1499
        %v1567 = vpop.f32.mrf.mxu0
        %v1568 = vadd.f32 0.0, %v1567
        %v1569 = vpop.f32.mrf.mxu0
        %1570 = vdwg.mxu0
        %1571 = vrot.lane.b32.xlu0 %v578, 104
        %v1572 = vpop.permute.xlu0 %1571
        %1573 = vrot.lane.b32.xlu0 %v570, 72
        %v1574 = vpop.permute.xlu0 %1573
        %v1575 = vsel %vm583, %v1572, 0
        %v1577 = vsel %vm583, %v1574, 0
        %1579 = vmatprep.subr.mxu0 0.0
        %1580 = vmatpush1.xpose.msra.mxu0 0.0
        %1581 = vmatprep.subr.mxu0 0.0
        %1582 = vmatpush1.xpose.msra.mxu0 0.0
        %1583 = vmatprep.subr.mxu0 0.0
        %1584 = vmatpush1.xpose.msra.mxu0 0.0
        %1585 = vmatprep.subr.mxu0 0.0
        %1586 = vmatpush1.xpose.msra.mxu0 0.0
        %1587 = vmatprep.subr.mxu0 0.0
        %1588 = vmatpush1.xpose.msra.mxu0 0.0
        %1589 = vmatprep.subr.mxu0 0.0
        %1590 = vmatpush1.xpose.msra.mxu0 0.0
        %1591 = vmatprep.subr.mxu0 0.0
        %1592 = vmatpush1.xpose.msra.mxu0 0.0
        %1593 = vmatprep.subr.mxu0 0.0
        %1594 = vmatpush1.xpose.msra.mxu0 0.0
        %1595 = vmatprep.subr.mxu0 0.0
        %1596 = vmatpush1.xpose.msra.mxu0 0.0
        %1597 = vmatprep.subr.mxu0 0.0
        %1598 = vmatpush1.xpose.msra.mxu0 0.0
        %1599 = vmatprep.subr.mxu0 0.0
        %1600 = vmatpush1.xpose.msra.mxu0 0.0
        %1601 = vmatprep.subr.mxu0 0.0
        %1602 = vmatpush1.xpose.msra.mxu0 0.0
        %1603 = vmatprep.subr.mxu0 0.0
        %1604 = vmatpush1.xpose.msra.mxu0 0.0
        %1605 = vmatprep.subr.mxu0 0.0
        %1606 = vmatpush1.xpose.msra.mxu0 0.0
        %1607 = vmatprep.subr.mxu0 0.0
        %1608 = vmatpush1.xpose.msra.mxu0 0.0
        %1609 = vmatprep.subr.mxu0 0.0
        %1610 = vmatpush1.xpose.msra.mxu0 %v1577
        %1611 = vmatprep.subr.mxu0 0.0
        %1612 = vmatpush2.xpose.msra.mxu0 0.0
        %1613 = vmatprep.subr.mxu0 0.0
        %1614 = vmatpush2.xpose.msra.mxu0 0.0
        %1615 = vmatprep.subr.mxu0 0.0
        %1616 = vmatpush2.xpose.msra.mxu0 0.0
        %1617 = vmatprep.subr.mxu0 0.0
        %1618 = vmatpush2.xpose.msra.mxu0 0.0
        %1619 = vmatprep.subr.mxu0 0.0
        %1620 = vmatpush2.xpose.msra.mxu0 0.0
        %1621 = vmatprep.subr.mxu0 0.0
        %1622 = vmatpush2.xpose.msra.mxu0 0.0
        %1623 = vmatprep.subr.mxu0 0.0
        %1624 = vmatpush2.xpose.msra.mxu0 0.0
        %1625 = vmatprep.subr.mxu0 0.0
        %1626 = vmatpush2.xpose.msra.mxu0 0.0
        %1627 = vmatprep.subr.mxu0 0.0
        %1628 = vmatpush2.xpose.msra.mxu0 0.0
        %1629 = vmatprep.subr.mxu0 0.0
        %1630 = vmatpush2.xpose.msra.mxu0 0.0
        %1631 = vmatprep.subr.mxu0 0.0
        %1632 = vmatpush2.xpose.msra.mxu0 0.0
        %1633 = vmatprep.subr.mxu0 0.0
        %1634 = vmatpush2.xpose.msra.mxu0 0.0
        %1635 = vmatprep.subr.mxu0 0.0
        %1636 = vmatpush2.xpose.msra.mxu0 0.0
        %1637 = vmatprep.subr.mxu0 0.0
        %1638 = vmatpush2.xpose.msra.mxu0 0.0
        %1639 = vmatprep.subr.mxu0 0.0
        %1640 = vmatpush2.xpose.msra.mxu0 0.0
        %1641 = vmatprep.subr.mxu0 0.0
        %1642 = vmatpush2.xpose.msra.mxu0 0.0
        %1643 = vmatprep.mubr.f32.mxu0 0.0
        %1644 = vmatmul.mubr.f32.gmra.mxu0 %v1575
        %v1645 = vpop.f32.mrf.mxu0
        %v1646 = vadd.f32 0.0, %v1645
        %v1647 = vpop.f32.mrf.mxu0
        %1648 = vdwg.mxu0
        %1649 = vrot.lane.b32.xlu0 %v579, 104
        %v1650 = vpop.permute.xlu0 %1649
        %1651 = vrot.lane.b32.xlu0 %v575, 72
        %v1652 = vpop.permute.xlu0 %1651
        %v1653 = vsel %vm583, %v1650, 0
        %v1655 = vsel %vm583, %v1652, 0
        %1657 = vmatprep.subr.mxu0 0.0
        %1658 = vmatpush1.xpose.msra.mxu0 0.0
        %1659 = vmatprep.subr.mxu0 0.0
        %1660 = vmatpush1.xpose.msra.mxu0 0.0
        %1661 = vmatprep.subr.mxu0 0.0
        %1662 = vmatpush1.xpose.msra.mxu0 0.0
        %1663 = vmatprep.subr.mxu0 0.0
        %1664 = vmatpush1.xpose.msra.mxu0 0.0
        %1665 = vmatprep.subr.mxu0 0.0
        %1666 = vmatpush1.xpose.msra.mxu0 0.0
        %1667 = vmatprep.subr.mxu0 0.0
        %1668 = vmatpush1.xpose.msra.mxu0 0.0
        %1669 = vmatprep.subr.mxu0 0.0
        %1670 = vmatpush1.xpose.msra.mxu0 0.0
        %1671 = vmatprep.subr.mxu0 0.0
        %1672 = vmatpush1.xpose.msra.mxu0 0.0
        %1673 = vmatprep.subr.mxu0 0.0
        %1674 = vmatpush1.xpose.msra.mxu0 0.0
        %1675 = vmatprep.subr.mxu0 0.0
        %1676 = vmatpush1.xpose.msra.mxu0 0.0
        %1677 = vmatprep.subr.mxu0 0.0
        %1678 = vmatpush1.xpose.msra.mxu0 0.0
        %1679 = vmatprep.subr.mxu0 0.0
        %1680 = vmatpush1.xpose.msra.mxu0 0.0
        %1681 = vmatprep.subr.mxu0 0.0
        %1682 = vmatpush1.xpose.msra.mxu0 0.0
        %1683 = vmatprep.subr.mxu0 0.0
        %1684 = vmatpush1.xpose.msra.mxu0 0.0
        %1685 = vmatprep.subr.mxu0 0.0
        %1686 = vmatpush1.xpose.msra.mxu0 0.0
        %1687 = vmatprep.subr.mxu0 0.0
        %1688 = vmatpush1.xpose.msra.mxu0 %v1655
        %1689 = vmatprep.subr.mxu0 0.0
        %1690 = vmatpush2.xpose.msra.mxu0 0.0
        %1691 = vmatprep.subr.mxu0 0.0
        %1692 = vmatpush2.xpose.msra.mxu0 0.0
        %1693 = vmatprep.subr.mxu0 0.0
        %1694 = vmatpush2.xpose.msra.mxu0 0.0
        %1695 = vmatprep.subr.mxu0 0.0
        %1696 = vmatpush2.xpose.msra.mxu0 0.0
        %1697 = vmatprep.subr.mxu0 0.0
        %1698 = vmatpush2.xpose.msra.mxu0 0.0
        %1699 = vmatprep.subr.mxu0 0.0
        %1700 = vmatpush2.xpose.msra.mxu0 0.0
        %1701 = vmatprep.subr.mxu0 0.0
        %1702 = vmatpush2.xpose.msra.mxu0 0.0
        %1703 = vmatprep.subr.mxu0 0.0
        %1704 = vmatpush2.xpose.msra.mxu0 0.0
        %1705 = vmatprep.subr.mxu0 0.0
        %1706 = vmatpush2.xpose.msra.mxu0 0.0
        %1707 = vmatprep.subr.mxu0 0.0
        %1708 = vmatpush2.xpose.msra.mxu0 0.0
        %1709 = vmatprep.subr.mxu0 0.0
        %1710 = vmatpush2.xpose.msra.mxu0 0.0
        %1711 = vmatprep.subr.mxu0 0.0
        %1712 = vmatpush2.xpose.msra.mxu0 0.0
        %1713 = vmatprep.subr.mxu0 0.0
        %1714 = vmatpush2.xpose.msra.mxu0 0.0
        %1715 = vmatprep.subr.mxu0 0.0
        %1716 = vmatpush2.xpose.msra.mxu0 0.0
        %1717 = vmatprep.subr.mxu0 0.0
        %1718 = vmatpush2.xpose.msra.mxu0 0.0
        %1719 = vmatprep.subr.mxu0 0.0
        %1720 = vmatpush2.xpose.msra.mxu0 0.0
        %1721 = vmatprep.mubr.f32.mxu0 0.0
        %1722 = vmatmul.mubr.f32.gmra.mxu0 %v1653
        %v1723 = vpop.f32.mrf.mxu0
        %v1724 = vadd.f32 0.0, %v1723
        %v1725 = vpop.f32.mrf.mxu0
        %1726 = vdwg.mxu0
        %v1727 = vsel %vm583, %v1646, -inf
        %1728 = vmax.xlane.f32.xlu0 %v1727
        %v1729 = vpop.xlane.xlu0 %1728
        %v1730 = vsel %vm583, %v1724, -inf
        %1731 = vmax.xlane.f32.xlu0 %v1730
        %v1732 = vpop.xlane.xlu0 %1731
        %v1733 = vsub.f32 %v1646, %v1729
        %v1734 = vsub.f32 %v1724, %v1732
        %v1735 = vmul.f32 %v1733, 1.442695
        %v1736 = vpow.pop %v1735
        %v1737 = vmul.f32 %v1734, 1.442695
        %v1738 = vpow.pop %v1737
        %v1739 = vsel %vm583, %v1736, 0.0
        %1740 = vadd.xlane.f32.xlu0 %v1739
        %v1741 = vpop.xlane.xlu0 %1740
        %v1742 = vsel %vm583, %v1738, 0.0
        %1743 = vadd.xlane.f32.xlu0 %v1742
        %v1744 = vpop.xlane.xlu0 %1743
        %v1745 = vrcp.pop %v1741
        %v1746 = vmul.f32 %v1736, %v1745
        %v1747 = vrcp.pop %v1744
        %v1748 = vmul.f32 %v1738, %v1747
        %1749 = vrot.lane.b32.xlu0 %v570, 40
        %v1750 = vpop.permute.xlu0 %1749
        %v1753 = vsel %vm583, %v1746, 0
        %1755 = vmatprep.subr.mxu0 0.0
        %1756 = vmatpush1.msra.mxu0 0.0
        %1757 = vmatprep.subr.mxu0 0.0
        %1758 = vmatpush1.msra.mxu0 0.0
        %1759 = vmatprep.subr.mxu0 0.0
        %1760 = vmatpush1.msra.mxu0 0.0
        %1761 = vmatprep.subr.mxu0 0.0
        %1762 = vmatpush1.msra.mxu0 0.0
        %1763 = vmatprep.subr.mxu0 0.0
        %1764 = vmatpush1.msra.mxu0 0.0
        %1765 = vmatprep.subr.mxu0 0.0
        %1766 = vmatpush1.msra.mxu0 0.0
        %1767 = vmatprep.subr.mxu0 0.0
        %1768 = vmatpush1.msra.mxu0 0.0
        %1769 = vmatprep.subr.mxu0 0.0
        %1770 = vmatpush1.msra.mxu0 0.0
        %1771 = vmatprep.subr.mxu0 0.0
        %1772 = vmatpush1.msra.mxu0 0.0
        %1773 = vmatprep.subr.mxu0 0.0
        %1774 = vmatpush1.msra.mxu0 0.0
        %1775 = vmatprep.subr.mxu0 0.0
        %1776 = vmatpush1.msra.mxu0 0.0
        %1777 = vmatprep.subr.mxu0 0.0
        %1778 = vmatpush1.msra.mxu0 0.0
        %1779 = vmatprep.subr.mxu0 0.0
        %1780 = vmatpush1.msra.mxu0 0.0
        %1781 = vmatprep.subr.mxu0 0.0
        %1782 = vmatpush1.msra.mxu0 0.0
        %1783 = vmatprep.subr.mxu0 0.0
        %1784 = vmatpush1.msra.mxu0 0.0
        %1785 = vmatprep.subr.mxu0 0.0
        %1786 = vmatpush1.msra.mxu0 %v1750
        %1787 = vmatprep.subr.mxu0 0.0
        %1788 = vmatpush2.msra.mxu0 0.0
        %1789 = vmatprep.subr.mxu0 0.0
        %1790 = vmatpush2.msra.mxu0 0.0
        %1791 = vmatprep.subr.mxu0 0.0
        %1792 = vmatpush2.msra.mxu0 0.0
        %1793 = vmatprep.subr.mxu0 0.0
        %1794 = vmatpush2.msra.mxu0 0.0
        %1795 = vmatprep.subr.mxu0 0.0
        %1796 = vmatpush2.msra.mxu0 0.0
        %1797 = vmatprep.subr.mxu0 0.0
        %1798 = vmatpush2.msra.mxu0 0.0
        %1799 = vmatprep.subr.mxu0 0.0
        %1800 = vmatpush2.msra.mxu0 0.0
        %1801 = vmatprep.subr.mxu0 0.0
        %1802 = vmatpush2.msra.mxu0 0.0
        %1803 = vmatprep.subr.mxu0 0.0
        %1804 = vmatpush2.msra.mxu0 0.0
        %1805 = vmatprep.subr.mxu0 0.0
        %1806 = vmatpush2.msra.mxu0 0.0
        %1807 = vmatprep.subr.mxu0 0.0
        %1808 = vmatpush2.msra.mxu0 0.0
        %1809 = vmatprep.subr.mxu0 0.0
        %1810 = vmatpush2.msra.mxu0 0.0
        %1811 = vmatprep.subr.mxu0 0.0
        %1812 = vmatpush2.msra.mxu0 0.0
        %1813 = vmatprep.subr.mxu0 0.0
        %1814 = vmatpush2.msra.mxu0 0.0
        %1815 = vmatprep.subr.mxu0 0.0
        %1816 = vmatpush2.msra.mxu0 0.0
        %1817 = vmatprep.subr.mxu0 0.0
        %1818 = vmatpush2.msra.mxu0 0.0
        %1819 = vmatprep.mubr.f32.mxu0 0.0
        %1820 = vmatmul.mubr.f32.gmra.mxu0 %v1753
        %v1821 = vpop.f32.mrf.mxu0
        %v1822 = vadd.f32 0.0, %v1821
        %v1823 = vpop.f32.mrf.mxu0
        %1824 = vdwg.mxu0
        %1825 = vrot.lane.b32.xlu0 %v575, 40
        %v1826 = vpop.permute.xlu0 %1825
        %v1829 = vsel %vm583, %v1748, 0
        %1831 = vmatprep.subr.mxu0 0.0
        %1832 = vmatpush1.msra.mxu0 0.0
        %1833 = vmatprep.subr.mxu0 0.0
        %1834 = vmatpush1.msra.mxu0 0.0
        %1835 = vmatprep.subr.mxu0 0.0
        %1836 = vmatpush1.msra.mxu0 0.0
        %1837 = vmatprep.subr.mxu0 0.0
        %1838 = vmatpush1.msra.mxu0 0.0
        %1839 = vmatprep.subr.mxu0 0.0
        %1840 = vmatpush1.msra.mxu0 0.0
        %1841 = vmatprep.subr.mxu0 0.0
        %1842 = vmatpush1.msra.mxu0 0.0
        %1843 = vmatprep.subr.mxu0 0.0
        %1844 = vmatpush1.msra.mxu0 0.0
        %1845 = vmatprep.subr.mxu0 0.0
        %1846 = vmatpush1.msra.mxu0 0.0
        %1847 = vmatprep.subr.mxu0 0.0
        %1848 = vmatpush1.msra.mxu0 0.0
        %1849 = vmatprep.subr.mxu0 0.0
        %1850 = vmatpush1.msra.mxu0 0.0
        %1851 = vmatprep.subr.mxu0 0.0
        %1852 = vmatpush1.msra.mxu0 0.0
        %1853 = vmatprep.subr.mxu0 0.0
        %1854 = vmatpush1.msra.mxu0 0.0
        %1855 = vmatprep.subr.mxu0 0.0
        %1856 = vmatpush1.msra.mxu0 0.0
        %1857 = vmatprep.subr.mxu0 0.0
        %1858 = vmatpush1.msra.mxu0 0.0
        %1859 = vmatprep.subr.mxu0 0.0
        %1860 = vmatpush1.msra.mxu0 0.0
        %1861 = vmatprep.subr.mxu0 0.0
        %1862 = vmatpush1.msra.mxu0 %v1826
        %1863 = vmatprep.subr.mxu0 0.0
        %1864 = vmatpush2.msra.mxu0 0.0
        %1865 = vmatprep.subr.mxu0 0.0
        %1866 = vmatpush2.msra.mxu0 0.0
        %1867 = vmatprep.subr.mxu0 0.0
        %1868 = vmatpush2.msra.mxu0 0.0
        %1869 = vmatprep.subr.mxu0 0.0
        %1870 = vmatpush2.msra.mxu0 0.0
        %1871 = vmatprep.subr.mxu0 0.0
        %1872 = vmatpush2.msra.mxu0 0.0
        %1873 = vmatprep.subr.mxu0 0.0
        %1874 = vmatpush2.msra.mxu0 0.0
        %1875 = vmatprep.subr.mxu0 0.0
        %1876 = vmatpush2.msra.mxu0 0.0
        %1877 = vmatprep.subr.mxu0 0.0
        %1878 = vmatpush2.msra.mxu0 0.0
        %1879 = vmatprep.subr.mxu0 0.0
        %1880 = vmatpush2.msra.mxu0 0.0
        %1881 = vmatprep.subr.mxu0 0.0
        %1882 = vmatpush2.msra.mxu0 0.0
        %1883 = vmatprep.subr.mxu0 0.0
        %1884 = vmatpush2.msra.mxu0 0.0
        %1885 = vmatprep.subr.mxu0 0.0
        %1886 = vmatpush2.msra.mxu0 0.0
        %1887 = vmatprep.subr.mxu0 0.0
        %1888 = vmatpush2.msra.mxu0 0.0
        %1889 = vmatprep.subr.mxu0 0.0
        %1890 = vmatpush2.msra.mxu0 0.0
        %1891 = vmatprep.subr.mxu0 0.0
        %1892 = vmatpush2.msra.mxu0 0.0
        %1893 = vmatprep.subr.mxu0 0.0
        %1894 = vmatpush2.msra.mxu0 0.0
        %1895 = vmatprep.mubr.f32.mxu0 0.0
        %1896 = vmatmul.mubr.f32.gmra.mxu0 %v1829
        %v1897 = vpop.f32.mrf.mxu0
        %v1898 = vadd.f32 0.0, %v1897
        %v1899 = vpop.f32.mrf.mxu0
        %1900 = vdwg.mxu0
        %1903 = vrot.lane.b32.xlu0 %v1162, 8
        %v1904 = vpop.permute.xlu0 %1903
        %1905 = vrot.lane.b32.xlu0 %v1238, 8
        %v1906 = vpop.permute.xlu0 %1905
        %1911 = vrot.lane.b32.xlu0 %v1492, 16
        %v1912 = vpop.permute.xlu0 %1911
        %1913 = vrot.lane.b32.xlu0 %v1568, 16
        %v1914 = vpop.permute.xlu0 %1913
        %1919 = vrot.lane.b32.xlu0 %v1822, 24
        %v1920 = vpop.permute.xlu0 %1919
        %1921 = vrot.lane.b32.xlu0 %v1898, 24
        %v1922 = vpop.permute.xlu0 %1921
        %v1925 = vsel %vm583, %v832, %v1904
        %v1926 = vsel %vm583, %v908, %v1906
        %vm1927 = vcmask 130048
        %v1928 = vsel %vm1927, %v1925, %v1912
        %v1929 = vsel %vm1927, %v1926, %v1914
        %vm1930 = vcmask 195584
        %v1931 = vsel %vm1930, %v1928, %v1920
        %v1932 = vsel %vm1930, %v1929, %v1922
        %v1934 = vsel %vm453, %v1931, 0
        %v1937 = vsel %vm453, %v1932, 0
        %1939 = vmatprep.subr.mxu0 0.0
        %1940 = vmatpush1.msra.mxu0 0.0
        %1941 = vmatprep.subr.mxu0 0.0
        %1942 = vmatpush1.msra.mxu0 0.0
        %1943 = vmatprep.subr.mxu0 0.0
        %1944 = vmatpush1.msra.mxu0 0.0
        %1945 = vmatprep.subr.mxu0 0.0
        %1946 = vmatpush1.msra.mxu0 0.0
        %1947 = vmatprep.subr.mxu0 0.0
        %1948 = vmatpush1.msra.mxu0 0.0
        %1949 = vmatprep.subr.mxu0 0.0
        %1950 = vmatpush1.msra.mxu0 0.0
        %1951 = vmatprep.subr.mxu0 0.0
        %1952 = vmatpush1.msra.mxu0 0.0
        %1953 = vmatprep.subr.mxu0 0.0
        %1954 = vmatpush1.msra.mxu0 0.0
        %1955 = vmatprep.subr.mxu0 0.0
        %1956 = vmatpush1.msra.mxu0 0.0
        %1957 = vmatprep.subr.mxu0 0.0
        %1958 = vmatpush1.msra.mxu0 0.0
        %1959 = vmatprep.subr.mxu0 0.0
        %1960 = vmatpush1.msra.mxu0 0.0
        %1961 = vmatprep.subr.mxu0 0.0
        %1962 = vmatpush1.msra.mxu0 0.0
        %1963 = vmatprep.subr.mxu0 0.0
        %1964 = vmatpush1.msra.mxu0 %v447
        %1965 = vmatprep.subr.mxu0 0.0
        %1966 = vmatpush1.msra.mxu0 %v446
        %1967 = vmatprep.subr.mxu0 0.0
        %1968 = vmatpush1.msra.mxu0 %v445
        %1969 = vmatprep.subr.mxu0 0.0
        %1970 = vmatpush1.msra.mxu0 %v444
        %1971 = vmatprep.subr.mxu0 0.0
        %1972 = vmatpush2.msra.mxu0 0.0
        %1973 = vmatprep.subr.mxu0 0.0
        %1974 = vmatpush2.msra.mxu0 0.0
        %1975 = vmatprep.subr.mxu0 0.0
        %1976 = vmatpush2.msra.mxu0 0.0
        %1977 = vmatprep.subr.mxu0 0.0
        %1978 = vmatpush2.msra.mxu0 0.0
        %1979 = vmatprep.subr.mxu0 0.0
        %1980 = vmatpush2.msra.mxu0 0.0
        %1981 = vmatprep.subr.mxu0 0.0
        %1982 = vmatpush2.msra.mxu0 0.0
        %1983 = vmatprep.subr.mxu0 0.0
        %1984 = vmatpush2.msra.mxu0 0.0
        %1985 = vmatprep.subr.mxu0 0.0
        %1986 = vmatpush2.msra.mxu0 0.0
        %1987 = vmatprep.subr.mxu0 0.0
        %1988 = vmatpush2.msra.mxu0 0.0
        %1989 = vmatprep.subr.mxu0 0.0
        %1990 = vmatpush2.msra.mxu0 0.0
        %1991 = vmatprep.subr.mxu0 0.0
        %1992 = vmatpush2.msra.mxu0 0.0
        %1993 = vmatprep.subr.mxu0 0.0
        %1994 = vmatpush2.msra.mxu0 0.0
        %1995 = vmatprep.subr.mxu0 0.0
        %1996 = vmatpush2.msra.mxu0 0.0
        %1997 = vmatprep.subr.mxu0 0.0
        %1998 = vmatpush2.msra.mxu0 0.0
        %1999 = vmatprep.subr.mxu0 0.0
        %2000 = vmatpush2.msra.mxu0 0.0
        %2001 = vmatprep.subr.mxu0 0.0
        %2002 = vmatpush2.msra.mxu0 0.0
        %2003 = vmatprep.mubr.f32.mxu0 0.0
        %2004 = vmatmul.mubr.f32.gmra.mxu0 %v1934
        %v2005 = vpop.f32.mrf.mxu0
        %v2006 = vadd.f32 0.0, %v2005
        %v2007 = vpop.f32.mrf.mxu0
        %2008 = vmatprep.mubr.f32.mxu0 0.0
        %2009 = vmatmul.mubr.f32.gmra.mxu0 %v1937
        %v2010 = vpop.f32.mrf.mxu0
        %v2011 = vadd.f32 0.0, %v2010
        %v2012 = vpop.f32.mrf.mxu0
        %2013 = vdwg.mxu0
        %v2014 = vadd.f32 %v2006, %v436
        %v2015 = vadd.f32 %v2011, %v437
        %v2016 = vsel %vm453, %v2014, 0.0
        %2017 = vadd.xlane.f32.xlu0 %v2016
        %v2018 = vpop.xlane.xlu0 %2017
        %v2019 = vsel %vm453, %v2015, 0.0
        %2020 = vadd.xlane.f32.xlu0 %v2019
        %v2021 = vpop.xlane.xlu0 %2020
        %v2022 = vmul.f32 %v2018, %v460
        %v2023 = vmul.f32 %v2021, %v460
        %v2024 = vsub.f32 %v2014, %v2022
        %v2025 = vsub.f32 %v2015, %v2023
        %v2026 = vmul.f32 %v2024, %v2024
        %v2027 = vmul.f32 %v2025, %v2025
        %v2028 = vsel %vm453, %v2026, 0.0
        %2029 = vadd.xlane.f32.xlu0 %v2028
        %v2030 = vpop.xlane.xlu0 %2029
        %v2031 = vsel %vm453, %v2027, 0.0
        %2032 = vadd.xlane.f32.xlu0 %v2031
        %v2033 = vpop.xlane.xlu0 %2032
        %v2034 = vmul.f32 %v2030, %v460
        %v2035 = vmul.f32 %v2033, %v460
        %v2036 = vadd.f32 %v2034, 1e-05
        %v2037 = vadd.f32 %v2035, 1e-05
        %v2038 = vrsqrt.pop %v2036
        %v2039 = vrsqrt.pop %v2037
        %v2040 = vmul.f32 %v2024, %v2038
        %v2041 = vmul.f32 %v2025, %v2039
        %v2042 = vmul.f32 %v2040, %v485
        %v2043 = vmul.f32 %v2041, %v485
        %v2044 = vadd.f32 %v2042, %v493
        %v2045 = vadd.f32 %v2043, %v493
        %v2047 = vsel %vm453, %v2044, 0
        %v2050 = vsel %vm453, %v2045, 0
        %2052 = vmatprep.subr.mxu0 0.0
        %2053 = vmatpush1.msra.mxu0 0.0
        %2054 = vmatprep.subr.mxu0 0.0
        %2055 = vmatpush1.msra.mxu0 0.0
        %2056 = vmatprep.subr.mxu0 0.0
        %2057 = vmatpush1.msra.mxu0 0.0
        %2058 = vmatprep.subr.mxu0 0.0
        %2059 = vmatpush1.msra.mxu0 0.0
        %2060 = vmatprep.subr.mxu0 0.0
        %2061 = vmatpush1.msra.mxu0 0.0
        %2062 = vmatprep.subr.mxu0 0.0
        %2063 = vmatpush1.msra.mxu0 0.0
        %2064 = vmatprep.subr.mxu0 0.0
        %2065 = vmatpush1.msra.mxu0 0.0
        %2066 = vmatprep.subr.mxu0 0.0
        %2067 = vmatpush1.msra.mxu0 0.0
        %2068 = vmatprep.subr.mxu0 0.0
        %2069 = vmatpush1.msra.mxu0 0.0
        %2070 = vmatprep.subr.mxu0 0.0
        %2071 = vmatpush1.msra.mxu0 0.0
        %2072 = vmatprep.subr.mxu0 0.0
        %2073 = vmatpush1.msra.mxu0 0.0
        %2074 = vmatprep.subr.mxu0 0.0
        %2075 = vmatpush1.msra.mxu0 0.0
        %2076 = vmatprep.subr.mxu0 0.0
        %2077 = vmatpush1.msra.mxu0 %v443
        %2078 = vmatprep.subr.mxu0 0.0
        %2079 = vmatpush1.msra.mxu0 %v442
        %2080 = vmatprep.subr.mxu0 0.0
        %2081 = vmatpush1.msra.mxu0 %v441
        %2082 = vmatprep.subr.mxu0 0.0
        %2083 = vmatpush1.msra.mxu0 %v440
        %2084 = vmatprep.subr.mxu0 0.0
        %2085 = vmatpush2.msra.mxu0 0.0
        %2086 = vmatprep.subr.mxu0 0.0
        %2087 = vmatpush2.msra.mxu0 0.0
        %2088 = vmatprep.subr.mxu0 0.0
        %2089 = vmatpush2.msra.mxu0 0.0
        %2090 = vmatprep.subr.mxu0 0.0
        %2091 = vmatpush2.msra.mxu0 0.0
        %2092 = vmatprep.subr.mxu0 0.0
        %2093 = vmatpush2.msra.mxu0 0.0
        %2094 = vmatprep.subr.mxu0 0.0
        %2095 = vmatpush2.msra.mxu0 0.0
        %2096 = vmatprep.subr.mxu0 0.0
        %2097 = vmatpush2.msra.mxu0 0.0
        %2098 = vmatprep.subr.mxu0 0.0
        %2099 = vmatpush2.msra.mxu0 0.0
        %2100 = vmatprep.subr.mxu0 0.0
        %2101 = vmatpush2.msra.mxu0 0.0
        %2102 = vmatprep.subr.mxu0 0.0
        %2103 = vmatpush2.msra.mxu0 0.0
        %2104 = vmatprep.subr.mxu0 0.0
        %2105 = vmatpush2.msra.mxu0 0.0
        %2106 = vmatprep.subr.mxu0 0.0
        %2107 = vmatpush2.msra.mxu0 0.0
        %2108 = vmatprep.subr.mxu0 0.0
        %2109 = vmatpush2.msra.mxu0 0.0
        %2110 = vmatprep.subr.mxu0 0.0
        %2111 = vmatpush2.msra.mxu0 0.0
        %2112 = vmatprep.subr.mxu0 0.0
        %2113 = vmatpush2.msra.mxu0 0.0
        %2114 = vmatprep.subr.mxu0 0.0
        %2115 = vmatpush2.msra.mxu0 0.0
        %2116 = vmatprep.mubr.f32.mxu0 0.0
        %2117 = vmatmul.mubr.f32.gmra.mxu0 %v2047
        %v2118 = vpop.f32.mrf.mxu0
        %v2119 = vadd.f32 0.0, %v2118
        %v2120 = vpop.f32.mrf.mxu0
        %2121 = vmatprep.mubr.f32.mxu0 0.0
        %2122 = vmatmul.mubr.f32.gmra.mxu0 %v2050
        %v2123 = vpop.f32.mrf.mxu0
        %v2124 = vadd.f32 0.0, %v2123
        %v2125 = vpop.f32.mrf.mxu0
        %2126 = vdwg.mxu0
        %v2127 = vmul.f32 %v2119, 0.35355338
        %v2128 = vmul.f32 %v2124, 0.35355338
        %2130 = vrot.lane.b32.xlu0 %v2119, 96
        %v2131 = vpop.permute.xlu0 %2130
        %v2133 = vsel %vm583, %v2127, 0
        %v2135 = vsel %vm583, %v2131, 0
        %2137 = vmatprep.subr.mxu0 0.0
        %2138 = vmatpush1.xpose.msra.mxu0 0.0
        %2139 = vmatprep.subr.mxu0 0.0
        %2140 = vmatpush1.xpose.msra.mxu0 0.0
        %2141 = vmatprep.subr.mxu0 0.0
        %2142 = vmatpush1.xpose.msra.mxu0 0.0
        %2143 = vmatprep.subr.mxu0 0.0
        %2144 = vmatpush1.xpose.msra.mxu0 0.0
        %2145 = vmatprep.subr.mxu0 0.0
        %2146 = vmatpush1.xpose.msra.mxu0 0.0
        %2147 = vmatprep.subr.mxu0 0.0
        %2148 = vmatpush1.xpose.msra.mxu0 0.0
        %2149 = vmatprep.subr.mxu0 0.0
        %2150 = vmatpush1.xpose.msra.mxu0 0.0
        %2151 = vmatprep.subr.mxu0 0.0
        %2152 = vmatpush1.xpose.msra.mxu0 0.0
        %2153 = vmatprep.subr.mxu0 0.0
        %2154 = vmatpush1.xpose.msra.mxu0 0.0
        %2155 = vmatprep.subr.mxu0 0.0
        %2156 = vmatpush1.xpose.msra.mxu0 0.0
        %2157 = vmatprep.subr.mxu0 0.0
        %2158 = vmatpush1.xpose.msra.mxu0 0.0
        %2159 = vmatprep.subr.mxu0 0.0
        %2160 = vmatpush1.xpose.msra.mxu0 0.0
        %2161 = vmatprep.subr.mxu0 0.0
        %2162 = vmatpush1.xpose.msra.mxu0 0.0
        %2163 = vmatprep.subr.mxu0 0.0
        %2164 = vmatpush1.xpose.msra.mxu0 0.0
        %2165 = vmatprep.subr.mxu0 0.0
        %2166 = vmatpush1.xpose.msra.mxu0 0.0
        %2167 = vmatprep.subr.mxu0 0.0
        %2168 = vmatpush1.xpose.msra.mxu0 %v2135
        %2169 = vmatprep.subr.mxu0 0.0
        %2170 = vmatpush2.xpose.msra.mxu0 0.0
        %2171 = vmatprep.subr.mxu0 0.0
        %2172 = vmatpush2.xpose.msra.mxu0 0.0
        %2173 = vmatprep.subr.mxu0 0.0
        %2174 = vmatpush2.xpose.msra.mxu0 0.0
        %2175 = vmatprep.subr.mxu0 0.0
        %2176 = vmatpush2.xpose.msra.mxu0 0.0
        %2177 = vmatprep.subr.mxu0 0.0
        %2178 = vmatpush2.xpose.msra.mxu0 0.0
        %2179 = vmatprep.subr.mxu0 0.0
        %2180 = vmatpush2.xpose.msra.mxu0 0.0
        %2181 = vmatprep.subr.mxu0 0.0
        %2182 = vmatpush2.xpose.msra.mxu0 0.0
        %2183 = vmatprep.subr.mxu0 0.0
        %2184 = vmatpush2.xpose.msra.mxu0 0.0
        %2185 = vmatprep.subr.mxu0 0.0
        %2186 = vmatpush2.xpose.msra.mxu0 0.0
        %2187 = vmatprep.subr.mxu0 0.0
        %2188 = vmatpush2.xpose.msra.mxu0 0.0
        %2189 = vmatprep.subr.mxu0 0.0
        %2190 = vmatpush2.xpose.msra.mxu0 0.0
        %2191 = vmatprep.subr.mxu0 0.0
        %2192 = vmatpush2.xpose.msra.mxu0 0.0
        %2193 = vmatprep.subr.mxu0 0.0
        %2194 = vmatpush2.xpose.msra.mxu0 0.0
        %2195 = vmatprep.subr.mxu0 0.0
        %2196 = vmatpush2.xpose.msra.mxu0 0.0
        %2197 = vmatprep.subr.mxu0 0.0
        %2198 = vmatpush2.xpose.msra.mxu0 0.0
        %2199 = vmatprep.subr.mxu0 0.0
        %2200 = vmatpush2.xpose.msra.mxu0 0.0
        %2201 = vmatprep.mubr.f32.mxu0 0.0
        %2202 = vmatmul.mubr.f32.gmra.mxu0 %v2133
        %v2203 = vpop.f32.mrf.mxu0
        %v2204 = vadd.f32 0.0, %v2203
        %v2205 = vpop.f32.mrf.mxu0
        %2206 = vdwg.mxu0
        %2208 = vrot.lane.b32.xlu0 %v2124, 96
        %v2209 = vpop.permute.xlu0 %2208
        %v2211 = vsel %vm583, %v2128, 0
        %v2213 = vsel %vm583, %v2209, 0
        %2215 = vmatprep.subr.mxu0 0.0
        %2216 = vmatpush1.xpose.msra.mxu0 0.0
        %2217 = vmatprep.subr.mxu0 0.0
        %2218 = vmatpush1.xpose.msra.mxu0 0.0
        %2219 = vmatprep.subr.mxu0 0.0
        %2220 = vmatpush1.xpose.msra.mxu0 0.0
        %2221 = vmatprep.subr.mxu0 0.0
        %2222 = vmatpush1.xpose.msra.mxu0 0.0
        %2223 = vmatprep.subr.mxu0 0.0
        %2224 = vmatpush1.xpose.msra.mxu0 0.0
        %2225 = vmatprep.subr.mxu0 0.0
        %2226 = vmatpush1.xpose.msra.mxu0 0.0
        %2227 = vmatprep.subr.mxu0 0.0
        %2228 = vmatpush1.xpose.msra.mxu0 0.0
        %2229 = vmatprep.subr.mxu0 0.0
        %2230 = vmatpush1.xpose.msra.mxu0 0.0
        %2231 = vmatprep.subr.mxu0 0.0
        %2232 = vmatpush1.xpose.msra.mxu0 0.0
        %2233 = vmatprep.subr.mxu0 0.0
        %2234 = vmatpush1.xpose.msra.mxu0 0.0
        %2235 = vmatprep.subr.mxu0 0.0
        %2236 = vmatpush1.xpose.msra.mxu0 0.0
        %2237 = vmatprep.subr.mxu0 0.0
        %2238 = vmatpush1.xpose.msra.mxu0 0.0
        %2239 = vmatprep.subr.mxu0 0.0
        %2240 = vmatpush1.xpose.msra.mxu0 0.0
        %2241 = vmatprep.subr.mxu0 0.0
        %2242 = vmatpush1.xpose.msra.mxu0 0.0
        %2243 = vmatprep.subr.mxu0 0.0
        %2244 = vmatpush1.xpose.msra.mxu0 0.0
        %2245 = vmatprep.subr.mxu0 0.0
        %2246 = vmatpush1.xpose.msra.mxu0 %v2213
        %2247 = vmatprep.subr.mxu0 0.0
        %2248 = vmatpush2.xpose.msra.mxu0 0.0
        %2249 = vmatprep.subr.mxu0 0.0
        %2250 = vmatpush2.xpose.msra.mxu0 0.0
        %2251 = vmatprep.subr.mxu0 0.0
        %2252 = vmatpush2.xpose.msra.mxu0 0.0
        %2253 = vmatprep.subr.mxu0 0.0
        %2254 = vmatpush2.xpose.msra.mxu0 0.0
        %2255 = vmatprep.subr.mxu0 0.0
        %2256 = vmatpush2.xpose.msra.mxu0 0.0
        %2257 = vmatprep.subr.mxu0 0.0
        %2258 = vmatpush2.xpose.msra.mxu0 0.0
        %2259 = vmatprep.subr.mxu0 0.0
        %2260 = vmatpush2.xpose.msra.mxu0 0.0
        %2261 = vmatprep.subr.mxu0 0.0
        %2262 = vmatpush2.xpose.msra.mxu0 0.0
        %2263 = vmatprep.subr.mxu0 0.0
        %2264 = vmatpush2.xpose.msra.mxu0 0.0
        %2265 = vmatprep.subr.mxu0 0.0
        %2266 = vmatpush2.xpose.msra.mxu0 0.0
        %2267 = vmatprep.subr.mxu0 0.0
        %2268 = vmatpush2.xpose.msra.mxu0 0.0
        %2269 = vmatprep.subr.mxu0 0.0
        %2270 = vmatpush2.xpose.msra.mxu0 0.0
        %2271 = vmatprep.subr.mxu0 0.0
        %2272 = vmatpush2.xpose.msra.mxu0 0.0
        %2273 = vmatprep.subr.mxu0 0.0
        %2274 = vmatpush2.xpose.msra.mxu0 0.0
        %2275 = vmatprep.subr.mxu0 0.0
        %2276 = vmatpush2.xpose.msra.mxu0 0.0
        %2277 = vmatprep.subr.mxu0 0.0
        %2278 = vmatpush2.xpose.msra.mxu0 0.0
        %2279 = vmatprep.mubr.f32.mxu0 0.0
        %2280 = vmatmul.mubr.f32.gmra.mxu0 %v2211
        %v2281 = vpop.f32.mrf.mxu0
        %v2282 = vadd.f32 0.0, %v2281
        %v2283 = vpop.f32.mrf.mxu0
        %2284 = vdwg.mxu0
        %v2285 = vsel %vm583, %v2204, -inf
        %2286 = vmax.xlane.f32.xlu0 %v2285
        %v2287 = vpop.xlane.xlu0 %2286
        %v2288 = vsel %vm583, %v2282, -inf
        %2289 = vmax.xlane.f32.xlu0 %v2288
        %v2290 = vpop.xlane.xlu0 %2289
        %v2291 = vsub.f32 %v2204, %v2287
        %v2292 = vsub.f32 %v2282, %v2290
        %v2293 = vmul.f32 %v2291, 1.442695
        %v2294 = vpow.pop %v2293
        %v2295 = vmul.f32 %v2292, 1.442695
        %v2296 = vpow.pop %v2295
        %v2297 = vsel %vm583, %v2294, 0.0
        %2298 = vadd.xlane.f32.xlu0 %v2297
        %v2299 = vpop.xlane.xlu0 %2298
        %v2300 = vsel %vm583, %v2296, 0.0
        %2301 = vadd.xlane.f32.xlu0 %v2300
        %v2302 = vpop.xlane.xlu0 %2301
        %v2303 = vrcp.pop %v2299
        %v2304 = vmul.f32 %v2294, %v2303
        %v2305 = vrcp.pop %v2302
        %v2306 = vmul.f32 %v2296, %v2305
        %2307 = vrot.lane.b32.xlu0 %v2119, 64
        %v2308 = vpop.permute.xlu0 %2307
        %v2311 = vsel %vm583, %v2304, 0
        %2313 = vmatprep.subr.mxu0 0.0
        %2314 = vmatpush1.msra.mxu0 0.0
        %2315 = vmatprep.subr.mxu0 0.0
        %2316 = vmatpush1.msra.mxu0 0.0
        %2317 = vmatprep.subr.mxu0 0.0
        %2318 = vmatpush1.msra.mxu0 0.0
        %2319 = vmatprep.subr.mxu0 0.0
        %2320 = vmatpush1.msra.mxu0 0.0
        %2321 = vmatprep.subr.mxu0 0.0
        %2322 = vmatpush1.msra.mxu0 0.0
        %2323 = vmatprep.subr.mxu0 0.0
        %2324 = vmatpush1.msra.mxu0 0.0
        %2325 = vmatprep.subr.mxu0 0.0
        %2326 = vmatpush1.msra.mxu0 0.0
        %2327 = vmatprep.subr.mxu0 0.0
        %2328 = vmatpush1.msra.mxu0 0.0
        %2329 = vmatprep.subr.mxu0 0.0
        %2330 = vmatpush1.msra.mxu0 0.0
        %2331 = vmatprep.subr.mxu0 0.0
        %2332 = vmatpush1.msra.mxu0 0.0
        %2333 = vmatprep.subr.mxu0 0.0
        %2334 = vmatpush1.msra.mxu0 0.0
        %2335 = vmatprep.subr.mxu0 0.0
        %2336 = vmatpush1.msra.mxu0 0.0
        %2337 = vmatprep.subr.mxu0 0.0
        %2338 = vmatpush1.msra.mxu0 0.0
        %2339 = vmatprep.subr.mxu0 0.0
        %2340 = vmatpush1.msra.mxu0 0.0
        %2341 = vmatprep.subr.mxu0 0.0
        %2342 = vmatpush1.msra.mxu0 0.0
        %2343 = vmatprep.subr.mxu0 0.0
        %2344 = vmatpush1.msra.mxu0 %v2308
        %2345 = vmatprep.subr.mxu0 0.0
        %2346 = vmatpush2.msra.mxu0 0.0
        %2347 = vmatprep.subr.mxu0 0.0
        %2348 = vmatpush2.msra.mxu0 0.0
        %2349 = vmatprep.subr.mxu0 0.0
        %2350 = vmatpush2.msra.mxu0 0.0
        %2351 = vmatprep.subr.mxu0 0.0
        %2352 = vmatpush2.msra.mxu0 0.0
        %2353 = vmatprep.subr.mxu0 0.0
        %2354 = vmatpush2.msra.mxu0 0.0
        %2355 = vmatprep.subr.mxu0 0.0
        %2356 = vmatpush2.msra.mxu0 0.0
        %2357 = vmatprep.subr.mxu0 0.0
        %2358 = vmatpush2.msra.mxu0 0.0
        %2359 = vmatprep.subr.mxu0 0.0
        %2360 = vmatpush2.msra.mxu0 0.0
        %2361 = vmatprep.subr.mxu0 0.0
        %2362 = vmatpush2.msra.mxu0 0.0
        %2363 = vmatprep.subr.mxu0 0.0
        %2364 = vmatpush2.msra.mxu0 0.0
        %2365 = vmatprep.subr.mxu0 0.0
        %2366 = vmatpush2.msra.mxu0 0.0
        %2367 = vmatprep.subr.mxu0 0.0
        %2368 = vmatpush2.msra.mxu0 0.0
        %2369 = vmatprep.subr.mxu0 0.0
        %2370 = vmatpush2.msra.mxu0 0.0
        %2371 = vmatprep.subr.mxu0 0.0
        %2372 = vmatpush2.msra.mxu0 0.0
        %2373 = vmatprep.subr.mxu0 0.0
        %2374 = vmatpush2.msra.mxu0 0.0
        %2375 = vmatprep.subr.mxu0 0.0
        %2376 = vmatpush2.msra.mxu0 0.0
        %2377 = vmatprep.mubr.f32.mxu0 0.0
        %2378 = vmatmul.mubr.f32.gmra.mxu0 %v2311
        %v2379 = vpop.f32.mrf.mxu0
        %v2380 = vadd.f32 0.0, %v2379
        %v2381 = vpop.f32.mrf.mxu0
        %2382 = vdwg.mxu0
        %2383 = vrot.lane.b32.xlu0 %v2124, 64
        %v2384 = vpop.permute.xlu0 %2383
        %v2387 = vsel %vm583, %v2306, 0
        %2389 = vmatprep.subr.mxu0 0.0
        %2390 = vmatpush1.msra.mxu0 0.0
        %2391 = vmatprep.subr.mxu0 0.0
        %2392 = vmatpush1.msra.mxu0 0.0
        %2393 = vmatprep.subr.mxu0 0.0
        %2394 = vmatpush1.msra.mxu0 0.0
        %2395 = vmatprep.subr.mxu0 0.0
        %2396 = vmatpush1.msra.mxu0 0.0
        %2397 = vmatprep.subr.mxu0 0.0
        %2398 = vmatpush1.msra.mxu0 0.0
        %2399 = vmatprep.subr.mxu0 0.0
        %2400 = vmatpush1.msra.mxu0 0.0
        %2401 = vmatprep.subr.mxu0 0.0
        %2402 = vmatpush1.msra.mxu0 0.0
        %2403 = vmatprep.subr.mxu0 0.0
        %2404 = vmatpush1.msra.mxu0 0.0
        %2405 = vmatprep.subr.mxu0 0.0
        %2406 = vmatpush1.msra.mxu0 0.0
        %2407 = vmatprep.subr.mxu0 0.0
        %2408 = vmatpush1.msra.mxu0 0.0
        %2409 = vmatprep.subr.mxu0 0.0
        %2410 = vmatpush1.msra.mxu0 0.0
        %2411 = vmatprep.subr.mxu0 0.0
        %2412 = vmatpush1.msra.mxu0 0.0
        %2413 = vmatprep.subr.mxu0 0.0
        %2414 = vmatpush1.msra.mxu0 0.0
        %2415 = vmatprep.subr.mxu0 0.0
        %2416 = vmatpush1.msra.mxu0 0.0
        %2417 = vmatprep.subr.mxu0 0.0
        %2418 = vmatpush1.msra.mxu0 0.0
        %2419 = vmatprep.subr.mxu0 0.0
        %2420 = vmatpush1.msra.mxu0 %v2384
        %2421 = vmatprep.subr.mxu0 0.0
        %2422 = vmatpush2.msra.mxu0 0.0
        %2423 = vmatprep.subr.mxu0 0.0
        %2424 = vmatpush2.msra.mxu0 0.0
        %2425 = vmatprep.subr.mxu0 0.0
        %2426 = vmatpush2.msra.mxu0 0.0
        %2427 = vmatprep.subr.mxu0 0.0
        %2428 = vmatpush2.msra.mxu0 0.0
        %2429 = vmatprep.subr.mxu0 0.0
        %2430 = vmatpush2.msra.mxu0 0.0
        %2431 = vmatprep.subr.mxu0 0.0
        %2432 = vmatpush2.msra.mxu0 0.0
        %2433 = vmatprep.subr.mxu0 0.0
        %2434 = vmatpush2.msra.mxu0 0.0
        %2435 = vmatprep.subr.mxu0 0.0
        %2436 = vmatpush2.msra.mxu0 0.0
        %2437 = vmatprep.subr.mxu0 0.0
        %2438 = vmatpush2.msra.mxu0 0.0
        %2439 = vmatprep.subr.mxu0 0.0
        %2440 = vmatpush2.msra.mxu0 0.0
        %2441 = vmatprep.subr.mxu0 0.0
        %2442 = vmatpush2.msra.mxu0 0.0
        %2443 = vmatprep.subr.mxu0 0.0
        %2444 = vmatpush2.msra.mxu0 0.0
        %2445 = vmatprep.subr.mxu0 0.0
        %2446 = vmatpush2.msra.mxu0 0.0
        %2447 = vmatprep.subr.mxu0 0.0
        %2448 = vmatpush2.msra.mxu0 0.0
        %2449 = vmatprep.subr.mxu0 0.0
        %2450 = vmatpush2.msra.mxu0 0.0
        %2451 = vmatprep.subr.mxu0 0.0
        %2452 = vmatpush2.msra.mxu0 0.0
        %2453 = vmatprep.mubr.f32.mxu0 0.0
        %2454 = vmatmul.mubr.f32.gmra.mxu0 %v2387
        %v2455 = vpop.f32.mrf.mxu0
        %v2456 = vadd.f32 0.0, %v2455
        %v2457 = vpop.f32.mrf.mxu0
        %2458 = vdwg.mxu0
        %2459 = vrot.lane.b32.xlu0 %v2127, 120
        %v2460 = vpop.permute.xlu0 %2459
        %2461 = vrot.lane.b32.xlu0 %v2119, 88
        %v2462 = vpop.permute.xlu0 %2461
        %v2463 = vsel %vm583, %v2460, 0
        %v2465 = vsel %vm583, %v2462, 0
        %2467 = vmatprep.subr.mxu0 0.0
        %2468 = vmatpush1.xpose.msra.mxu0 0.0
        %2469 = vmatprep.subr.mxu0 0.0
        %2470 = vmatpush1.xpose.msra.mxu0 0.0
        %2471 = vmatprep.subr.mxu0 0.0
        %2472 = vmatpush1.xpose.msra.mxu0 0.0
        %2473 = vmatprep.subr.mxu0 0.0
        %2474 = vmatpush1.xpose.msra.mxu0 0.0
        %2475 = vmatprep.subr.mxu0 0.0
        %2476 = vmatpush1.xpose.msra.mxu0 0.0
        %2477 = vmatprep.subr.mxu0 0.0
        %2478 = vmatpush1.xpose.msra.mxu0 0.0
        %2479 = vmatprep.subr.mxu0 0.0
        %2480 = vmatpush1.xpose.msra.mxu0 0.0
        %2481 = vmatprep.subr.mxu0 0.0
        %2482 = vmatpush1.xpose.msra.mxu0 0.0
        %2483 = vmatprep.subr.mxu0 0.0
        %2484 = vmatpush1.xpose.msra.mxu0 0.0
        %2485 = vmatprep.subr.mxu0 0.0
        %2486 = vmatpush1.xpose.msra.mxu0 0.0
        %2487 = vmatprep.subr.mxu0 0.0
        %2488 = vmatpush1.xpose.msra.mxu0 0.0
        %2489 = vmatprep.subr.mxu0 0.0
        %2490 = vmatpush1.xpose.msra.mxu0 0.0
        %2491 = vmatprep.subr.mxu0 0.0
        %2492 = vmatpush1.xpose.msra.mxu0 0.0
        %2493 = vmatprep.subr.mxu0 0.0
        %2494 = vmatpush1.xpose.msra.mxu0 0.0
        %2495 = vmatprep.subr.mxu0 0.0
        %2496 = vmatpush1.xpose.msra.mxu0 0.0
        %2497 = vmatprep.subr.mxu0 0.0
        %2498 = vmatpush1.xpose.msra.mxu0 %v2465
        %2499 = vmatprep.subr.mxu0 0.0
        %2500 = vmatpush2.xpose.msra.mxu0 0.0
        %2501 = vmatprep.subr.mxu0 0.0
        %2502 = vmatpush2.xpose.msra.mxu0 0.0
        %2503 = vmatprep.subr.mxu0 0.0
        %2504 = vmatpush2.xpose.msra.mxu0 0.0
        %2505 = vmatprep.subr.mxu0 0.0
        %2506 = vmatpush2.xpose.msra.mxu0 0.0
        %2507 = vmatprep.subr.mxu0 0.0
        %2508 = vmatpush2.xpose.msra.mxu0 0.0
        %2509 = vmatprep.subr.mxu0 0.0
        %2510 = vmatpush2.xpose.msra.mxu0 0.0
        %2511 = vmatprep.subr.mxu0 0.0
        %2512 = vmatpush2.xpose.msra.mxu0 0.0
        %2513 = vmatprep.subr.mxu0 0.0
        %2514 = vmatpush2.xpose.msra.mxu0 0.0
        %2515 = vmatprep.subr.mxu0 0.0
        %2516 = vmatpush2.xpose.msra.mxu0 0.0
        %2517 = vmatprep.subr.mxu0 0.0
        %2518 = vmatpush2.xpose.msra.mxu0 0.0
        %2519 = vmatprep.subr.mxu0 0.0
        %2520 = vmatpush2.xpose.msra.mxu0 0.0
        %2521 = vmatprep.subr.mxu0 0.0
        %2522 = vmatpush2.xpose.msra.mxu0 0.0
        %2523 = vmatprep.subr.mxu0 0.0
        %2524 = vmatpush2.xpose.msra.mxu0 0.0
        %2525 = vmatprep.subr.mxu0 0.0
        %2526 = vmatpush2.xpose.msra.mxu0 0.0
        %2527 = vmatprep.subr.mxu0 0.0
        %2528 = vmatpush2.xpose.msra.mxu0 0.0
        %2529 = vmatprep.subr.mxu0 0.0
        %2530 = vmatpush2.xpose.msra.mxu0 0.0
        %2531 = vmatprep.mubr.f32.mxu0 0.0
        %2532 = vmatmul.mubr.f32.gmra.mxu0 %v2463
        %v2533 = vpop.f32.mrf.mxu0
        %v2534 = vadd.f32 0.0, %v2533
        %v2535 = vpop.f32.mrf.mxu0
        %2536 = vdwg.mxu0
        %2537 = vrot.lane.b32.xlu0 %v2128, 120
        %v2538 = vpop.permute.xlu0 %2537
        %2539 = vrot.lane.b32.xlu0 %v2124, 88
        %v2540 = vpop.permute.xlu0 %2539
        %v2541 = vsel %vm583, %v2538, 0
        %v2543 = vsel %vm583, %v2540, 0
        %2545 = vmatprep.subr.mxu0 0.0
        %2546 = vmatpush1.xpose.msra.mxu0 0.0
        %2547 = vmatprep.subr.mxu0 0.0
        %2548 = vmatpush1.xpose.msra.mxu0 0.0
        %2549 = vmatprep.subr.mxu0 0.0
        %2550 = vmatpush1.xpose.msra.mxu0 0.0
        %2551 = vmatprep.subr.mxu0 0.0
        %2552 = vmatpush1.xpose.msra.mxu0 0.0
        %2553 = vmatprep.subr.mxu0 0.0
        %2554 = vmatpush1.xpose.msra.mxu0 0.0
        %2555 = vmatprep.subr.mxu0 0.0
        %2556 = vmatpush1.xpose.msra.mxu0 0.0
        %2557 = vmatprep.subr.mxu0 0.0
        %2558 = vmatpush1.xpose.msra.mxu0 0.0
        %2559 = vmatprep.subr.mxu0 0.0
        %2560 = vmatpush1.xpose.msra.mxu0 0.0
        %2561 = vmatprep.subr.mxu0 0.0
        %2562 = vmatpush1.xpose.msra.mxu0 0.0
        %2563 = vmatprep.subr.mxu0 0.0
        %2564 = vmatpush1.xpose.msra.mxu0 0.0
        %2565 = vmatprep.subr.mxu0 0.0
        %2566 = vmatpush1.xpose.msra.mxu0 0.0
        %2567 = vmatprep.subr.mxu0 0.0
        %2568 = vmatpush1.xpose.msra.mxu0 0.0
        %2569 = vmatprep.subr.mxu0 0.0
        %2570 = vmatpush1.xpose.msra.mxu0 0.0
        %2571 = vmatprep.subr.mxu0 0.0
        %2572 = vmatpush1.xpose.msra.mxu0 0.0
        %2573 = vmatprep.subr.mxu0 0.0
        %2574 = vmatpush1.xpose.msra.mxu0 0.0
        %2575 = vmatprep.subr.mxu0 0.0
        %2576 = vmatpush1.xpose.msra.mxu0 %v2543
        %2577 = vmatprep.subr.mxu0 0.0
        %2578 = vmatpush2.xpose.msra.mxu0 0.0
        %2579 = vmatprep.subr.mxu0 0.0
        %2580 = vmatpush2.xpose.msra.mxu0 0.0
        %2581 = vmatprep.subr.mxu0 0.0
        %2582 = vmatpush2.xpose.msra.mxu0 0.0
        %2583 = vmatprep.subr.mxu0 0.0
        %2584 = vmatpush2.xpose.msra.mxu0 0.0
        %2585 = vmatprep.subr.mxu0 0.0
        %2586 = vmatpush2.xpose.msra.mxu0 0.0
        %2587 = vmatprep.subr.mxu0 0.0
        %2588 = vmatpush2.xpose.msra.mxu0 0.0
        %2589 = vmatprep.subr.mxu0 0.0
        %2590 = vmatpush2.xpose.msra.mxu0 0.0
        %2591 = vmatprep.subr.mxu0 0.0
        %2592 = vmatpush2.xpose.msra.mxu0 0.0
        %2593 = vmatprep.subr.mxu0 0.0
        %2594 = vmatpush2.xpose.msra.mxu0 0.0
        %2595 = vmatprep.subr.mxu0 0.0
        %2596 = vmatpush2.xpose.msra.mxu0 0.0
        %2597 = vmatprep.subr.mxu0 0.0
        %2598 = vmatpush2.xpose.msra.mxu0 0.0
        %2599 = vmatprep.subr.mxu0 0.0
        %2600 = vmatpush2.xpose.msra.mxu0 0.0
        %2601 = vmatprep.subr.mxu0 0.0
        %2602 = vmatpush2.xpose.msra.mxu0 0.0
        %2603 = vmatprep.subr.mxu0 0.0
        %2604 = vmatpush2.xpose.msra.mxu0 0.0
        %2605 = vmatprep.subr.mxu0 0.0
        %2606 = vmatpush2.xpose.msra.mxu0 0.0
        %2607 = vmatprep.subr.mxu0 0.0
        %2608 = vmatpush2.xpose.msra.mxu0 0.0
        %2609 = vmatprep.mubr.f32.mxu0 0.0
        %2610 = vmatmul.mubr.f32.gmra.mxu0 %v2541
        %v2611 = vpop.f32.mrf.mxu0
        %v2612 = vadd.f32 0.0, %v2611
        %v2613 = vpop.f32.mrf.mxu0
        %2614 = vdwg.mxu0
        %v2615 = vsel %vm583, %v2534, -inf
        %2616 = vmax.xlane.f32.xlu0 %v2615
        %v2617 = vpop.xlane.xlu0 %2616
        %v2618 = vsel %vm583, %v2612, -inf
        %2619 = vmax.xlane.f32.xlu0 %v2618
        %v2620 = vpop.xlane.xlu0 %2619
        %v2621 = vsub.f32 %v2534, %v2617
        %v2622 = vsub.f32 %v2612, %v2620
        %v2623 = vmul.f32 %v2621, 1.442695
        %v2624 = vpow.pop %v2623
        %v2625 = vmul.f32 %v2622, 1.442695
        %v2626 = vpow.pop %v2625
        %v2627 = vsel %vm583, %v2624, 0.0
        %2628 = vadd.xlane.f32.xlu0 %v2627
        %v2629 = vpop.xlane.xlu0 %2628
        %v2630 = vsel %vm583, %v2626, 0.0
        %2631 = vadd.xlane.f32.xlu0 %v2630
        %v2632 = vpop.xlane.xlu0 %2631
        %v2633 = vrcp.pop %v2629
        %v2634 = vmul.f32 %v2624, %v2633
        %v2635 = vrcp.pop %v2632
        %v2636 = vmul.f32 %v2626, %v2635
        %2637 = vrot.lane.b32.xlu0 %v2119, 56
        %v2638 = vpop.permute.xlu0 %2637
        %v2641 = vsel %vm583, %v2634, 0
        %2643 = vmatprep.subr.mxu0 0.0
        %2644 = vmatpush1.msra.mxu0 0.0
        %2645 = vmatprep.subr.mxu0 0.0
        %2646 = vmatpush1.msra.mxu0 0.0
        %2647 = vmatprep.subr.mxu0 0.0
        %2648 = vmatpush1.msra.mxu0 0.0
        %2649 = vmatprep.subr.mxu0 0.0
        %2650 = vmatpush1.msra.mxu0 0.0
        %2651 = vmatprep.subr.mxu0 0.0
        %2652 = vmatpush1.msra.mxu0 0.0
        %2653 = vmatprep.subr.mxu0 0.0
        %2654 = vmatpush1.msra.mxu0 0.0
        %2655 = vmatprep.subr.mxu0 0.0
        %2656 = vmatpush1.msra.mxu0 0.0
        %2657 = vmatprep.subr.mxu0 0.0
        %2658 = vmatpush1.msra.mxu0 0.0
        %2659 = vmatprep.subr.mxu0 0.0
        %2660 = vmatpush1.msra.mxu0 0.0
        %2661 = vmatprep.subr.mxu0 0.0
        %2662 = vmatpush1.msra.mxu0 0.0
        %2663 = vmatprep.subr.mxu0 0.0
        %2664 = vmatpush1.msra.mxu0 0.0
        %2665 = vmatprep.subr.mxu0 0.0
        %2666 = vmatpush1.msra.mxu0 0.0
        %2667 = vmatprep.subr.mxu0 0.0
        %2668 = vmatpush1.msra.mxu0 0.0
        %2669 = vmatprep.subr.mxu0 0.0
        %2670 = vmatpush1.msra.mxu0 0.0
        %2671 = vmatprep.subr.mxu0 0.0
        %2672 = vmatpush1.msra.mxu0 0.0
        %2673 = vmatprep.subr.mxu0 0.0
        %2674 = vmatpush1.msra.mxu0 %v2638
        %2675 = vmatprep.subr.mxu0 0.0
        %2676 = vmatpush2.msra.mxu0 0.0
        %2677 = vmatprep.subr.mxu0 0.0
        %2678 = vmatpush2.msra.mxu0 0.0
        %2679 = vmatprep.subr.mxu0 0.0
        %2680 = vmatpush2.msra.mxu0 0.0
        %2681 = vmatprep.subr.mxu0 0.0
        %2682 = vmatpush2.msra.mxu0 0.0
        %2683 = vmatprep.subr.mxu0 0.0
        %2684 = vmatpush2.msra.mxu0 0.0
        %2685 = vmatprep.subr.mxu0 0.0
        %2686 = vmatpush2.msra.mxu0 0.0
        %2687 = vmatprep.subr.mxu0 0.0
        %2688 = vmatpush2.msra.mxu0 0.0
        %2689 = vmatprep.subr.mxu0 0.0
        %2690 = vmatpush2.msra.mxu0 0.0
        %2691 = vmatprep.subr.mxu0 0.0
        %2692 = vmatpush2.msra.mxu0 0.0
        %2693 = vmatprep.subr.mxu0 0.0
        %2694 = vmatpush2.msra.mxu0 0.0
        %2695 = vmatprep.subr.mxu0 0.0
        %2696 = vmatpush2.msra.mxu0 0.0
        %2697 = vmatprep.subr.mxu0 0.0
        %2698 = vmatpush2.msra.mxu0 0.0
        %2699 = vmatprep.subr.mxu0 0.0
        %2700 = vmatpush2.msra.mxu0 0.0
        %2701 = vmatprep.subr.mxu0 0.0
        %2702 = vmatpush2.msra.mxu0 0.0
        %2703 = vmatprep.subr.mxu0 0.0
        %2704 = vmatpush2.msra.mxu0 0.0
        %2705 = vmatprep.subr.mxu0 0.0
        %2706 = vmatpush2.msra.mxu0 0.0
        %2707 = vmatprep.mubr.f32.mxu0 0.0
        %2708 = vmatmul.mubr.f32.gmra.mxu0 %v2641
        %v2709 = vpop.f32.mrf.mxu0
        %v2710 = vadd.f32 0.0, %v2709
        %v2711 = vpop.f32.mrf.mxu0
        %2712 = vdwg.mxu0
        %2713 = vrot.lane.b32.xlu0 %v2124, 56
        %v2714 = vpop.permute.xlu0 %2713
        %v2717 = vsel %vm583, %v2636, 0
        %2719 = vmatprep.subr.mxu0 0.0
        %2720 = vmatpush1.msra.mxu0 0.0
        %2721 = vmatprep.subr.mxu0 0.0
        %2722 = vmatpush1.msra.mxu0 0.0
        %2723 = vmatprep.subr.mxu0 0.0
        %2724 = vmatpush1.msra.mxu0 0.0
        %2725 = vmatprep.subr.mxu0 0.0
        %2726 = vmatpush1.msra.mxu0 0.0
        %2727 = vmatprep.subr.mxu0 0.0
        %2728 = vmatpush1.msra.mxu0 0.0
        %2729 = vmatprep.subr.mxu0 0.0
        %2730 = vmatpush1.msra.mxu0 0.0
        %2731 = vmatprep.subr.mxu0 0.0
        %2732 = vmatpush1.msra.mxu0 0.0
        %2733 = vmatprep.subr.mxu0 0.0
        %2734 = vmatpush1.msra.mxu0 0.0
        %2735 = vmatprep.subr.mxu0 0.0
        %2736 = vmatpush1.msra.mxu0 0.0
        %2737 = vmatprep.subr.mxu0 0.0
        %2738 = vmatpush1.msra.mxu0 0.0
        %2739 = vmatprep.subr.mxu0 0.0
        %2740 = vmatpush1.msra.mxu0 0.0
        %2741 = vmatprep.subr.mxu0 0.0
        %2742 = vmatpush1.msra.mxu0 0.0
        %2743 = vmatprep.subr.mxu0 0.0
        %2744 = vmatpush1.msra.mxu0 0.0
        %2745 = vmatprep.subr.mxu0 0.0
        %2746 = vmatpush1.msra.mxu0 0.0
        %2747 = vmatprep.subr.mxu0 0.0
        %2748 = vmatpush1.msra.mxu0 0.0
        %2749 = vmatprep.subr.mxu0 0.0
        %2750 = vmatpush1.msra.mxu0 %v2714
        %2751 = vmatprep.subr.mxu0 0.0
        %2752 = vmatpush2.msra.mxu0 0.0
        %2753 = vmatprep.subr.mxu0 0.0
        %2754 = vmatpush2.msra.mxu0 0.0
        %2755 = vmatprep.subr.mxu0 0.0
        %2756 = vmatpush2.msra.mxu0 0.0
        %2757 = vmatprep.subr.mxu0 0.0
        %2758 = vmatpush2.msra.mxu0 0.0
        %2759 = vmatprep.subr.mxu0 0.0
        %2760 = vmatpush2.msra.mxu0 0.0
        %2761 = vmatprep.subr.mxu0 0.0
        %2762 = vmatpush2.msra.mxu0 0.0
        %2763 = vmatprep.subr.mxu0 0.0
        %2764 = vmatpush2.msra.mxu0 0.0
        %2765 = vmatprep.subr.mxu0 0.0
        %2766 = vmatpush2.msra.mxu0 0.0
        %2767 = vmatprep.subr.mxu0 0.0
        %2768 = vmatpush2.msra.mxu0 0.0
        %2769 = vmatprep.subr.mxu0 0.0
        %2770 = vmatpush2.msra.mxu0 0.0
        %2771 = vmatprep.subr.mxu0 0.0
        %2772 = vmatpush2.msra.mxu0 0.0
        %2773 = vmatprep.subr.mxu0 0.0
        %2774 = vmatpush2.msra.mxu0 0.0
        %2775 = vmatprep.subr.mxu0 0.0
        %2776 = vmatpush2.msra.mxu0 0.0
        %2777 = vmatprep.subr.mxu0 0.0
        %2778 = vmatpush2.msra.mxu0 0.0
        %2779 = vmatprep.subr.mxu0 0.0
        %2780 = vmatpush2.msra.mxu0 0.0
        %2781 = vmatprep.subr.mxu0 0.0
        %2782 = vmatpush2.msra.mxu0 0.0
        %2783 = vmatprep.mubr.f32.mxu0 0.0
        %2784 = vmatmul.mubr.f32.gmra.mxu0 %v2717
        %v2785 = vpop.f32.mrf.mxu0
        %v2786 = vadd.f32 0.0, %v2785
        %v2787 = vpop.f32.mrf.mxu0
        %2788 = vdwg.mxu0
        %2789 = vrot.lane.b32.xlu0 %v2127, 112
        %v2790 = vpop.permute.xlu0 %2789
        %2791 = vrot.lane.b32.xlu0 %v2119, 80
        %v2792 = vpop.permute.xlu0 %2791
        %v2793 = vsel %vm583, %v2790, 0
        %v2795 = vsel %vm583, %v2792, 0
        %2797 = vmatprep.subr.mxu0 0.0
        %2798 = vmatpush1.xpose.msra.mxu0 0.0
        %2799 = vmatprep.subr.mxu0 0.0
        %2800 = vmatpush1.xpose.msra.mxu0 0.0
        %2801 = vmatprep.subr.mxu0 0.0
        %2802 = vmatpush1.xpose.msra.mxu0 0.0
        %2803 = vmatprep.subr.mxu0 0.0
        %2804 = vmatpush1.xpose.msra.mxu0 0.0
        %2805 = vmatprep.subr.mxu0 0.0
        %2806 = vmatpush1.xpose.msra.mxu0 0.0
        %2807 = vmatprep.subr.mxu0 0.0
        %2808 = vmatpush1.xpose.msra.mxu0 0.0
        %2809 = vmatprep.subr.mxu0 0.0
        %2810 = vmatpush1.xpose.msra.mxu0 0.0
        %2811 = vmatprep.subr.mxu0 0.0
        %2812 = vmatpush1.xpose.msra.mxu0 0.0
        %2813 = vmatprep.subr.mxu0 0.0
        %2814 = vmatpush1.xpose.msra.mxu0 0.0
        %2815 = vmatprep.subr.mxu0 0.0
        %2816 = vmatpush1.xpose.msra.mxu0 0.0
        %2817 = vmatprep.subr.mxu0 0.0
        %2818 = vmatpush1.xpose.msra.mxu0 0.0
        %2819 = vmatprep.subr.mxu0 0.0
        %2820 = vmatpush1.xpose.msra.mxu0 0.0
        %2821 = vmatprep.subr.mxu0 0.0
        %2822 = vmatpush1.xpose.msra.mxu0 0.0
        %2823 = vmatprep.subr.mxu0 0.0
        %2824 = vmatpush1.xpose.msra.mxu0 0.0
        %2825 = vmatprep.subr.mxu0 0.0
        %2826 = vmatpush1.xpose.msra.mxu0 0.0
        %2827 = vmatprep.subr.mxu0 0.0
        %2828 = vmatpush1.xpose.msra.mxu0 %v2795
        %2829 = vmatprep.subr.mxu0 0.0
        %2830 = vmatpush2.xpose.msra.mxu0 0.0
        %2831 = vmatprep.subr.mxu0 0.0
        %2832 = vmatpush2.xpose.msra.mxu0 0.0
        %2833 = vmatprep.subr.mxu0 0.0
        %2834 = vmatpush2.xpose.msra.mxu0 0.0
        %2835 = vmatprep.subr.mxu0 0.0
        %2836 = vmatpush2.xpose.msra.mxu0 0.0
        %2837 = vmatprep.subr.mxu0 0.0
        %2838 = vmatpush2.xpose.msra.mxu0 0.0
        %2839 = vmatprep.subr.mxu0 0.0
        %2840 = vmatpush2.xpose.msra.mxu0 0.0
        %2841 = vmatprep.subr.mxu0 0.0
        %2842 = vmatpush2.xpose.msra.mxu0 0.0
        %2843 = vmatprep.subr.mxu0 0.0
        %2844 = vmatpush2.xpose.msra.mxu0 0.0
        %2845 = vmatprep.subr.mxu0 0.0
        %2846 = vmatpush2.xpose.msra.mxu0 0.0
        %2847 = vmatprep.subr.mxu0 0.0
        %2848 = vmatpush2.xpose.msra.mxu0 0.0
        %2849 = vmatprep.subr.mxu0 0.0
        %2850 = vmatpush2.xpose.msra.mxu0 0.0
        %2851 = vmatprep.subr.mxu0 0.0
        %2852 = vmatpush2.xpose.msra.mxu0 0.0
        %2853 = vmatprep.subr.mxu0 0.0
        %2854 = vmatpush2.xpose.msra.mxu0 0.0
        %2855 = vmatprep.subr.mxu0 0.0
        %2856 = vmatpush2.xpose.msra.mxu0 0.0
        %2857 = vmatprep.subr.mxu0 0.0
        %2858 = vmatpush2.xpose.msra.mxu0 0.0
        %2859 = vmatprep.subr.mxu0 0.0
        %2860 = vmatpush2.xpose.msra.mxu0 0.0
        %2861 = vmatprep.mubr.f32.mxu0 0.0
        %2862 = vmatmul.mubr.f32.gmra.mxu0 %v2793
        %v2863 = vpop.f32.mrf.mxu0
        %v2864 = vadd.f32 0.0, %v2863
        %v2865 = vpop.f32.mrf.mxu0
        %2866 = vdwg.mxu0
        %2867 = vrot.lane.b32.xlu0 %v2128, 112
        %v2868 = vpop.permute.xlu0 %2867
        %2869 = vrot.lane.b32.xlu0 %v2124, 80
        %v2870 = vpop.permute.xlu0 %2869
        %v2871 = vsel %vm583, %v2868, 0
        %v2873 = vsel %vm583, %v2870, 0
        %2875 = vmatprep.subr.mxu0 0.0
        %2876 = vmatpush1.xpose.msra.mxu0 0.0
        %2877 = vmatprep.subr.mxu0 0.0
        %2878 = vmatpush1.xpose.msra.mxu0 0.0
        %2879 = vmatprep.subr.mxu0 0.0
        %2880 = vmatpush1.xpose.msra.mxu0 0.0
        %2881 = vmatprep.subr.mxu0 0.0
        %2882 = vmatpush1.xpose.msra.mxu0 0.0
        %2883 = vmatprep.subr.mxu0 0.0
        %2884 = vmatpush1.xpose.msra.mxu0 0.0
        %2885 = vmatprep.subr.mxu0 0.0
        %2886 = vmatpush1.xpose.msra.mxu0 0.0
        %2887 = vmatprep.subr.mxu0 0.0
        %2888 = vmatpush1.xpose.msra.mxu0 0.0
        %2889 = vmatprep.subr.mxu0 0.0
        %2890 = vmatpush1.xpose.msra.mxu0 0.0
        %2891 = vmatprep.subr.mxu0 0.0
        %2892 = vmatpush1.xpose.msra.mxu0 0.0
        %2893 = vmatprep.subr.mxu0 0.0
        %2894 = vmatpush1.xpose.msra.mxu0 0.0
        %2895 = vmatprep.subr.mxu0 0.0
        %2896 = vmatpush1.xpose.msra.mxu0 0.0
        %2897 = vmatprep.subr.mxu0 0.0
        %2898 = vmatpush1.xpose.msra.mxu0 0.0
        %2899 = vmatprep.subr.mxu0 0.0
        %2900 = vmatpush1.xpose.msra.mxu0 0.0
        %2901 = vmatprep.subr.mxu0 0.0
        %2902 = vmatpush1.xpose.msra.mxu0 0.0
        %2903 = vmatprep.subr.mxu0 0.0
        %2904 = vmatpush1.xpose.msra.mxu0 0.0
        %2905 = vmatprep.subr.mxu0 0.0
        %2906 = vmatpush1.xpose.msra.mxu0 %v2873
        %2907 = vmatprep.subr.mxu0 0.0
        %2908 = vmatpush2.xpose.msra.mxu0 0.0
        %2909 = vmatprep.subr.mxu0 0.0
        %2910 = vmatpush2.xpose.msra.mxu0 0.0
        %2911 = vmatprep.subr.mxu0 0.0
        %2912 = vmatpush2.xpose.msra.mxu0 0.0
        %2913 = vmatprep.subr.mxu0 0.0
        %2914 = vmatpush2.xpose.msra.mxu0 0.0
        %2915 = vmatprep.subr.mxu0 0.0
        %2916 = vmatpush2.xpose.msra.mxu0 0.0
        %2917 = vmatprep.subr.mxu0 0.0
        %2918 = vmatpush2.xpose.msra.mxu0 0.0
        %2919 = vmatprep.subr.mxu0 0.0
        %2920 = vmatpush2.xpose.msra.mxu0 0.0
        %2921 = vmatprep.subr.mxu0 0.0
        %2922 = vmatpush2.xpose.msra.mxu0 0.0
        %2923 = vmatprep.subr.mxu0 0.0
        %2924 = vmatpush2.xpose.msra.mxu0 0.0
        %2925 = vmatprep.subr.mxu0 0.0
        %2926 = vmatpush2.xpose.msra.mxu0 0.0
        %2927 = vmatprep.subr.mxu0 0.0
        %2928 = vmatpush2.xpose.msra.mxu0 0.0
        %2929 = vmatprep.subr.mxu0 0.0
        %2930 = vmatpush2.xpose.msra.mxu0 0.0
        %2931 = vmatprep.subr.mxu0 0.0
        %2932 = vmatpush2.xpose.msra.mxu0 0.0
        %2933 = vmatprep.subr.mxu0 0.0
        %2934 = vmatpush2.xpose.msra.mxu0 0.0
        %2935 = vmatprep.subr.mxu0 0.0
        %2936 = vmatpush2.xpose.msra.mxu0 0.0
        %2937 = vmatprep.subr.mxu0 0.0
        %2938 = vmatpush2.xpose.msra.mxu0 0.0
        %2939 = vmatprep.mubr.f32.mxu0 0.0
        %2940 = vmatmul.mubr.f32.gmra.mxu0 %v2871
        %v2941 = vpop.f32.mrf.mxu0
        %v2942 = vadd.f32 0.0, %v2941
        %v2943 = vpop.f32.mrf.mxu0
        %2944 = vdwg.mxu0
        %v2945 = vsel %vm583, %v2864, -inf
        %2946 = vmax.xlane.f32.xlu0 %v2945
        %v2947 = vpop.xlane.xlu0 %2946
        %v2948 = vsel %vm583, %v2942, -inf
        %2949 = vmax.xlane.f32.xlu0 %v2948
        %v2950 = vpop.xlane.xlu0 %2949
        %v2951 = vsub.f32 %v2864, %v2947
        %v2952 = vsub.f32 %v2942, %v2950
        %v2953 = vmul.f32 %v2951, 1.442695
        %v2954 = vpow.pop %v2953
        %v2955 = vmul.f32 %v2952, 1.442695
        %v2956 = vpow.pop %v2955
        %v2957 = vsel %vm583, %v2954, 0.0
        %2958 = vadd.xlane.f32.xlu0 %v2957
        %v2959 = vpop.xlane.xlu0 %2958
        %v2960 = vsel %vm583, %v2956, 0.0
        %2961 = vadd.xlane.f32.xlu0 %v2960
        %v2962 = vpop.xlane.xlu0 %2961
        %v2963 = vrcp.pop %v2959
        %v2964 = vmul.f32 %v2954, %v2963
        %v2965 = vrcp.pop %v2962
        %v2966 = vmul.f32 %v2956, %v2965
        %2967 = vrot.lane.b32.xlu0 %v2119, 48
        %v2968 = vpop.permute.xlu0 %2967
        %v2971 = vsel %vm583, %v2964, 0
        %2973 = vmatprep.subr.mxu0 0.0
        %2974 = vmatpush1.msra.mxu0 0.0
        %2975 = vmatprep.subr.mxu0 0.0
        %2976 = vmatpush1.msra.mxu0 0.0
        %2977 = vmatprep.subr.mxu0 0.0
        %2978 = vmatpush1.msra.mxu0 0.0
        %2979 = vmatprep.subr.mxu0 0.0
        %2980 = vmatpush1.msra.mxu0 0.0
        %2981 = vmatprep.subr.mxu0 0.0
        %2982 = vmatpush1.msra.mxu0 0.0
        %2983 = vmatprep.subr.mxu0 0.0
        %2984 = vmatpush1.msra.mxu0 0.0
        %2985 = vmatprep.subr.mxu0 0.0
        %2986 = vmatpush1.msra.mxu0 0.0
        %2987 = vmatprep.subr.mxu0 0.0
        %2988 = vmatpush1.msra.mxu0 0.0
        %2989 = vmatprep.subr.mxu0 0.0
        %2990 = vmatpush1.msra.mxu0 0.0
        %2991 = vmatprep.subr.mxu0 0.0
        %2992 = vmatpush1.msra.mxu0 0.0
        %2993 = vmatprep.subr.mxu0 0.0
        %2994 = vmatpush1.msra.mxu0 0.0
        %2995 = vmatprep.subr.mxu0 0.0
        %2996 = vmatpush1.msra.mxu0 0.0
        %2997 = vmatprep.subr.mxu0 0.0
        %2998 = vmatpush1.msra.mxu0 0.0
        %2999 = vmatprep.subr.mxu0 0.0
        %3000 = vmatpush1.msra.mxu0 0.0
        %3001 = vmatprep.subr.mxu0 0.0
        %3002 = vmatpush1.msra.mxu0 0.0
        %3003 = vmatprep.subr.mxu0 0.0
        %3004 = vmatpush1.msra.mxu0 %v2968
        %3005 = vmatprep.subr.mxu0 0.0
        %3006 = vmatpush2.msra.mxu0 0.0
        %3007 = vmatprep.subr.mxu0 0.0
        %3008 = vmatpush2.msra.mxu0 0.0
        %3009 = vmatprep.subr.mxu0 0.0
        %3010 = vmatpush2.msra.mxu0 0.0
        %3011 = vmatprep.subr.mxu0 0.0
        %3012 = vmatpush2.msra.mxu0 0.0
        %3013 = vmatprep.subr.mxu0 0.0
        %3014 = vmatpush2.msra.mxu0 0.0
        %3015 = vmatprep.subr.mxu0 0.0
        %3016 = vmatpush2.msra.mxu0 0.0
        %3017 = vmatprep.subr.mxu0 0.0
        %3018 = vmatpush2.msra.mxu0 0.0
        %3019 = vmatprep.subr.mxu0 0.0
        %3020 = vmatpush2.msra.mxu0 0.0
        %3021 = vmatprep.subr.mxu0 0.0
        %3022 = vmatpush2.msra.mxu0 0.0
        %3023 = vmatprep.subr.mxu0 0.0
        %3024 = vmatpush2.msra.mxu0 0.0
        %3025 = vmatprep.subr.mxu0 0.0
        %3026 = vmatpush2.msra.mxu0 0.0
        %3027 = vmatprep.subr.mxu0 0.0
        %3028 = vmatpush2.msra.mxu0 0.0
        %3029 = vmatprep.subr.mxu0 0.0
        %3030 = vmatpush2.msra.mxu0 0.0
        %3031 = vmatprep.subr.mxu0 0.0
        %3032 = vmatpush2.msra.mxu0 0.0
        %3033 = vmatprep.subr.mxu0 0.0
        %3034 = vmatpush2.msra.mxu0 0.0
        %3035 = vmatprep.subr.mxu0 0.0
        %3036 = vmatpush2.msra.mxu0 0.0
        %3037 = vmatprep.mubr.f32.mxu0 0.0
        %3038 = vmatmul.mubr.f32.gmra.mxu0 %v2971
        %v3039 = vpop.f32.mrf.mxu0
        %v3040 = vadd.f32 0.0, %v3039
        %v3041 = vpop.f32.mrf.mxu0
        %3042 = vdwg.mxu0
        %3043 = vrot.lane.b32.xlu0 %v2124, 48
        %v3044 = vpop.permute.xlu0 %3043
        %v3047 = vsel %vm583, %v2966, 0
        %3049 = vmatprep.subr.mxu0 0.0
        %3050 = vmatpush1.msra.mxu0 0.0
        %3051 = vmatprep.subr.mxu0 0.0
        %3052 = vmatpush1.msra.mxu0 0.0
        %3053 = vmatprep.subr.mxu0 0.0
        %3054 = vmatpush1.msra.mxu0 0.0
        %3055 = vmatprep.subr.mxu0 0.0
        %3056 = vmatpush1.msra.mxu0 0.0
        %3057 = vmatprep.subr.mxu0 0.0
        %3058 = vmatpush1.msra.mxu0 0.0
        %3059 = vmatprep.subr.mxu0 0.0
        %3060 = vmatpush1.msra.mxu0 0.0
        %3061 = vmatprep.subr.mxu0 0.0
        %3062 = vmatpush1.msra.mxu0 0.0
        %3063 = vmatprep.subr.mxu0 0.0
        %3064 = vmatpush1.msra.mxu0 0.0
        %3065 = vmatprep.subr.mxu0 0.0
        %3066 = vmatpush1.msra.mxu0 0.0
        %3067 = vmatprep.subr.mxu0 0.0
        %3068 = vmatpush1.msra.mxu0 0.0
        %3069 = vmatprep.subr.mxu0 0.0
        %3070 = vmatpush1.msra.mxu0 0.0
        %3071 = vmatprep.subr.mxu0 0.0
        %3072 = vmatpush1.msra.mxu0 0.0
        %3073 = vmatprep.subr.mxu0 0.0
        %3074 = vmatpush1.msra.mxu0 0.0
        %3075 = vmatprep.subr.mxu0 0.0
        %3076 = vmatpush1.msra.mxu0 0.0
        %3077 = vmatprep.subr.mxu0 0.0
        %3078 = vmatpush1.msra.mxu0 0.0
        %3079 = vmatprep.subr.mxu0 0.0
        %3080 = vmatpush1.msra.mxu0 %v3044
        %3081 = vmatprep.subr.mxu0 0.0
        %3082 = vmatpush2.msra.mxu0 0.0
        %3083 = vmatprep.subr.mxu0 0.0
        %3084 = vmatpush2.msra.mxu0 0.0
        %3085 = vmatprep.subr.mxu0 0.0
        %3086 = vmatpush2.msra.mxu0 0.0
        %3087 = vmatprep.subr.mxu0 0.0
        %3088 = vmatpush2.msra.mxu0 0.0
        %3089 = vmatprep.subr.mxu0 0.0
        %3090 = vmatpush2.msra.mxu0 0.0
        %3091 = vmatprep.subr.mxu0 0.0
        %3092 = vmatpush2.msra.mxu0 0.0
        %3093 = vmatprep.subr.mxu0 0.0
        %3094 = vmatpush2.msra.mxu0 0.0
        %3095 = vmatprep.subr.mxu0 0.0
        %3096 = vmatpush2.msra.mxu0 0.0
        %3097 = vmatprep.subr.mxu0 0.0
        %3098 = vmatpush2.msra.mxu0 0.0
        %3099 = vmatprep.subr.mxu0 0.0
        %3100 = vmatpush2.msra.mxu0 0.0
        %3101 = vmatprep.subr.mxu0 0.0
        %3102 = vmatpush2.msra.mxu0 0.0
        %3103 = vmatprep.subr.mxu0 0.0
        %3104 = vmatpush2.msra.mxu0 0.0
        %3105 = vmatprep.subr.mxu0 0.0
        %3106 = vmatpush2.msra.mxu0 0.0
        %3107 = vmatprep.subr.mxu0 0.0
        %3108 = vmatpush2.msra.mxu0 0.0
        %3109 = vmatprep.subr.mxu0 0.0
        %3110 = vmatpush2.msra.mxu0 0.0
        %3111 = vmatprep.subr.mxu0 0.0
        %3112 = vmatpush2.msra.mxu0 0.0
        %3113 = vmatprep.mubr.f32.mxu0 0.0
        %3114 = vmatmul.mubr.f32.gmra.mxu0 %v3047
        %v3115 = vpop.f32.mrf.mxu0
        %v3116 = vadd.f32 0.0, %v3115
        %v3117 = vpop.f32.mrf.mxu0
        %3118 = vdwg.mxu0
        %3119 = vrot.lane.b32.xlu0 %v2127, 104
        %v3120 = vpop.permute.xlu0 %3119
        %3121 = vrot.lane.b32.xlu0 %v2119, 72
        %v3122 = vpop.permute.xlu0 %3121
        %v3123 = vsel %vm583, %v3120, 0
        %v3125 = vsel %vm583, %v3122, 0
        %3127 = vmatprep.subr.mxu0 0.0
        %3128 = vmatpush1.xpose.msra.mxu0 0.0
        %3129 = vmatprep.subr.mxu0 0.0
        %3130 = vmatpush1.xpose.msra.mxu0 0.0
        %3131 = vmatprep.subr.mxu0 0.0
        %3132 = vmatpush1.xpose.msra.mxu0 0.0
        %3133 = vmatprep.subr.mxu0 0.0
        %3134 = vmatpush1.xpose.msra.mxu0 0.0
        %3135 = vmatprep.subr.mxu0 0.0
        %3136 = vmatpush1.xpose.msra.mxu0 0.0
        %3137 = vmatprep.subr.mxu0 0.0
        %3138 = vmatpush1.xpose.msra.mxu0 0.0
        %3139 = vmatprep.subr.mxu0 0.0
        %3140 = vmatpush1.xpose.msra.mxu0 0.0
        %3141 = vmatprep.subr.mxu0 0.0
        %3142 = vmatpush1.xpose.msra.mxu0 0.0
        %3143 = vmatprep.subr.mxu0 0.0
        %3144 = vmatpush1.xpose.msra.mxu0 0.0
        %3145 = vmatprep.subr.mxu0 0.0
        %3146 = vmatpush1.xpose.msra.mxu0 0.0
        %3147 = vmatprep.subr.mxu0 0.0
        %3148 = vmatpush1.xpose.msra.mxu0 0.0
        %3149 = vmatprep.subr.mxu0 0.0
        %3150 = vmatpush1.xpose.msra.mxu0 0.0
        %3151 = vmatprep.subr.mxu0 0.0
        %3152 = vmatpush1.xpose.msra.mxu0 0.0
        %3153 = vmatprep.subr.mxu0 0.0
        %3154 = vmatpush1.xpose.msra.mxu0 0.0
        %3155 = vmatprep.subr.mxu0 0.0
        %3156 = vmatpush1.xpose.msra.mxu0 0.0
        %3157 = vmatprep.subr.mxu0 0.0
        %3158 = vmatpush1.xpose.msra.mxu0 %v3125
        %3159 = vmatprep.subr.mxu0 0.0
        %3160 = vmatpush2.xpose.msra.mxu0 0.0
        %3161 = vmatprep.subr.mxu0 0.0
        %3162 = vmatpush2.xpose.msra.mxu0 0.0
        %3163 = vmatprep.subr.mxu0 0.0
        %3164 = vmatpush2.xpose.msra.mxu0 0.0
        %3165 = vmatprep.subr.mxu0 0.0
        %3166 = vmatpush2.xpose.msra.mxu0 0.0
        %3167 = vmatprep.subr.mxu0 0.0
        %3168 = vmatpush2.xpose.msra.mxu0 0.0
        %3169 = vmatprep.subr.mxu0 0.0
        %3170 = vmatpush2.xpose.msra.mxu0 0.0
        %3171 = vmatprep.subr.mxu0 0.0
        %3172 = vmatpush2.xpose.msra.mxu0 0.0
        %3173 = vmatprep.subr.mxu0 0.0
        %3174 = vmatpush2.xpose.msra.mxu0 0.0
        %3175 = vmatprep.subr.mxu0 0.0
        %3176 = vmatpush2.xpose.msra.mxu0 0.0
        %3177 = vmatprep.subr.mxu0 0.0
        %3178 = vmatpush2.xpose.msra.mxu0 0.0
        %3179 = vmatprep.subr.mxu0 0.0
        %3180 = vmatpush2.xpose.msra.mxu0 0.0
        %3181 = vmatprep.subr.mxu0 0.0
        %3182 = vmatpush2.xpose.msra.mxu0 0.0
        %3183 = vmatprep.subr.mxu0 0.0
        %3184 = vmatpush2.xpose.msra.mxu0 0.0
        %3185 = vmatprep.subr.mxu0 0.0
        %3186 = vmatpush2.xpose.msra.mxu0 0.0
        %3187 = vmatprep.subr.mxu0 0.0
        %3188 = vmatpush2.xpose.msra.mxu0 0.0
        %3189 = vmatprep.subr.mxu0 0.0
        %3190 = vmatpush2.xpose.msra.mxu0 0.0
        %3191 = vmatprep.mubr.f32.mxu0 0.0
        %3192 = vmatmul.mubr.f32.gmra.mxu0 %v3123
        %v3193 = vpop.f32.mrf.mxu0
        %v3194 = vadd.f32 0.0, %v3193
        %v3195 = vpop.f32.mrf.mxu0
        %3196 = vdwg.mxu0
        %3197 = vrot.lane.b32.xlu0 %v2128, 104
        %v3198 = vpop.permute.xlu0 %3197
        %3199 = vrot.lane.b32.xlu0 %v2124, 72
        %v3200 = vpop.permute.xlu0 %3199
        %v3201 = vsel %vm583, %v3198, 0
        %v3203 = vsel %vm583, %v3200, 0
        %3205 = vmatprep.subr.mxu0 0.0
        %3206 = vmatpush1.xpose.msra.mxu0 0.0
        %3207 = vmatprep.subr.mxu0 0.0
        %3208 = vmatpush1.xpose.msra.mxu0 0.0
        %3209 = vmatprep.subr.mxu0 0.0
        %3210 = vmatpush1.xpose.msra.mxu0 0.0
        %3211 = vmatprep.subr.mxu0 0.0
        %3212 = vmatpush1.xpose.msra.mxu0 0.0
        %3213 = vmatprep.subr.mxu0 0.0
        %3214 = vmatpush1.xpose.msra.mxu0 0.0
        %3215 = vmatprep.subr.mxu0 0.0
        %3216 = vmatpush1.xpose.msra.mxu0 0.0
        %3217 = vmatprep.subr.mxu0 0.0
        %3218 = vmatpush1.xpose.msra.mxu0 0.0
        %3219 = vmatprep.subr.mxu0 0.0
        %3220 = vmatpush1.xpose.msra.mxu0 0.0
        %3221 = vmatprep.subr.mxu0 0.0
        %3222 = vmatpush1.xpose.msra.mxu0 0.0
        %3223 = vmatprep.subr.mxu0 0.0
        %3224 = vmatpush1.xpose.msra.mxu0 0.0
        %3225 = vmatprep.subr.mxu0 0.0
        %3226 = vmatpush1.xpose.msra.mxu0 0.0
        %3227 = vmatprep.subr.mxu0 0.0
        %3228 = vmatpush1.xpose.msra.mxu0 0.0
        %3229 = vmatprep.subr.mxu0 0.0
        %3230 = vmatpush1.xpose.msra.mxu0 0.0
        %3231 = vmatprep.subr.mxu0 0.0
        %3232 = vmatpush1.xpose.msra.mxu0 0.0
        %3233 = vmatprep.subr.mxu0 0.0
        %3234 = vmatpush1.xpose.msra.mxu0 0.0
        %3235 = vmatprep.subr.mxu0 0.0
        %3236 = vmatpush1.xpose.msra.mxu0 %v3203
        %3237 = vmatprep.subr.mxu0 0.0
        %3238 = vmatpush2.xpose.msra.mxu0 0.0
        %3239 = vmatprep.subr.mxu0 0.0
        %3240 = vmatpush2.xpose.msra.mxu0 0.0
        %3241 = vmatprep.subr.mxu0 0.0
        %3242 = vmatpush2.xpose.msra.mxu0 0.0
        %3243 = vmatprep.subr.mxu0 0.0
        %3244 = vmatpush2.xpose.msra.mxu0 0.0
        %3245 = vmatprep.subr.mxu0 0.0
        %3246 = vmatpush2.xpose.msra.mxu0 0.0
        %3247 = vmatprep.subr.mxu0 0.0
        %3248 = vmatpush2.xpose.msra.mxu0 0.0
        %3249 = vmatprep.subr.mxu0 0.0
        %3250 = vmatpush2.xpose.msra.mxu0 0.0
        %3251 = vmatprep.subr.mxu0 0.0
        %3252 = vmatpush2.xpose.msra.mxu0 0.0
        %3253 = vmatprep.subr.mxu0 0.0
        %3254 = vmatpush2.xpose.msra.mxu0 0.0
        %3255 = vmatprep.subr.mxu0 0.0
        %3256 = vmatpush2.xpose.msra.mxu0 0.0
        %3257 = vmatprep.subr.mxu0 0.0
        %3258 = vmatpush2.xpose.msra.mxu0 0.0
        %3259 = vmatprep.subr.mxu0 0.0
        %3260 = vmatpush2.xpose.msra.mxu0 0.0
        %3261 = vmatprep.subr.mxu0 0.0
        %3262 = vmatpush2.xpose.msra.mxu0 0.0
        %3263 = vmatprep.subr.mxu0 0.0
        %3264 = vmatpush2.xpose.msra.mxu0 0.0
        %3265 = vmatprep.subr.mxu0 0.0
        %3266 = vmatpush2.xpose.msra.mxu0 0.0
        %3267 = vmatprep.subr.mxu0 0.0
        %3268 = vmatpush2.xpose.msra.mxu0 0.0
        %3269 = vmatprep.mubr.f32.mxu0 0.0
        %3270 = vmatmul.mubr.f32.gmra.mxu0 %v3201
        %v3271 = vpop.f32.mrf.mxu0
        %v3272 = vadd.f32 0.0, %v3271
        %v3273 = vpop.f32.mrf.mxu0
        %3274 = vdwg.mxu0
        %v3275 = vsel %vm583, %v3194, -inf
        %3276 = vmax.xlane.f32.xlu0 %v3275
        %v3277 = vpop.xlane.xlu0 %3276
        %v3278 = vsel %vm583, %v3272, -inf
        %3279 = vmax.xlane.f32.xlu0 %v3278
        %v3280 = vpop.xlane.xlu0 %3279
        %v3281 = vsub.f32 %v3194, %v3277
        %v3282 = vsub.f32 %v3272, %v3280
        %v3283 = vmul.f32 %v3281, 1.442695
        %v3284 = vpow.pop %v3283
        %v3285 = vmul.f32 %v3282, 1.442695
        %v3286 = vpow.pop %v3285
        %v3287 = vsel %vm583, %v3284, 0.0
        %3288 = vadd.xlane.f32.xlu0 %v3287
        %v3289 = vpop.xlane.xlu0 %3288
        %v3290 = vsel %vm583, %v3286, 0.0
        %3291 = vadd.xlane.f32.xlu0 %v3290
        %v3292 = vpop.xlane.xlu0 %3291
        %v3293 = vrcp.pop %v3289
        %v3294 = vmul.f32 %v3284, %v3293
        %v3295 = vrcp.pop %v3292
        %v3296 = vmul.f32 %v3286, %v3295
        %3297 = vrot.lane.b32.xlu0 %v2119, 40
        %v3298 = vpop.permute.xlu0 %3297
        %v3301 = vsel %vm583, %v3294, 0
        %3303 = vmatprep.subr.mxu0 0.0
        %3304 = vmatpush1.msra.mxu0 0.0
        %3305 = vmatprep.subr.mxu0 0.0
        %3306 = vmatpush1.msra.mxu0 0.0
        %3307 = vmatprep.subr.mxu0 0.0
        %3308 = vmatpush1.msra.mxu0 0.0
        %3309 = vmatprep.subr.mxu0 0.0
        %3310 = vmatpush1.msra.mxu0 0.0
        %3311 = vmatprep.subr.mxu0 0.0
        %3312 = vmatpush1.msra.mxu0 0.0
        %3313 = vmatprep.subr.mxu0 0.0
        %3314 = vmatpush1.msra.mxu0 0.0
        %3315 = vmatprep.subr.mxu0 0.0
        %3316 = vmatpush1.msra.mxu0 0.0
        %3317 = vmatprep.subr.mxu0 0.0
        %3318 = vmatpush1.msra.mxu0 0.0
        %3319 = vmatprep.subr.mxu0 0.0
        %3320 = vmatpush1.msra.mxu0 0.0
        %3321 = vmatprep.subr.mxu0 0.0
        %3322 = vmatpush1.msra.mxu0 0.0
        %3323 = vmatprep.subr.mxu0 0.0
        %3324 = vmatpush1.msra.mxu0 0.0
        %3325 = vmatprep.subr.mxu0 0.0
        %3326 = vmatpush1.msra.mxu0 0.0
        %3327 = vmatprep.subr.mxu0 0.0
        %3328 = vmatpush1.msra.mxu0 0.0
        %3329 = vmatprep.subr.mxu0 0.0
        %3330 = vmatpush1.msra.mxu0 0.0
        %3331 = vmatprep.subr.mxu0 0.0
        %3332 = vmatpush1.msra.mxu0 0.0
        %3333 = vmatprep.subr.mxu0 0.0
        %3334 = vmatpush1.msra.mxu0 %v3298
        %3335 = vmatprep.subr.mxu0 0.0
        %3336 = vmatpush2.msra.mxu0 0.0
        %3337 = vmatprep.subr.mxu0 0.0
        %3338 = vmatpush2.msra.mxu0 0.0
        %3339 = vmatprep.subr.mxu0 0.0
        %3340 = vmatpush2.msra.mxu0 0.0
        %3341 = vmatprep.subr.mxu0 0.0
        %3342 = vmatpush2.msra.mxu0 0.0
        %3343 = vmatprep.subr.mxu0 0.0
        %3344 = vmatpush2.msra.mxu0 0.0
        %3345 = vmatprep.subr.mxu0 0.0
        %3346 = vmatpush2.msra.mxu0 0.0
        %3347 = vmatprep.subr.mxu0 0.0
        %3348 = vmatpush2.msra.mxu0 0.0
        %3349 = vmatprep.subr.mxu0 0.0
        %3350 = vmatpush2.msra.mxu0 0.0
        %3351 = vmatprep.subr.mxu0 0.0
        %3352 = vmatpush2.msra.mxu0 0.0
        %3353 = vmatprep.subr.mxu0 0.0
        %3354 = vmatpush2.msra.mxu0 0.0
        %3355 = vmatprep.subr.mxu0 0.0
        %3356 = vmatpush2.msra.mxu0 0.0
        %3357 = vmatprep.subr.mxu0 0.0
        %3358 = vmatpush2.msra.mxu0 0.0
        %3359 = vmatprep.subr.mxu0 0.0
        %3360 = vmatpush2.msra.mxu0 0.0
        %3361 = vmatprep.subr.mxu0 0.0
        %3362 = vmatpush2.msra.mxu0 0.0
        %3363 = vmatprep.subr.mxu0 0.0
        %3364 = vmatpush2.msra.mxu0 0.0
        %3365 = vmatprep.subr.mxu0 0.0
        %3366 = vmatpush2.msra.mxu0 0.0
        %3367 = vmatprep.mubr.f32.mxu0 0.0
        %3368 = vmatmul.mubr.f32.gmra.mxu0 %v3301
        %v3369 = vpop.f32.mrf.mxu0
        %v3370 = vadd.f32 0.0, %v3369
        %v3371 = vpop.f32.mrf.mxu0
        %3372 = vdwg.mxu0
        %3373 = vrot.lane.b32.xlu0 %v2124, 40
        %v3374 = vpop.permute.xlu0 %3373
        %v3377 = vsel %vm583, %v3296, 0
        %3379 = vmatprep.subr.mxu0 0.0
        %3380 = vmatpush1.msra.mxu0 0.0
        %3381 = vmatprep.subr.mxu0 0.0
        %3382 = vmatpush1.msra.mxu0 0.0
        %3383 = vmatprep.subr.mxu0 0.0
        %3384 = vmatpush1.msra.mxu0 0.0
        %3385 = vmatprep.subr.mxu0 0.0
        %3386 = vmatpush1.msra.mxu0 0.0
        %3387 = vmatprep.subr.mxu0 0.0
        %3388 = vmatpush1.msra.mxu0 0.0
        %3389 = vmatprep.subr.mxu0 0.0
        %3390 = vmatpush1.msra.mxu0 0.0
        %3391 = vmatprep.subr.mxu0 0.0
        %3392 = vmatpush1.msra.mxu0 0.0
        %3393 = vmatprep.subr.mxu0 0.0
        %3394 = vmatpush1.msra.mxu0 0.0
        %3395 = vmatprep.subr.mxu0 0.0
        %3396 = vmatpush1.msra.mxu0 0.0
        %3397 = vmatprep.subr.mxu0 0.0
        %3398 = vmatpush1.msra.mxu0 0.0
        %3399 = vmatprep.subr.mxu0 0.0
        %3400 = vmatpush1.msra.mxu0 0.0
        %3401 = vmatprep.subr.mxu0 0.0
        %3402 = vmatpush1.msra.mxu0 0.0
        %3403 = vmatprep.subr.mxu0 0.0
        %3404 = vmatpush1.msra.mxu0 0.0
        %3405 = vmatprep.subr.mxu0 0.0
        %3406 = vmatpush1.msra.mxu0 0.0
        %3407 = vmatprep.subr.mxu0 0.0
        %3408 = vmatpush1.msra.mxu0 0.0
        %3409 = vmatprep.subr.mxu0 0.0
        %3410 = vmatpush1.msra.mxu0 %v3374
        %3411 = vmatprep.subr.mxu0 0.0
        %3412 = vmatpush2.msra.mxu0 0.0
        %3413 = vmatprep.subr.mxu0 0.0
        %3414 = vmatpush2.msra.mxu0 0.0
        %3415 = vmatprep.subr.mxu0 0.0
        %3416 = vmatpush2.msra.mxu0 0.0
        %3417 = vmatprep.subr.mxu0 0.0
        %3418 = vmatpush2.msra.mxu0 0.0
        %3419 = vmatprep.subr.mxu0 0.0
        %3420 = vmatpush2.msra.mxu0 0.0
        %3421 = vmatprep.subr.mxu0 0.0
        %3422 = vmatpush2.msra.mxu0 0.0
        %3423 = vmatprep.subr.mxu0 0.0
        %3424 = vmatpush2.msra.mxu0 0.0
        %3425 = vmatprep.subr.mxu0 0.0
        %3426 = vmatpush2.msra.mxu0 0.0
        %3427 = vmatprep.subr.mxu0 0.0
        %3428 = vmatpush2.msra.mxu0 0.0
        %3429 = vmatprep.subr.mxu0 0.0
        %3430 = vmatpush2.msra.mxu0 0.0
        %3431 = vmatprep.subr.mxu0 0.0
        %3432 = vmatpush2.msra.mxu0 0.0
        %3433 = vmatprep.subr.mxu0 0.0
        %3434 = vmatpush2.msra.mxu0 0.0
        %3435 = vmatprep.subr.mxu0 0.0
        %3436 = vmatpush2.msra.mxu0 0.0
        %3437 = vmatprep.subr.mxu0 0.0
        %3438 = vmatpush2.msra.mxu0 0.0
        %3439 = vmatprep.subr.mxu0 0.0
        %3440 = vmatpush2.msra.mxu0 0.0
        %3441 = vmatprep.subr.mxu0 0.0
        %3442 = vmatpush2.msra.mxu0 0.0
        %3443 = vmatprep.mubr.f32.mxu0 0.0
        %3444 = vmatmul.mubr.f32.gmra.mxu0 %v3377
        %v3445 = vpop.f32.mrf.mxu0
        %v3446 = vadd.f32 0.0, %v3445
        %v3447 = vpop.f32.mrf.mxu0
        %3448 = vdwg.mxu0
        %3451 = vrot.lane.b32.xlu0 %v2710, 8
        %v3452 = vpop.permute.xlu0 %3451
        %3453 = vrot.lane.b32.xlu0 %v2786, 8
        %v3454 = vpop.permute.xlu0 %3453
        %3459 = vrot.lane.b32.xlu0 %v3040, 16
        %v3460 = vpop.permute.xlu0 %3459
        %3461 = vrot.lane.b32.xlu0 %v3116, 16
        %v3462 = vpop.permute.xlu0 %3461
        %3467 = vrot.lane.b32.xlu0 %v3370, 24
        %v3468 = vpop.permute.xlu0 %3467
        %3469 = vrot.lane.b32.xlu0 %v3446, 24
        %v3470 = vpop.permute.xlu0 %3469
        %v3473 = vsel %vm583, %v2380, %v3452
        %v3474 = vsel %vm583, %v2456, %v3454
        %v3475 = vsel %vm1927, %v3473, %v3460
        %v3476 = vsel %vm1927, %v3474, %v3462
        %v3477 = vsel %vm1930, %v3475, %v3468
        %v3478 = vsel %vm1930, %v3476, %v3470
        %v3480 = vsel %vm453, %v3477, 0
        %v3483 = vsel %vm453, %v3478, 0
        %3485 = vmatprep.subr.mxu0 0.0
        %3486 = vmatpush1.msra.mxu0 0.0
        %3487 = vmatprep.subr.mxu0 0.0
        %3488 = vmatpush1.msra.mxu0 0.0
        %3489 = vmatprep.subr.mxu0 0.0
        %3490 = vmatpush1.msra.mxu0 0.0
        %3491 = vmatprep.subr.mxu0 0.0
        %3492 = vmatpush1.msra.mxu0 0.0
        %3493 = vmatprep.subr.mxu0 0.0
        %3494 = vmatpush1.msra.mxu0 0.0
        %3495 = vmatprep.subr.mxu0 0.0
        %3496 = vmatpush1.msra.mxu0 0.0
        %3497 = vmatprep.subr.mxu0 0.0
        %3498 = vmatpush1.msra.mxu0 0.0
        %3499 = vmatprep.subr.mxu0 0.0
        %3500 = vmatpush1.msra.mxu0 0.0
        %3501 = vmatprep.subr.mxu0 0.0
        %3502 = vmatpush1.msra.mxu0 0.0
        %3503 = vmatprep.subr.mxu0 0.0
        %3504 = vmatpush1.msra.mxu0 0.0
        %3505 = vmatprep.subr.mxu0 0.0
        %3506 = vmatpush1.msra.mxu0 0.0
        %3507 = vmatprep.subr.mxu0 0.0
        %3508 = vmatpush1.msra.mxu0 0.0
        %3509 = vmatprep.subr.mxu0 0.0
        %3510 = vmatpush1.msra.mxu0 %v447
        %3511 = vmatprep.subr.mxu0 0.0
        %3512 = vmatpush1.msra.mxu0 %v446
        %3513 = vmatprep.subr.mxu0 0.0
        %3514 = vmatpush1.msra.mxu0 %v445
        %3515 = vmatprep.subr.mxu0 0.0
        %3516 = vmatpush1.msra.mxu0 %v444
        %3517 = vmatprep.subr.mxu0 0.0
        %3518 = vmatpush2.msra.mxu0 0.0
        %3519 = vmatprep.subr.mxu0 0.0
        %3520 = vmatpush2.msra.mxu0 0.0
        %3521 = vmatprep.subr.mxu0 0.0
        %3522 = vmatpush2.msra.mxu0 0.0
        %3523 = vmatprep.subr.mxu0 0.0
        %3524 = vmatpush2.msra.mxu0 0.0
        %3525 = vmatprep.subr.mxu0 0.0
        %3526 = vmatpush2.msra.mxu0 0.0
        %3527 = vmatprep.subr.mxu0 0.0
        %3528 = vmatpush2.msra.mxu0 0.0
        %3529 = vmatprep.subr.mxu0 0.0
        %3530 = vmatpush2.msra.mxu0 0.0
        %3531 = vmatprep.subr.mxu0 0.0
        %3532 = vmatpush2.msra.mxu0 0.0
        %3533 = vmatprep.subr.mxu0 0.0
        %3534 = vmatpush2.msra.mxu0 0.0
        %3535 = vmatprep.subr.mxu0 0.0
        %3536 = vmatpush2.msra.mxu0 0.0
        %3537 = vmatprep.subr.mxu0 0.0
        %3538 = vmatpush2.msra.mxu0 0.0
        %3539 = vmatprep.subr.mxu0 0.0
        %3540 = vmatpush2.msra.mxu0 0.0
        %3541 = vmatprep.subr.mxu0 0.0
        %3542 = vmatpush2.msra.mxu0 0.0
        %3543 = vmatprep.subr.mxu0 0.0
        %3544 = vmatpush2.msra.mxu0 0.0
        %3545 = vmatprep.subr.mxu0 0.0
        %3546 = vmatpush2.msra.mxu0 0.0
        %3547 = vmatprep.subr.mxu0 0.0
        %3548 = vmatpush2.msra.mxu0 0.0
        %3549 = vmatprep.mubr.f32.mxu0 0.0
        %3550 = vmatmul.mubr.f32.gmra.mxu0 %v3480
        %v3551 = vpop.f32.mrf.mxu0
        %v3552 = vadd.f32 0.0, %v3551
        %v3553 = vpop.f32.mrf.mxu0
        %3554 = vmatprep.mubr.f32.mxu0 0.0
        %3555 = vmatmul.mubr.f32.gmra.mxu0 %v3483
        %v3556 = vpop.f32.mrf.mxu0
        %v3557 = vadd.f32 0.0, %v3556
        %v3558 = vpop.f32.mrf.mxu0
        %3559 = vdwg.mxu0
        %v3560 = vsub.f32 %v2006, %v3552
        %v3561 = vsub.f32 %v2011, %v3557
        %v3562 = vmul.f32 %v3560, 0.5
        %v3563 = vmul.f32 %v3561, 0.5
        %v3564 = vadd.f32 %v3562, %v436
        %v3565 = vadd.f32 %v3563, %v437
        %v3567 = vlaneseq
        %v3568 = vshrl.u32 %v3567, 7
        %v3569 = vsub.s32 0, %v3568
        %v3570 = vrot.slane %v452, %v3569
        %v3573 = vsel %vm453, %v3564, 0
        %v3576 = vsel %vm453, %v3565, 0
        %3578 = vmatprep.subr.mxu0 0.0
        %3579 = vmatpush1.msra.mxu0 0.0
        %3580 = vmatprep.subr.mxu0 0.0
        %3581 = vmatpush1.msra.mxu0 0.0
        %3582 = vmatprep.subr.mxu0 0.0
        %3583 = vmatpush1.msra.mxu0 0.0
        %3584 = vmatprep.subr.mxu0 0.0
        %3585 = vmatpush1.msra.mxu0 0.0
        %3586 = vmatprep.subr.mxu0 0.0
        %3587 = vmatpush1.msra.mxu0 0.0
        %3588 = vmatprep.subr.mxu0 0.0
        %3589 = vmatpush1.msra.mxu0 0.0
        %3590 = vmatprep.subr.mxu0 0.0
        %3591 = vmatpush1.msra.mxu0 0.0
        %3592 = vmatprep.subr.mxu0 0.0
        %3593 = vmatpush1.msra.mxu0 0.0
        %3594 = vmatprep.subr.mxu0 0.0
        %3595 = vmatpush1.msra.mxu0 0.0
        %3596 = vmatprep.subr.mxu0 0.0
        %3597 = vmatpush1.msra.mxu0 0.0
        %3598 = vmatprep.subr.mxu0 0.0
        %3599 = vmatpush1.msra.mxu0 0.0
        %3600 = vmatprep.subr.mxu0 0.0
        %3601 = vmatpush1.msra.mxu0 0.0
        %3602 = vmatprep.subr.mxu0 0.0
        %3603 = vmatpush1.msra.mxu0 %v451
        %3604 = vmatprep.subr.mxu0 0.0
        %3605 = vmatpush1.msra.mxu0 %v450
        %3606 = vmatprep.subr.mxu0 0.0
        %3607 = vmatpush1.msra.mxu0 %v449
        %3608 = vmatprep.subr.mxu0 0.0
        %3609 = vmatpush1.msra.mxu0 %v448
        %3610 = vmatprep.subr.mxu0 0.0
        %3611 = vmatpush2.msra.mxu0 0.0
        %3612 = vmatprep.subr.mxu0 0.0
        %3613 = vmatpush2.msra.mxu0 0.0
        %3614 = vmatprep.subr.mxu0 0.0
        %3615 = vmatpush2.msra.mxu0 0.0
        %3616 = vmatprep.subr.mxu0 0.0
        %3617 = vmatpush2.msra.mxu0 0.0
        %3618 = vmatprep.subr.mxu0 0.0
        %3619 = vmatpush2.msra.mxu0 0.0
        %3620 = vmatprep.subr.mxu0 0.0
        %3621 = vmatpush2.msra.mxu0 0.0
        %3622 = vmatprep.subr.mxu0 0.0
        %3623 = vmatpush2.msra.mxu0 0.0
        %3624 = vmatprep.subr.mxu0 0.0
        %3625 = vmatpush2.msra.mxu0 0.0
        %3626 = vmatprep.subr.mxu0 0.0
        %3627 = vmatpush2.msra.mxu0 0.0
        %3628 = vmatprep.subr.mxu0 0.0
        %3629 = vmatpush2.msra.mxu0 0.0
        %3630 = vmatprep.subr.mxu0 0.0
        %3631 = vmatpush2.msra.mxu0 0.0
        %3632 = vmatprep.subr.mxu0 0.0
        %3633 = vmatpush2.msra.mxu0 0.0
        %3634 = vmatprep.subr.mxu0 0.0
        %3635 = vmatpush2.msra.mxu0 0.0
        %3636 = vmatprep.subr.mxu0 0.0
        %3637 = vmatpush2.msra.mxu0 0.0
        %3638 = vmatprep.subr.mxu0 0.0
        %3639 = vmatpush2.msra.mxu0 0.0
        %3640 = vmatprep.subr.mxu0 0.0
        %3641 = vmatpush2.msra.mxu0 0.0
        %3642 = vmatprep.mubr.f32.mxu0 0.0
        %3643 = vmatmul.mubr.f32.gmra.mxu0 %v3573
        %v3644 = vpop.f32.mrf.mxu0
        %v3645 = vadd.f32 %v3570, %v3644
        %v3646 = vpop.f32.mrf.mxu0
        %3647 = vmatprep.mubr.f32.mxu0 0.0
        %3648 = vmatmul.mubr.f32.gmra.mxu0 %v3576
        %v3649 = vpop.f32.mrf.mxu0
        %v3650 = vadd.f32 %v3570, %v3649
        %v3651 = vpop.f32.mrf.mxu0
        %3652 = vdwg.mxu0
        %v3653 = vmul.f32 %v3645, 0.5
        %v3654 = vmul.f32 %v3650, 0.5
        %v3655 = vadd.f32 %v3653, %v3564
        %v3656 = vadd.f32 %v3654, %v3565
        %3657 = vst.msk [vmem:[#allocation11] sm:$0xff] %vm453, %v3655
        %3658 = vst.msk [vmem:[#allocation11 + $0x8] sm:$0xff] %vm453, %v3656
        // Predicated region
        $region69: #{tpu_custom_call.1} parent=47 // pred_check
          %p3659 = pneg %p216
        $region70: #{tpu_custom_call.1} parent=47 // pred_check_branch
          %3661 = sbr.rel (%p3659) target = $region72
        $region71: #{tpu_custom_call.1} parent=47 // pred_region
          %s3663 = ssub.s32 256, 256
          %3664 = vsyncadd [#allocation4], %s3663
          %s3665 = sshll.u32 [#allocation11], 4
          %s3666 = int_to_ptr.vmem [resolvable:$true] %s3665
          %3671 = dma.vmem_to_hbm [thread:$0]  %s3666, 256, %s7, [#allocation4], 128, 128, 8
        $region72: #{tpu_custom_call.1} parent=47 // pred_fallthru
          _
        // Predicated region
        $region73: #{tpu_custom_call.1} parent=47 // pred_check
          %p3672 = pneg %p216
        $region74: #{tpu_custom_call.1} parent=47 // pred_check_branch
          %3674 = sbr.rel (%p3672) target = $region76
        $region75: #{tpu_custom_call.1} parent=47 // pred_region
          %3675 = dma.done [#allocation4], 256
        $region76: #{tpu_custom_call.1} parent=47 // pred_fallthru
          _
      $region48: #{tpu_custom_call.1} parent=5 // pred_fallthru
        _
      %p3676 = scmp.le.s32.totalorder 2, %s21
      // Predicated region
      $region77: #{tpu_custom_call.1} parent=5 // pred_check
        %p3677 = pneg %p3676
      $region78: #{tpu_custom_call.1} parent=5 // pred_check_branch
        %3679 = sbr.rel (%p3677) target = $region80
      $region79: #{tpu_custom_call.1} parent=5 // pred_region
        %s3680 = ssub.s32 %s21, 2
      $region80: #{tpu_custom_call.1} parent=5 // pred_fallthru
        _
    $region6: #{tpu_custom_call.1} parent=1 // loop_footer
      %s25 = sadd.s32 1, %s21
    $region7: #{tpu_custom_call.1} parent=1 // loop_footer_branch
      %20 = sbr.rel target = $region3
    $region8: #{tpu_custom_call.1} parent=1 // loop_exit
      _
    %3681 = vsyncpa [#allocation3], 1
    %s3682 = scalar_lea.sflag [#allocation3], 1
    %3683 = vsyncpa %s3682, 1
    %3684 = vsyncpa [#allocation6], 1
    %s3685 = scalar_lea.sflag [#allocation6], 1
    %3686 = vsyncpa %s3685, 1
    %3687 = vsyncpa [#allocation9], 1
    %s3688 = scalar_lea.sflag [#allocation9], 1
    %3689 = vsyncpa %s3688, 1
    %3690 = vsyncpa [#allocation4], 1
    %s3691 = scalar_lea.sflag [#allocation4], 1
    %3692 = vsyncpa %s3691, 1

</llo_original>
